<compile_context>
chip_gen: v7x
topology: tpu7x:2x2x1
jax: 0.10.0
libtpu: 0.0.40
codegen_flags: <defaults>
</compile_context>

<pallas_src>
import math

import jax
import jax.numpy as jnp
from jax.experimental import pallas as pl
from jax.experimental.pallas import tpu as pltpu

# ----------------------------- hyper-params ---------------------------------
NTOKEN = 50
NTOKEN_PAD = 128     # lane-dense padded vocab for the final (only) HBM store
D_MODEL = 32
NHEAD = 4            # `hhead` is undefined in the reference module; chosen here.
HEAD_DIM = D_MODEL // NHEAD
D_HID = 64
NLAYERS = 2
SEQ_LEN = 8
BATCH = 2
MAX_LEN = 64         # positional-encoding table length
LN_EPS = 1e-5


# ------------------------------ fused kernel --------------------------------
def _layernorm(z, g, b):
    mean = jnp.mean(z, axis=-1, keepdims=True)
    var = jnp.mean((z - mean) ** 2, axis=-1, keepdims=True)
    return (z - mean) * jax.lax.rsqrt(var + LN_EPS) * g + b


def fused_transformer_kernel(
    x_ref, mask_ref,
    inw_ref, inb_ref, outw_ref, outb_ref,
    w1_ref, b1_ref, w2_ref, b2_ref,
    ln1g_ref, ln1b_ref, ln2g_ref, ln2b_ref,
    decw_ref, decb_ref,
    o_ref,
    attn_scratch,
):
    S, B, E, H, HD = SEQ_LEN, BATCH, D_MODEL, NHEAD, HEAD_DIM
    scale = 1.0 / math.sqrt(HD)

    x = x_ref[...]          # [B*S, E]  batch-major rows: r = b*S + s
    mask = mask_ref[...]    # [S, S]    additive attention mask

    for li in range(NLAYERS):
        inw = inw_ref[li]       # [E, 3E]     (pre-transposed: x @ inw)
        inb = inb_ref[li]       # [1, 3E]
        outw = outw_ref[li]     # [E, E]
        outb = outb_ref[li]     # [1, E]
        w1 = w1_ref[li]         # [E, D_HID]
        b1 = b1_ref[li]         # [1, D_HID]
        w2 = w2_ref[li]         # [D_HID, E]
        b2 = b2_ref[li]         # [1, E]
        ln1g = ln1g_ref[li]
        ln1b = ln1b_ref[li]
        ln2g = ln2g_ref[li]
        ln2b = ln2b_ref[li]

        # ---- self attention (all batches/heads in this single launch) ----
        qkv = jnp.dot(x, inw, preferred_element_type=jnp.float32) + inb  # [B*S, 3E]
        q = qkv[:, 0:E]
        k = qkv[:, E:2 * E]
        v = qkv[:, 2 * E:3 * E]
        for b in range(B):
            rs = slice(b * S, (b + 1) * S)            # static row slice (batch b)
            for h in range(H):
                cs = slice(h * HD, (h + 1) * HD)      # static lane slice (head h)
                q_bh = q[rs, cs]                      # [S, HD]
                k_bh = k[rs, cs]
                v_bh = v[rs, cs]
                # q @ k^T via dot_general (no explicit in-kernel transpose)
                s_bh = jax.lax.dot_general(
                    q_bh, k_bh, (((1,), (1,)), ((), ())),
                    preferred_element_type=jnp.float32) * scale + mask
                m = jnp.max(s_bh, axis=-1, keepdims=True)
                p = jnp.exp(s_bh - m)
                p = p / jnp.sum(p, axis=-1, keepdims=True)
                attn_scratch[rs, cs] = jnp.dot(
                    p, v_bh, preferred_element_type=jnp.float32)
        attn = attn_scratch[...]                                   # [B*S, E]
        sa = jnp.dot(attn, outw, preferred_element_type=jnp.float32) + outb
        x = _layernorm(x + sa, ln1g, ln1b)

        # ---- feed forward ----
        hdn = jnp.dot(x, w1, preferred_element_type=jnp.float32) + b1
        hdn = jnp.maximum(hdn, 0.0)
        ff = jnp.dot(hdn, w2, preferred_element_type=jnp.float32) + b2
        x = _layernorm(x + ff, ln2g, ln2b)

    # ---- decoder projection (lane-dense: vocab padded to 128) ----
    o_ref[...] = (jnp.dot(x, decw_ref[...], preferred_element_type=jnp.float32)
                  + decb_ref[...])


# ------------------------------ params ---------------------------------------
def make_positional_encoding(max_len, d_model):
    position = jnp.arange(max_len, dtype=jnp.float32)[:, None]
    div_term = jnp.exp(jnp.arange(0, d_model, 2, dtype=jnp.float32)
                       * (-math.log(10000.0) / d_model))
    pe = jnp.zeros((max_len, d_model), dtype=jnp.float32)
    pe = pe.at[:, 0::2].set(jnp.sin(position * div_term))
    pe = pe.at[:, 1::2].set(jnp.cos(position * div_term))
    return pe


def init_params(key):
    keys = jax.random.split(key, 3 + NLAYERS)
    params = {}
    # nn.Embedding weight: uniform(-1, 1)   (init_weights with initrange = 1)
    params["emb"] = jax.random.uniform(
        keys[0], (NTOKEN, D_MODEL), jnp.float32, -1.0, 1.0)
    # decoder Linear: weight uniform(-1, 1), bias zeros.
    # Pre-transposed to [E, NTOKEN] and zero-padded to 128 lanes.
    dec_w = jax.random.uniform(keys[1], (NTOKEN, D_MODEL), jnp.float32, -1.0, 1.0)
    params["dec_w_t"] = (jnp.zeros((D_MODEL, NTOKEN_PAD), jnp.float32)
                         .at[:, :NTOKEN].set(dec_w.T))
    params["dec_b"] = jnp.zeros((1, NTOKEN_PAD), jnp.float32)
    params["pe"] = make_positional_encoding(MAX_LEN, D_MODEL)

    stacks = {n: [] for n in ("inw", "inb", "outw", "outb", "w1", "b1",
                              "w2", "b2", "ln1g", "ln1b", "ln2g", "ln2b")}
    for li in range(NLAYERS):
        lk = jax.random.split(keys[3 + li], 8)
        s_attn = 1.0 / math.sqrt(D_MODEL)
        s_ffn1 = 1.0 / math.sqrt(D_MODEL)
        s_ffn2 = 1.0 / math.sqrt(D_HID)
        # All weights stored pre-transposed ([K, N]) so the kernel never
        # transposes: y = x @ w_t + b.
        stacks["inw"].append(jax.random.uniform(
            lk[0], (3 * D_MODEL, D_MODEL), jnp.float32, -s_attn, s_attn).T)
        stacks["inb"].append(jnp.zeros((1, 3 * D_MODEL), jnp.float32))
        stacks["outw"].append(jax.random.uniform(
            lk[1], (D_MODEL, D_MODEL), jnp.float32, -s_attn, s_attn).T)
        stacks["outb"].append(jnp.zeros((1, D_MODEL), jnp.float32))
        stacks["w1"].append(jax.random.uniform(
            lk[2], (D_HID, D_MODEL), jnp.float32, -s_ffn1, s_ffn1).T)
        stacks["b1"].append(jax.random.uniform(
            lk[3], (1, D_HID), jnp.float32, -s_ffn1, s_ffn1))
        stacks["w2"].append(jax.random.uniform(
            lk[4], (D_MODEL, D_HID), jnp.float32, -s_ffn2, s_ffn2).T)
        stacks["b2"].append(jax.random.uniform(
            lk[5], (1, D_MODEL), jnp.float32, -s_ffn2, s_ffn2))
        stacks["ln1g"].append(jnp.ones((1, D_MODEL), jnp.float32))
        stacks["ln1b"].append(jnp.zeros((1, D_MODEL), jnp.float32))
        stacks["ln2g"].append(jnp.ones((1, D_MODEL), jnp.float32))
        stacks["ln2b"].append(jnp.zeros((1, D_MODEL), jnp.float32))
    for name, lst in stacks.items():
        params[name] = jnp.stack(lst)          # leading dim = NLAYERS
    return params


def generate_square_subsequent_mask(sz):
    # -inf strictly above the diagonal, 0 elsewhere (additive causal mask).
    return jnp.triu(jnp.full((sz, sz), float("-inf"), jnp.float32), k=1)


# ------------------------------ forward --------------------------------------
def _full_spec(shape):
    return pl.BlockSpec(shape, lambda i: (0,) * len(shape))


@jax.jit
def transformer_forward(params, src, src_mask):
    S, B = src.shape
    E = D_MODEL

    # Embedding gather + scaling + positional encoding (host-side glue).
    x = params["emb"][src] * math.sqrt(E) + params["pe"][:S][:, None, :]  # [S,B,E]
    # TODO(synk): dropout (p=0.5) in pos-encoder / encoder layers omitted (eval mode).
    xf = x.transpose(1, 0, 2).reshape(B * S, E)    # batch-major rows: r = b*S + s

    in_specs = [
        _full_spec((B * S, E)),                    # x
        _full_spec((S, S)),                        # additive attn mask
        _full_spec((NLAYERS, E, 3 * E)),           # in_proj_w (transposed)
        _full_spec((NLAYERS, 1, 3 * E)),           # in_proj_b
        _full_spec((NLAYERS, E, E)),               # out_proj_w (transposed)
        _full_spec((NLAYERS, 1, E)),               # out_proj_b
        _full_spec((NLAYERS, E, D_HID)),           # linear1 w (transposed)
        _full_spec((NLAYERS, 1, D_HID)),           # linear1 b
        _full_spec((NLAYERS, D_HID, E)),           # linear2 w (transposed)
        _full_spec((NLAYERS, 1, E)),               # linear2 b
        _full_spec((NLAYERS, 1, E)),               # ln1 gamma
        _full_spec((NLAYERS, 1, E)),               # ln1 beta
        _full_spec((NLAYERS, 1, E)),               # ln2 gamma
        _full_spec((NLAYERS, 1, E)),               # ln2 beta
        _full_spec((E, NTOKEN_PAD)),               # decoder w (transposed, padded)
        _full_spec((1, NTOKEN_PAD)),               # decoder b (padded)
    ]

    out = pl.pallas_call(
        fused_transformer_kernel,
        out_shape=jax.ShapeDtypeStruct((B * S, NTOKEN_PAD), jnp.float32),
        grid=(1,),
        in_specs=in_specs,
        out_specs=_full_spec((B * S, NTOKEN_PAD)),
        scratch_shapes=[pltpu.VMEM((B * S, E), jnp.float32)],
        compiler_params=pltpu.CompilerParams(
            dimension_semantics=("arbitrary",)),
    )(xf, src_mask,
      params["inw"], params["inb"], params["outw"], params["outb"],
      params["w1"], params["b1"], params["w2"], params["b2"],
      params["ln1g"], params["ln1b"], params["ln2g"], params["ln2b"],
      params["dec_w_t"], params["dec_b"])

    # Back to [S, B, NTOKEN]; drop the lane padding.
    return out.reshape(B, S, NTOKEN_PAD).transpose(1, 0, 2)[:, :, :NTOKEN]


# ------------------------------ main ------------------------------------------
if __name__ == "__main__":
    key = jax.random.PRNGKey(0)
    k_param, k_src = jax.random.split(key)

    params = init_params(k_param)
    src = jax.random.randint(k_src, (SEQ_LEN, BATCH), 0, NTOKEN, dtype=jnp.int32)
    src_mask = generate_square_subsequent_mask(SEQ_LEN)

    out = transformer_forward(params, src, src_mask)
    out = jax.block_until_ready(out)
    assert out.shape == (SEQ_LEN, BATCH, NTOKEN)
    assert bool(jnp.all(jnp.isfinite(out)))
    print("KERNEL_OK")
</pallas_src>

<mosaic_0001>
module attributes {stable_mosaic.version = 11 : i64} {
  func.func @fused_transformer_kernel(%arg0: i32, %arg1: memref<16x32xf32, #tpu.memory_space<vmem>>, %arg2: memref<8x8xf32, #tpu.memory_space<vmem>>, %arg3: memref<2x32x96xf32, #tpu.memory_space<vmem>>, %arg4: memref<2x1x96xf32, #tpu.memory_space<vmem>>, %arg5: memref<2x32x32xf32, #tpu.memory_space<vmem>>, %arg6: memref<2x1x32xf32, #tpu.memory_space<vmem>>, %arg7: memref<2x32x64xf32, #tpu.memory_space<vmem>>, %arg8: memref<2x1x64xf32, #tpu.memory_space<vmem>>, %arg9: memref<2x64x32xf32, #tpu.memory_space<vmem>>, %arg10: memref<2x1x32xf32, #tpu.memory_space<vmem>>, %arg11: memref<2x1x32xf32, #tpu.memory_space<vmem>>, %arg12: memref<2x1x32xf32, #tpu.memory_space<vmem>>, %arg13: memref<2x1x32xf32, #tpu.memory_space<vmem>>, %arg14: memref<2x1x32xf32, #tpu.memory_space<vmem>>, %arg15: memref<32x128xf32, #tpu.memory_space<vmem>>, %arg16: memref<1x128xf32, #tpu.memory_space<vmem>>, %arg17: memref<16x128xf32, #tpu.memory_space<vmem>>, %arg18: memref<16x32xf32, #tpu.memory_space<vmem>>) attributes {dimension_semantics = [#tpu.dimension_semantics<arbitrary>], iteration_bounds = array<i64: 1>, scalar_prefetch = 0 : i64, scratch_operands = 1 : i64, tpu.core_type = #tpu.core_type<tc>, window_params = [{pipeline_mode = #tpu.pipeline_mode<synchronous>, transform_indices = @transform_0, window_bounds = array<i64: 16, 32>}, {pipeline_mode = #tpu.pipeline_mode<synchronous>, transform_indices = @transform_1, window_bounds = array<i64: 8, 8>}, {pipeline_mode = #tpu.pipeline_mode<synchronous>, transform_indices = @transform_2, window_bounds = array<i64: 2, 32, 96>}, {pipeline_mode = #tpu.pipeline_mode<synchronous>, transform_indices = @transform_3, window_bounds = array<i64: 2, 1, 96>}, {pipeline_mode = #tpu.pipeline_mode<synchronous>, transform_indices = @transform_4, window_bounds = array<i64: 2, 32, 32>}, {pipeline_mode = #tpu.pipeline_mode<synchronous>, transform_indices = @transform_5, window_bounds = array<i64: 2, 1, 32>}, {pipeline_mode = #tpu.pipeline_mode<synchronous>, transform_indices = @transform_6, window_bounds = array<i64: 2, 32, 64>}, {pipeline_mode = #tpu.pipeline_mode<synchronous>, transform_indices = @transform_7, window_bounds = array<i64: 2, 1, 64>}, {pipeline_mode = #tpu.pipeline_mode<synchronous>, transform_indices = @transform_8, window_bounds = array<i64: 2, 64, 32>}, {pipeline_mode = #tpu.pipeline_mode<synchronous>, transform_indices = @transform_9, window_bounds = array<i64: 2, 1, 32>}, {pipeline_mode = #tpu.pipeline_mode<synchronous>, transform_indices = @transform_10, window_bounds = array<i64: 2, 1, 32>}, {pipeline_mode = #tpu.pipeline_mode<synchronous>, transform_indices = @transform_11, window_bounds = array<i64: 2, 1, 32>}, {pipeline_mode = #tpu.pipeline_mode<synchronous>, transform_indices = @transform_12, window_bounds = array<i64: 2, 1, 32>}, {pipeline_mode = #tpu.pipeline_mode<synchronous>, transform_indices = @transform_13, window_bounds = array<i64: 2, 1, 32>}, {pipeline_mode = #tpu.pipeline_mode<synchronous>, transform_indices = @transform_14, window_bounds = array<i64: 32, 128>}, {pipeline_mode = #tpu.pipeline_mode<synchronous>, transform_indices = @transform_15, window_bounds = array<i64: 1, 128>}, {pipeline_mode = #tpu.pipeline_mode<synchronous>, transform_indices = @transform_16, window_bounds = array<i64: 16, 128>}]} {
    %c0 = arith.constant 0 : index
    %c0_0 = arith.constant 0 : index
    %0 = vector.load %arg1[%c0, %c0_0] : memref<16x32xf32, #tpu.memory_space<vmem>>, vector<16x32xf32>
    %c0_1 = arith.constant 0 : index
    %c0_2 = arith.constant 0 : index
    %1 = vector.load %arg2[%c0_1, %c0_2] : memref<8x8xf32, #tpu.memory_space<vmem>>, vector<8x8xf32>
    %c0_3 = arith.constant 0 : index
    %c0_4 = arith.constant 0 : index
    %c0_5 = arith.constant 0 : index
    %2 = vector.load %arg3[%c0_3, %c0_4, %c0_5] : memref<2x32x96xf32, #tpu.memory_space<vmem>>, vector<1x32x96xf32>
    %3 = vector.shape_cast %2 : vector<1x32x96xf32> to vector<32x96xf32>
    %c0_6 = arith.constant 0 : index
    %c0_7 = arith.constant 0 : index
    %c0_8 = arith.constant 0 : index
    %4 = vector.load %arg4[%c0_6, %c0_7, %c0_8] : memref<2x1x96xf32, #tpu.memory_space<vmem>>, vector<1x1x96xf32>
    %5 = vector.shape_cast %4 : vector<1x1x96xf32> to vector<1x96xf32>
    %c0_9 = arith.constant 0 : index
    %c0_10 = arith.constant 0 : index
    %c0_11 = arith.constant 0 : index
    %6 = vector.load %arg5[%c0_9, %c0_10, %c0_11] : memref<2x32x32xf32, #tpu.memory_space<vmem>>, vector<1x32x32xf32>
    %7 = vector.shape_cast %6 : vector<1x32x32xf32> to vector<32x32xf32>
    %c0_12 = arith.constant 0 : index
    %c0_13 = arith.constant 0 : index
    %c0_14 = arith.constant 0 : index
    %8 = vector.load %arg6[%c0_12, %c0_13, %c0_14] : memref<2x1x32xf32, #tpu.memory_space<vmem>>, vector<1x1x32xf32>
    %9 = vector.shape_cast %8 : vector<1x1x32xf32> to vector<1x32xf32>
    %c0_15 = arith.constant 0 : index
    %c0_16 = arith.constant 0 : index
    %c0_17 = arith.constant 0 : index
    %10 = vector.load %arg7[%c0_15, %c0_16, %c0_17] : memref<2x32x64xf32, #tpu.memory_space<vmem>>, vector<1x32x64xf32>
    %11 = vector.shape_cast %10 : vector<1x32x64xf32> to vector<32x64xf32>
    %c0_18 = arith.constant 0 : index
    %c0_19 = arith.constant 0 : index
    %c0_20 = arith.constant 0 : index
    %12 = vector.load %arg8[%c0_18, %c0_19, %c0_20] : memref<2x1x64xf32, #tpu.memory_space<vmem>>, vector<1x1x64xf32>
    %13 = vector.shape_cast %12 : vector<1x1x64xf32> to vector<1x64xf32>
    %c0_21 = arith.constant 0 : index
    %c0_22 = arith.constant 0 : index
    %c0_23 = arith.constant 0 : index
    %14 = vector.load %arg9[%c0_21, %c0_22, %c0_23] : memref<2x64x32xf32, #tpu.memory_space<vmem>>, vector<1x64x32xf32>
    %15 = vector.shape_cast %14 : vector<1x64x32xf32> to vector<64x32xf32>
    %c0_24 = arith.constant 0 : index
    %c0_25 = arith.constant 0 : index
    %c0_26 = arith.constant 0 : index
    %16 = vector.load %arg10[%c0_24, %c0_25, %c0_26] : memref<2x1x32xf32, #tpu.memory_space<vmem>>, vector<1x1x32xf32>
    %17 = vector.shape_cast %16 : vector<1x1x32xf32> to vector<1x32xf32>
    %c0_27 = arith.constant 0 : index
    %c0_28 = arith.constant 0 : index
    %c0_29 = arith.constant 0 : index
    %18 = vector.load %arg11[%c0_27, %c0_28, %c0_29] : memref<2x1x32xf32, #tpu.memory_space<vmem>>, vector<1x1x32xf32>
    %19 = vector.shape_cast %18 : vector<1x1x32xf32> to vector<1x32xf32>
    %c0_30 = arith.constant 0 : index
    %c0_31 = arith.constant 0 : index
    %c0_32 = arith.constant 0 : index
    %20 = vector.load %arg12[%c0_30, %c0_31, %c0_32] : memref<2x1x32xf32, #tpu.memory_space<vmem>>, vector<1x1x32xf32>
    %21 = vector.shape_cast %20 : vector<1x1x32xf32> to vector<1x32xf32>
    %c0_33 = arith.constant 0 : index
    %c0_34 = arith.constant 0 : index
    %c0_35 = arith.constant 0 : index
    %22 = vector.load %arg13[%c0_33, %c0_34, %c0_35] : memref<2x1x32xf32, #tpu.memory_space<vmem>>, vector<1x1x32xf32>
    %23 = vector.shape_cast %22 : vector<1x1x32xf32> to vector<1x32xf32>
    %c0_36 = arith.constant 0 : index
    %c0_37 = arith.constant 0 : index
    %c0_38 = arith.constant 0 : index
    %24 = vector.load %arg14[%c0_36, %c0_37, %c0_38] : memref<2x1x32xf32, #tpu.memory_space<vmem>>, vector<1x1x32xf32>
    %25 = vector.shape_cast %24 : vector<1x1x32xf32> to vector<1x32xf32>
    %cst = arith.constant dense<0.000000e+00> : vector<16x96xf32>
    %26 = tpu.matmul %0, %3, %cst {dimension_numbers = #tpu.dot_dimension_numbers<[1], [0], [0], [1], [0, 0, 1, 1], [], []>} : vector<16x32xf32>, vector<32x96xf32>, vector<16x96xf32> -> vector<16x96xf32>
    %27 = vector.broadcast %5 : vector<1x96xf32> to vector<16x96xf32>
    %28 = arith.addf %26, %27 : vector<16x96xf32>
    %29 = vector.extract_strided_slice %28 {offsets = [0, 0], sizes = [16, 32], strides = [1, 1]} : vector<16x96xf32> to vector<16x32xf32>
    %30 = vector.extract_strided_slice %28 {offsets = [0, 32], sizes = [16, 32], strides = [1, 1]} : vector<16x96xf32> to vector<16x32xf32>
    %31 = vector.extract_strided_slice %28 {offsets = [0, 64], sizes = [16, 32], strides = [1, 1]} : vector<16x96xf32> to vector<16x32xf32>
    %32 = vector.extract_strided_slice %29 {offsets = [0, 0], sizes = [8, 8], strides = [1, 1]} : vector<16x32xf32> to vector<8x8xf32>
    %33 = vector.extract_strided_slice %30 {offsets = [0, 0], sizes = [8, 8], strides = [1, 1]} : vector<16x32xf32> to vector<8x8xf32>
    %34 = vector.extract_strided_slice %31 {offsets = [0, 0], sizes = [8, 8], strides = [1, 1]} : vector<16x32xf32> to vector<8x8xf32>
    %cst_39 = arith.constant dense<0.000000e+00> : vector<8x8xf32>
    %35 = tpu.matmul %32, %33, %cst_39 {dimension_numbers = #tpu.dot_dimension_numbers<[1], [1], [0], [0], [0, 0, 1, 0], [], []>} : vector<8x8xf32>, vector<8x8xf32>, vector<8x8xf32> -> vector<8x8xf32>
    %cst_40 = arith.constant 0.353553385 : f32
    %36 = vector.broadcast %cst_40 : f32 to vector<8x8xf32>
    %37 = arith.mulf %35, %36 : vector<8x8xf32>
    %38 = arith.addf %37, %1 : vector<8x8xf32>
    %cst_41 = arith.constant dense<0xFF800000> : vector<8xf32>
    %39 = vector.multi_reduction <maximumf>, %38, %cst_41 [1] : vector<8x8xf32> to vector<8xf32>
    %40 = vector.shape_cast %39 : vector<8xf32> to vector<8x1xf32>
    %41 = vector.broadcast %40 : vector<8x1xf32> to vector<8x8xf32>
    %42 = arith.subf %38, %41 : vector<8x8xf32>
    %43 = math.exp %42 : vector<8x8xf32>
    %cst_42 = arith.constant dense<0.000000e+00> : vector<8xf32>
    %44 = vector.multi_reduction <add>, %43, %cst_42 [1] : vector<8x8xf32> to vector<8xf32>
    %45 = vector.shape_cast %44 : vector<8xf32> to vector<8x1xf32>
    %46 = vector.broadcast %45 : vector<8x1xf32> to vector<8x8xf32>
    %47 = arith.divf %43, %46 : vector<8x8xf32>
    %cst_43 = arith.constant dense<0.000000e+00> : vector<8x8xf32>
    %48 = tpu.matmul %47, %34, %cst_43 {dimension_numbers = #tpu.dot_dimension_numbers<[1], [0], [0], [1], [0, 0, 1, 1], [], []>} : vector<8x8xf32>, vector<8x8xf32>, vector<8x8xf32> -> vector<8x8xf32>
    %c0_44 = arith.constant 0 : index
    %c0_45 = arith.constant 0 : index
    %49 = vector.load %arg18[%c0_44, %c0_45] : memref<16x32xf32, #tpu.memory_space<vmem>>, vector<8x8xf32>
    tpu.vector_store %arg18[%c0_44, %c0_45], %48 {strides = array<i32>} : memref<16x32xf32, #tpu.memory_space<vmem>>, vector<8x8xf32>,
    %50 = vector.extract_strided_slice %29 {offsets = [0, 8], sizes = [8, 8], strides = [1, 1]} : vector<16x32xf32> to vector<8x8xf32>
    %51 = vector.extract_strided_slice %30 {offsets = [0, 8], sizes = [8, 8], strides = [1, 1]} : vector<16x32xf32> to vector<8x8xf32>
    %52 = vector.extract_strided_slice %31 {offsets = [0, 8], sizes = [8, 8], strides = [1, 1]} : vector<16x32xf32> to vector<8x8xf32>
    %cst_46 = arith.constant dense<0.000000e+00> : vector<8x8xf32>
    %53 = tpu.matmul %50, %51, %cst_46 {dimension_numbers = #tpu.dot_dimension_numbers<[1], [1], [0], [0], [0, 0, 1, 0], [], []>} : vector<8x8xf32>, vector<8x8xf32>, vector<8x8xf32> -> vector<8x8xf32>
    %cst_47 = arith.constant 0.353553385 : f32
    %54 = vector.broadcast %cst_47 : f32 to vector<8x8xf32>
    %55 = arith.mulf %53, %54 : vector<8x8xf32>
    %56 = arith.addf %55, %1 : vector<8x8xf32>
    %cst_48 = arith.constant dense<0xFF800000> : vector<8xf32>
    %57 = vector.multi_reduction <maximumf>, %56, %cst_48 [1] : vector<8x8xf32> to vector<8xf32>
    %58 = vector.shape_cast %57 : vector<8xf32> to vector<8x1xf32>
    %59 = vector.broadcast %58 : vector<8x1xf32> to vector<8x8xf32>
    %60 = arith.subf %56, %59 : vector<8x8xf32>
    %61 = math.exp %60 : vector<8x8xf32>
    %cst_49 = arith.constant dense<0.000000e+00> : vector<8xf32>
    %62 = vector.multi_reduction <add>, %61, %cst_49 [1] : vector<8x8xf32> to vector<8xf32>
    %63 = vector.shape_cast %62 : vector<8xf32> to vector<8x1xf32>
    %64 = vector.broadcast %63 : vector<8x1xf32> to vector<8x8xf32>
    %65 = arith.divf %61, %64 : vector<8x8xf32>
    %cst_50 = arith.constant dense<0.000000e+00> : vector<8x8xf32>
    %66 = tpu.matmul %65, %52, %cst_50 {dimension_numbers = #tpu.dot_dimension_numbers<[1], [0], [0], [1], [0, 0, 1, 1], [], []>} : vector<8x8xf32>, vector<8x8xf32>, vector<8x8xf32> -> vector<8x8xf32>
    %c0_51 = arith.constant 0 : index
    %c8 = arith.constant 8 : index
    %67 = vector.load %arg18[%c0_51, %c8] : memref<16x32xf32, #tpu.memory_space<vmem>>, vector<8x8xf32>
    tpu.vector_store %arg18[%c0_51, %c8], %66 {strides = array<i32>} : memref<16x32xf32, #tpu.memory_space<vmem>>, vector<8x8xf32>,
    %68 = vector.extract_strided_slice %29 {offsets = [0, 16], sizes = [8, 8], strides = [1, 1]} : vector<16x32xf32> to vector<8x8xf32>
    %69 = vector.extract_strided_slice %30 {offsets = [0, 16], sizes = [8, 8], strides = [1, 1]} : vector<16x32xf32> to vector<8x8xf32>
    %70 = vector.extract_strided_slice %31 {offsets = [0, 16], sizes = [8, 8], strides = [1, 1]} : vector<16x32xf32> to vector<8x8xf32>
    %cst_52 = arith.constant dense<0.000000e+00> : vector<8x8xf32>
    %71 = tpu.matmul %68, %69, %cst_52 {dimension_numbers = #tpu.dot_dimension_numbers<[1], [1], [0], [0], [0, 0, 1, 0], [], []>} : vector<8x8xf32>, vector<8x8xf32>, vector<8x8xf32> -> vector<8x8xf32>
    %cst_53 = arith.constant 0.353553385 : f32
    %72 = vector.broadcast %cst_53 : f32 to vector<8x8xf32>
    %73 = arith.mulf %71, %72 : vector<8x8xf32>
    %74 = arith.addf %73, %1 : vector<8x8xf32>
    %cst_54 = arith.constant dense<0xFF800000> : vector<8xf32>
    %75 = vector.multi_reduction <maximumf>, %74, %cst_54 [1] : vector<8x8xf32> to vector<8xf32>
    %76 = vector.shape_cast %75 : vector<8xf32> to vector<8x1xf32>
    %77 = vector.broadcast %76 : vector<8x1xf32> to vector<8x8xf32>
    %78 = arith.subf %74, %77 : vector<8x8xf32>
    %79 = math.exp %78 : vector<8x8xf32>
    %cst_55 = arith.constant dense<0.000000e+00> : vector<8xf32>
    %80 = vector.multi_reduction <add>, %79, %cst_55 [1] : vector<8x8xf32> to vector<8xf32>
    %81 = vector.shape_cast %80 : vector<8xf32> to vector<8x1xf32>
    %82 = vector.broadcast %81 : vector<8x1xf32> to vector<8x8xf32>
    %83 = arith.divf %79, %82 : vector<8x8xf32>
    %cst_56 = arith.constant dense<0.000000e+00> : vector<8x8xf32>
    %84 = tpu.matmul %83, %70, %cst_56 {dimension_numbers = #tpu.dot_dimension_numbers<[1], [0], [0], [1], [0, 0, 1, 1], [], []>} : vector<8x8xf32>, vector<8x8xf32>, vector<8x8xf32> -> vector<8x8xf32>
    %c0_57 = arith.constant 0 : index
    %c16 = arith.constant 16 : index
    %85 = vector.load %arg18[%c0_57, %c16] : memref<16x32xf32, #tpu.memory_space<vmem>>, vector<8x8xf32>
    tpu.vector_store %arg18[%c0_57, %c16], %84 {strides = array<i32>} : memref<16x32xf32, #tpu.memory_space<vmem>>, vector<8x8xf32>,
    %86 = vector.extract_strided_slice %29 {offsets = [0, 24], sizes = [8, 8], strides = [1, 1]} : vector<16x32xf32> to vector<8x8xf32>
    %87 = vector.extract_strided_slice %30 {offsets = [0, 24], sizes = [8, 8], strides = [1, 1]} : vector<16x32xf32> to vector<8x8xf32>
    %88 = vector.extract_strided_slice %31 {offsets = [0, 24], sizes = [8, 8], strides = [1, 1]} : vector<16x32xf32> to vector<8x8xf32>
    %cst_58 = arith.constant dense<0.000000e+00> : vector<8x8xf32>
    %89 = tpu.matmul %86, %87, %cst_58 {dimension_numbers = #tpu.dot_dimension_numbers<[1], [1], [0], [0], [0, 0, 1, 0], [], []>} : vector<8x8xf32>, vector<8x8xf32>, vector<8x8xf32> -> vector<8x8xf32>
    %cst_59 = arith.constant 0.353553385 : f32
    %90 = vector.broadcast %cst_59 : f32 to vector<8x8xf32>
    %91 = arith.mulf %89, %90 : vector<8x8xf32>
    %92 = arith.addf %91, %1 : vector<8x8xf32>
    %cst_60 = arith.constant dense<0xFF800000> : vector<8xf32>
    %93 = vector.multi_reduction <maximumf>, %92, %cst_60 [1] : vector<8x8xf32> to vector<8xf32>
    %94 = vector.shape_cast %93 : vector<8xf32> to vector<8x1xf32>
    %95 = vector.broadcast %94 : vector<8x1xf32> to vector<8x8xf32>
    %96 = arith.subf %92, %95 : vector<8x8xf32>
    %97 = math.exp %96 : vector<8x8xf32>
    %cst_61 = arith.constant dense<0.000000e+00> : vector<8xf32>
    %98 = vector.multi_reduction <add>, %97, %cst_61 [1] : vector<8x8xf32> to vector<8xf32>
    %99 = vector.shape_cast %98 : vector<8xf32> to vector<8x1xf32>
    %100 = vector.broadcast %99 : vector<8x1xf32> to vector<8x8xf32>
    %101 = arith.divf %97, %100 : vector<8x8xf32>
    %cst_62 = arith.constant dense<0.000000e+00> : vector<8x8xf32>
    %102 = tpu.matmul %101, %88, %cst_62 {dimension_numbers = #tpu.dot_dimension_numbers<[1], [0], [0], [1], [0, 0, 1, 1], [], []>} : vector<8x8xf32>, vector<8x8xf32>, vector<8x8xf32> -> vector<8x8xf32>
    %c0_63 = arith.constant 0 : index
    %c24 = arith.constant 24 : index
    %103 = vector.load %arg18[%c0_63, %c24] : memref<16x32xf32, #tpu.memory_space<vmem>>, vector<8x8xf32>
    tpu.vector_store %arg18[%c0_63, %c24], %102 {strides = array<i32>} : memref<16x32xf32, #tpu.memory_space<vmem>>, vector<8x8xf32>,
    %104 = vector.extract_strided_slice %29 {offsets = [8, 0], sizes = [8, 8], strides = [1, 1]} : vector<16x32xf32> to vector<8x8xf32>
    %105 = vector.extract_strided_slice %30 {offsets = [8, 0], sizes = [8, 8], strides = [1, 1]} : vector<16x32xf32> to vector<8x8xf32>
    %106 = vector.extract_strided_slice %31 {offsets = [8, 0], sizes = [8, 8], strides = [1, 1]} : vector<16x32xf32> to vector<8x8xf32>
    %cst_64 = arith.constant dense<0.000000e+00> : vector<8x8xf32>
    %107 = tpu.matmul %104, %105, %cst_64 {dimension_numbers = #tpu.dot_dimension_numbers<[1], [1], [0], [0], [0, 0, 1, 0], [], []>} : vector<8x8xf32>, vector<8x8xf32>, vector<8x8xf32> -> vector<8x8xf32>
    %cst_65 = arith.constant 0.353553385 : f32
    %108 = vector.broadcast %cst_65 : f32 to vector<8x8xf32>
    %109 = arith.mulf %107, %108 : vector<8x8xf32>
    %110 = arith.addf %109, %1 : vector<8x8xf32>
    %cst_66 = arith.constant dense<0xFF800000> : vector<8xf32>
    %111 = vector.multi_reduction <maximumf>, %110, %cst_66 [1] : vector<8x8xf32> to vector<8xf32>
    %112 = vector.shape_cast %111 : vector<8xf32> to vector<8x1xf32>
    %113 = vector.broadcast %112 : vector<8x1xf32> to vector<8x8xf32>
    %114 = arith.subf %110, %113 : vector<8x8xf32>
    %115 = math.exp %114 : vector<8x8xf32>
    %cst_67 = arith.constant dense<0.000000e+00> : vector<8xf32>
    %116 = vector.multi_reduction <add>, %115, %cst_67 [1] : vector<8x8xf32> to vector<8xf32>
    %117 = vector.shape_cast %116 : vector<8xf32> to vector<8x1xf32>
    %118 = vector.broadcast %117 : vector<8x1xf32> to vector<8x8xf32>
    %119 = arith.divf %115, %118 : vector<8x8xf32>
    %cst_68 = arith.constant dense<0.000000e+00> : vector<8x8xf32>
    %120 = tpu.matmul %119, %106, %cst_68 {dimension_numbers = #tpu.dot_dimension_numbers<[1], [0], [0], [1], [0, 0, 1, 1], [], []>} : vector<8x8xf32>, vector<8x8xf32>, vector<8x8xf32> -> vector<8x8xf32>
    %c8_69 = arith.constant 8 : index
    %c0_70 = arith.constant 0 : index
    %121 = vector.load %arg18[%c8_69, %c0_70] : memref<16x32xf32, #tpu.memory_space<vmem>>, vector<8x8xf32>
    tpu.vector_store %arg18[%c8_69, %c0_70], %120 {strides = array<i32>} : memref<16x32xf32, #tpu.memory_space<vmem>>, vector<8x8xf32>,
    %122 = vector.extract_strided_slice %29 {offsets = [8, 8], sizes = [8, 8], strides = [1, 1]} : vector<16x32xf32> to vector<8x8xf32>
    %123 = vector.extract_strided_slice %30 {offsets = [8, 8], sizes = [8, 8], strides = [1, 1]} : vector<16x32xf32> to vector<8x8xf32>
    %124 = vector.extract_strided_slice %31 {offsets = [8, 8], sizes = [8, 8], strides = [1, 1]} : vector<16x32xf32> to vector<8x8xf32>
    %cst_71 = arith.constant dense<0.000000e+00> : vector<8x8xf32>
    %125 = tpu.matmul %122, %123, %cst_71 {dimension_numbers = #tpu.dot_dimension_numbers<[1], [1], [0], [0], [0, 0, 1, 0], [], []>} : vector<8x8xf32>, vector<8x8xf32>, vector<8x8xf32> -> vector<8x8xf32>
    %cst_72 = arith.constant 0.353553385 : f32
    %126 = vector.broadcast %cst_72 : f32 to vector<8x8xf32>
    %127 = arith.mulf %125, %126 : vector<8x8xf32>
    %128 = arith.addf %127, %1 : vector<8x8xf32>
    %cst_73 = arith.constant dense<0xFF800000> : vector<8xf32>
    %129 = vector.multi_reduction <maximumf>, %128, %cst_73 [1] : vector<8x8xf32> to vector<8xf32>
    %130 = vector.shape_cast %129 : vector<8xf32> to vector<8x1xf32>
    %131 = vector.broadcast %130 : vector<8x1xf32> to vector<8x8xf32>
    %132 = arith.subf %128, %131 : vector<8x8xf32>
    %133 = math.exp %132 : vector<8x8xf32>
    %cst_74 = arith.constant dense<0.000000e+00> : vector<8xf32>
    %134 = vector.multi_reduction <add>, %133, %cst_74 [1] : vector<8x8xf32> to vector<8xf32>
    %135 = vector.shape_cast %134 : vector<8xf32> to vector<8x1xf32>
    %136 = vector.broadcast %135 : vector<8x1xf32> to vector<8x8xf32>
    %137 = arith.divf %133, %136 : vector<8x8xf32>
    %cst_75 = arith.constant dense<0.000000e+00> : vector<8x8xf32>
    %138 = tpu.matmul %137, %124, %cst_75 {dimension_numbers = #tpu.dot_dimension_numbers<[1], [0], [0], [1], [0, 0, 1, 1], [], []>} : vector<8x8xf32>, vector<8x8xf32>, vector<8x8xf32> -> vector<8x8xf32>
    %c8_76 = arith.constant 8 : index
    %c8_77 = arith.constant 8 : index
    %139 = vector.load %arg18[%c8_76, %c8_77] : memref<16x32xf32, #tpu.memory_space<vmem>>, vector<8x8xf32>
    tpu.vector_store %arg18[%c8_76, %c8_77], %138 {strides = array<i32>} : memref<16x32xf32, #tpu.memory_space<vmem>>, vector<8x8xf32>,
    %140 = vector.extract_strided_slice %29 {offsets = [8, 16], sizes = [8, 8], strides = [1, 1]} : vector<16x32xf32> to vector<8x8xf32>
    %141 = vector.extract_strided_slice %30 {offsets = [8, 16], sizes = [8, 8], strides = [1, 1]} : vector<16x32xf32> to vector<8x8xf32>
    %142 = vector.extract_strided_slice %31 {offsets = [8, 16], sizes = [8, 8], strides = [1, 1]} : vector<16x32xf32> to vector<8x8xf32>
    %cst_78 = arith.constant dense<0.000000e+00> : vector<8x8xf32>
    %143 = tpu.matmul %140, %141, %cst_78 {dimension_numbers = #tpu.dot_dimension_numbers<[1], [1], [0], [0], [0, 0, 1, 0], [], []>} : vector<8x8xf32>, vector<8x8xf32>, vector<8x8xf32> -> vector<8x8xf32>
    %cst_79 = arith.constant 0.353553385 : f32
    %144 = vector.broadcast %cst_79 : f32 to vector<8x8xf32>
    %145 = arith.mulf %143, %144 : vector<8x8xf32>
    %146 = arith.addf %145, %1 : vector<8x8xf32>
    %cst_80 = arith.constant dense<0xFF800000> : vector<8xf32>
    %147 = vector.multi_reduction <maximumf>, %146, %cst_80 [1] : vector<8x8xf32> to vector<8xf32>
    %148 = vector.shape_cast %147 : vector<8xf32> to vector<8x1xf32>
    %149 = vector.broadcast %148 : vector<8x1xf32> to vector<8x8xf32>
    %150 = arith.subf %146, %149 : vector<8x8xf32>
    %151 = math.exp %150 : vector<8x8xf32>
    %cst_81 = arith.constant dense<0.000000e+00> : vector<8xf32>
    %152 = vector.multi_reduction <add>, %151, %cst_81 [1] : vector<8x8xf32> to vector<8xf32>
    %153 = vector.shape_cast %152 : vector<8xf32> to vector<8x1xf32>
    %154 = vector.broadcast %153 : vector<8x1xf32> to vector<8x8xf32>
    %155 = arith.divf %151, %154 : vector<8x8xf32>
    %cst_82 = arith.constant dense<0.000000e+00> : vector<8x8xf32>
    %156 = tpu.matmul %155, %142, %cst_82 {dimension_numbers = #tpu.dot_dimension_numbers<[1], [0], [0], [1], [0, 0, 1, 1], [], []>} : vector<8x8xf32>, vector<8x8xf32>, vector<8x8xf32> -> vector<8x8xf32>
    %c8_83 = arith.constant 8 : index
    %c16_84 = arith.constant 16 : index
    %157 = vector.load %arg18[%c8_83, %c16_84] : memref<16x32xf32, #tpu.memory_space<vmem>>, vector<8x8xf32>
    tpu.vector_store %arg18[%c8_83, %c16_84], %156 {strides = array<i32>} : memref<16x32xf32, #tpu.memory_space<vmem>>, vector<8x8xf32>,
    %158 = vector.extract_strided_slice %29 {offsets = [8, 24], sizes = [8, 8], strides = [1, 1]} : vector<16x32xf32> to vector<8x8xf32>
    %159 = vector.extract_strided_slice %30 {offsets = [8, 24], sizes = [8, 8], strides = [1, 1]} : vector<16x32xf32> to vector<8x8xf32>
    %160 = vector.extract_strided_slice %31 {offsets = [8, 24], sizes = [8, 8], strides = [1, 1]} : vector<16x32xf32> to vector<8x8xf32>
    %cst_85 = arith.constant dense<0.000000e+00> : vector<8x8xf32>
    %161 = tpu.matmul %158, %159, %cst_85 {dimension_numbers = #tpu.dot_dimension_numbers<[1], [1], [0], [0], [0, 0, 1, 0], [], []>} : vector<8x8xf32>, vector<8x8xf32>, vector<8x8xf32> -> vector<8x8xf32>
    %cst_86 = arith.constant 0.353553385 : f32
    %162 = vector.broadcast %cst_86 : f32 to vector<8x8xf32>
    %163 = arith.mulf %161, %162 : vector<8x8xf32>
    %164 = arith.addf %163, %1 : vector<8x8xf32>
    %cst_87 = arith.constant dense<0xFF800000> : vector<8xf32>
    %165 = vector.multi_reduction <maximumf>, %164, %cst_87 [1] : vector<8x8xf32> to vector<8xf32>
    %166 = vector.shape_cast %165 : vector<8xf32> to vector<8x1xf32>
    %167 = vector.broadcast %166 : vector<8x1xf32> to vector<8x8xf32>
    %168 = arith.subf %164, %167 : vector<8x8xf32>
    %169 = math.exp %168 : vector<8x8xf32>
    %cst_88 = arith.constant dense<0.000000e+00> : vector<8xf32>
    %170 = vector.multi_reduction <add>, %169, %cst_88 [1] : vector<8x8xf32> to vector<8xf32>
    %171 = vector.shape_cast %170 : vector<8xf32> to vector<8x1xf32>
    %172 = vector.broadcast %171 : vector<8x1xf32> to vector<8x8xf32>
    %173 = arith.divf %169, %172 : vector<8x8xf32>
    %cst_89 = arith.constant dense<0.000000e+00> : vector<8x8xf32>
    %174 = tpu.matmul %173, %160, %cst_89 {dimension_numbers = #tpu.dot_dimension_numbers<[1], [0], [0], [1], [0, 0, 1, 1], [], []>} : vector<8x8xf32>, vector<8x8xf32>, vector<8x8xf32> -> vector<8x8xf32>
    %c8_90 = arith.constant 8 : index
    %c24_91 = arith.constant 24 : index
    %175 = vector.load %arg18[%c8_90, %c24_91] : memref<16x32xf32, #tpu.memory_space<vmem>>, vector<8x8xf32>
    tpu.vector_store %arg18[%c8_90, %c24_91], %174 {strides = array<i32>} : memref<16x32xf32, #tpu.memory_space<vmem>>, vector<8x8xf32>,
    %c0_92 = arith.constant 0 : index
    %c0_93 = arith.constant 0 : index
    %176 = vector.load %arg18[%c0_92, %c0_93] : memref<16x32xf32, #tpu.memory_space<vmem>>, vector<16x32xf32>
    %cst_94 = arith.constant dense<0.000000e+00> : vector<16x32xf32>
    %177 = tpu.matmul %176, %7, %cst_94 {dimension_numbers = #tpu.dot_dimension_numbers<[1], [0], [0], [1], [0, 0, 1, 1], [], []>} : vector<16x32xf32>, vector<32x32xf32>, vector<16x32xf32> -> vector<16x32xf32>
    %178 = vector.broadcast %9 : vector<1x32xf32> to vector<16x32xf32>
    %179 = arith.addf %177, %178 : vector<16x32xf32>
    %180 = arith.addf %0, %179 : vector<16x32xf32>
    %cst_95 = arith.constant dense<0.000000e+00> : vector<16xf32>
    %181 = vector.multi_reduction <add>, %180, %cst_95 [1] : vector<16x32xf32> to vector<16xf32>
    %182 = vector.shape_cast %181 : vector<16xf32> to vector<16x1xf32>
    %cst_96 = arith.constant 3.200000e+01 : f32
    %183 = vector.broadcast %cst_96 : f32 to vector<16x1xf32>
    %184 = arith.divf %182, %183 : vector<16x1xf32>
    %185 = vector.broadcast %184 : vector<16x1xf32> to vector<16x32xf32>
    %186 = arith.subf %180, %185 : vector<16x32xf32>
    %187 = arith.mulf %186, %186 : vector<16x32xf32>
    %cst_97 = arith.constant dense<0.000000e+00> : vector<16xf32>
    %188 = vector.multi_reduction <add>, %187, %cst_97 [1] : vector<16x32xf32> to vector<16xf32>
    %189 = vector.shape_cast %188 : vector<16xf32> to vector<16x1xf32>
    %cst_98 = arith.constant 3.200000e+01 : f32
    %190 = vector.broadcast %cst_98 : f32 to vector<16x1xf32>
    %191 = arith.divf %189, %190 : vector<16x1xf32>
    %192 = vector.broadcast %184 : vector<16x1xf32> to vector<16x32xf32>
    %193 = arith.subf %180, %192 : vector<16x32xf32>
    %cst_99 = arith.constant 9.99999974E-6 : f32
    %194 = vector.broadcast %cst_99 : f32 to vector<16x1xf32>
    %195 = arith.addf %191, %194 : vector<16x1xf32>
    %196 = math.rsqrt %195 : vector<16x1xf32>
    %197 = vector.broadcast %196 : vector<16x1xf32> to vector<16x32xf32>
    %198 = arith.mulf %193, %197 : vector<16x32xf32>
    %199 = vector.broadcast %19 : vector<1x32xf32> to vector<16x32xf32>
    %200 = arith.mulf %198, %199 : vector<16x32xf32>
    %201 = vector.broadcast %21 : vector<1x32xf32> to vector<16x32xf32>
    %202 = arith.addf %200, %201 : vector<16x32xf32>
    %cst_100 = arith.constant dense<0.000000e+00> : vector<16x64xf32>
    %203 = tpu.matmul %202, %11, %cst_100 {dimension_numbers = #tpu.dot_dimension_numbers<[1], [0], [0], [1], [0, 0, 1, 1], [], []>} : vector<16x32xf32>, vector<32x64xf32>, vector<16x64xf32> -> vector<16x64xf32>
    %204 = vector.broadcast %13 : vector<1x64xf32> to vector<16x64xf32>
    %205 = arith.addf %203, %204 : vector<16x64xf32>
    %cst_101 = arith.constant 0.000000e+00 : f32
    %206 = vector.broadcast %cst_101 : f32 to vector<16x64xf32>
    %207 = arith.maximumf %205, %206 : vector<16x64xf32>
    %cst_102 = arith.constant dense<0.000000e+00> : vector<16x32xf32>
    %208 = tpu.matmul %207, %15, %cst_102 {dimension_numbers = #tpu.dot_dimension_numbers<[1], [0], [0], [1], [0, 0, 1, 1], [], []>} : vector<16x64xf32>, vector<64x32xf32>, vector<16x32xf32> -> vector<16x32xf32>
    %209 = vector.broadcast %17 : vector<1x32xf32> to vector<16x32xf32>
    %210 = arith.addf %208, %209 : vector<16x32xf32>
    %211 = arith.addf %202, %210 : vector<16x32xf32>
    %cst_103 = arith.constant dense<0.000000e+00> : vector<16xf32>
    %212 = vector.multi_reduction <add>, %211, %cst_103 [1] : vector<16x32xf32> to vector<16xf32>
    %213 = vector.shape_cast %212 : vector<16xf32> to vector<16x1xf32>
    %cst_104 = arith.constant 3.200000e+01 : f32
    %214 = vector.broadcast %cst_104 : f32 to vector<16x1xf32>
    %215 = arith.divf %213, %214 : vector<16x1xf32>
    %216 = vector.broadcast %215 : vector<16x1xf32> to vector<16x32xf32>
    %217 = arith.subf %211, %216 : vector<16x32xf32>
    %218 = arith.mulf %217, %217 : vector<16x32xf32>
    %cst_105 = arith.constant dense<0.000000e+00> : vector<16xf32>
    %219 = vector.multi_reduction <add>, %218, %cst_105 [1] : vector<16x32xf32> to vector<16xf32>
    %220 = vector.shape_cast %219 : vector<16xf32> to vector<16x1xf32>
    %cst_106 = arith.constant 3.200000e+01 : f32
    %221 = vector.broadcast %cst_106 : f32 to vector<16x1xf32>
    %222 = arith.divf %220, %221 : vector<16x1xf32>
    %223 = vector.broadcast %215 : vector<16x1xf32> to vector<16x32xf32>
    %224 = arith.subf %211, %223 : vector<16x32xf32>
    %cst_107 = arith.constant 9.99999974E-6 : f32
    %225 = vector.broadcast %cst_107 : f32 to vector<16x1xf32>
    %226 = arith.addf %222, %225 : vector<16x1xf32>
    %227 = math.rsqrt %226 : vector<16x1xf32>
    %228 = vector.broadcast %227 : vector<16x1xf32> to vector<16x32xf32>
    %229 = arith.mulf %224, %228 : vector<16x32xf32>
    %230 = vector.broadcast %23 : vector<1x32xf32> to vector<16x32xf32>
    %231 = arith.mulf %229, %230 : vector<16x32xf32>
    %232 = vector.broadcast %25 : vector<1x32xf32> to vector<16x32xf32>
    %233 = arith.addf %231, %232 : vector<16x32xf32>
    %c1 = arith.constant 1 : index
    %c0_108 = arith.constant 0 : index
    %c0_109 = arith.constant 0 : index
    %234 = vector.load %arg3[%c1, %c0_108, %c0_109] : memref<2x32x96xf32, #tpu.memory_space<vmem>>, vector<1x32x96xf32>
    %235 = vector.shape_cast %234 : vector<1x32x96xf32> to vector<32x96xf32>
    %c1_110 = arith.constant 1 : index
    %c0_111 = arith.constant 0 : index
    %c0_112 = arith.constant 0 : index
    %236 = vector.load %arg4[%c1_110, %c0_111, %c0_112] : memref<2x1x96xf32, #tpu.memory_space<vmem>>, vector<1x1x96xf32>
    %237 = vector.shape_cast %236 : vector<1x1x96xf32> to vector<1x96xf32>
    %c1_113 = arith.constant 1 : index
    %c0_114 = arith.constant 0 : index
    %c0_115 = arith.constant 0 : index
    %238 = vector.load %arg5[%c1_113, %c0_114, %c0_115] : memref<2x32x32xf32, #tpu.memory_space<vmem>>, vector<1x32x32xf32>
    %239 = vector.shape_cast %238 : vector<1x32x32xf32> to vector<32x32xf32>
    %c1_116 = arith.constant 1 : index
    %c0_117 = arith.constant 0 : index
    %c0_118 = arith.constant 0 : index
    %240 = vector.load %arg6[%c1_116, %c0_117, %c0_118] : memref<2x1x32xf32, #tpu.memory_space<vmem>>, vector<1x1x32xf32>
    %241 = vector.shape_cast %240 : vector<1x1x32xf32> to vector<1x32xf32>
    %c1_119 = arith.constant 1 : index
    %c0_120 = arith.constant 0 : index
    %c0_121 = arith.constant 0 : index
    %242 = vector.load %arg7[%c1_119, %c0_120, %c0_121] : memref<2x32x64xf32, #tpu.memory_space<vmem>>, vector<1x32x64xf32>
    %243 = vector.shape_cast %242 : vector<1x32x64xf32> to vector<32x64xf32>
    %c1_122 = arith.constant 1 : index
    %c0_123 = arith.constant 0 : index
    %c0_124 = arith.constant 0 : index
    %244 = vector.load %arg8[%c1_122, %c0_123, %c0_124] : memref<2x1x64xf32, #tpu.memory_space<vmem>>, vector<1x1x64xf32>
    %245 = vector.shape_cast %244 : vector<1x1x64xf32> to vector<1x64xf32>
    %c1_125 = arith.constant 1 : index
    %c0_126 = arith.constant 0 : index
    %c0_127 = arith.constant 0 : index
    %246 = vector.load %arg9[%c1_125, %c0_126, %c0_127] : memref<2x64x32xf32, #tpu.memory_space<vmem>>, vector<1x64x32xf32>
    %247 = vector.shape_cast %246 : vector<1x64x32xf32> to vector<64x32xf32>
    %c1_128 = arith.constant 1 : index
    %c0_129 = arith.constant 0 : index
    %c0_130 = arith.constant 0 : index
    %248 = vector.load %arg10[%c1_128, %c0_129, %c0_130] : memref<2x1x32xf32, #tpu.memory_space<vmem>>, vector<1x1x32xf32>
    %249 = vector.shape_cast %248 : vector<1x1x32xf32> to vector<1x32xf32>
    %c1_131 = arith.constant 1 : index
    %c0_132 = arith.constant 0 : index
    %c0_133 = arith.constant 0 : index
    %250 = vector.load %arg11[%c1_131, %c0_132, %c0_133] : memref<2x1x32xf32, #tpu.memory_space<vmem>>, vector<1x1x32xf32>
    %251 = vector.shape_cast %250 : vector<1x1x32xf32> to vector<1x32xf32>
    %c1_134 = arith.constant 1 : index
    %c0_135 = arith.constant 0 : index
    %c0_136 = arith.constant 0 : index
    %252 = vector.load %arg12[%c1_134, %c0_135, %c0_136] : memref<2x1x32xf32, #tpu.memory_space<vmem>>, vector<1x1x32xf32>
    %253 = vector.shape_cast %252 : vector<1x1x32xf32> to vector<1x32xf32>
    %c1_137 = arith.constant 1 : index
    %c0_138 = arith.constant 0 : index
    %c0_139 = arith.constant 0 : index
    %254 = vector.load %arg13[%c1_137, %c0_138, %c0_139] : memref<2x1x32xf32, #tpu.memory_space<vmem>>, vector<1x1x32xf32>
    %255 = vector.shape_cast %254 : vector<1x1x32xf32> to vector<1x32xf32>
    %c1_140 = arith.constant 1 : index
    %c0_141 = arith.constant 0 : index
    %c0_142 = arith.constant 0 : index
    %256 = vector.load %arg14[%c1_140, %c0_141, %c0_142] : memref<2x1x32xf32, #tpu.memory_space<vmem>>, vector<1x1x32xf32>
    %257 = vector.shape_cast %256 : vector<1x1x32xf32> to vector<1x32xf32>
    %cst_143 = arith.constant dense<0.000000e+00> : vector<16x96xf32>
    %258 = tpu.matmul %233, %235, %cst_143 {dimension_numbers = #tpu.dot_dimension_numbers<[1], [0], [0], [1], [0, 0, 1, 1], [], []>} : vector<16x32xf32>, vector<32x96xf32>, vector<16x96xf32> -> vector<16x96xf32>
    %259 = vector.broadcast %237 : vector<1x96xf32> to vector<16x96xf32>
    %260 = arith.addf %258, %259 : vector<16x96xf32>
    %261 = vector.extract_strided_slice %260 {offsets = [0, 0], sizes = [16, 32], strides = [1, 1]} : vector<16x96xf32> to vector<16x32xf32>
    %262 = vector.extract_strided_slice %260 {offsets = [0, 32], sizes = [16, 32], strides = [1, 1]} : vector<16x96xf32> to vector<16x32xf32>
    %263 = vector.extract_strided_slice %260 {offsets = [0, 64], sizes = [16, 32], strides = [1, 1]} : vector<16x96xf32> to vector<16x32xf32>
    %264 = vector.extract_strided_slice %261 {offsets = [0, 0], sizes = [8, 8], strides = [1, 1]} : vector<16x32xf32> to vector<8x8xf32>
    %265 = vector.extract_strided_slice %262 {offsets = [0, 0], sizes = [8, 8], strides = [1, 1]} : vector<16x32xf32> to vector<8x8xf32>
    %266 = vector.extract_strided_slice %263 {offsets = [0, 0], sizes = [8, 8], strides = [1, 1]} : vector<16x32xf32> to vector<8x8xf32>
    %cst_144 = arith.constant dense<0.000000e+00> : vector<8x8xf32>
    %267 = tpu.matmul %264, %265, %cst_144 {dimension_numbers = #tpu.dot_dimension_numbers<[1], [1], [0], [0], [0, 0, 1, 0], [], []>} : vector<8x8xf32>, vector<8x8xf32>, vector<8x8xf32> -> vector<8x8xf32>
    %cst_145 = arith.constant 0.353553385 : f32
    %268 = vector.broadcast %cst_145 : f32 to vector<8x8xf32>
    %269 = arith.mulf %267, %268 : vector<8x8xf32>
    %270 = arith.addf %269, %1 : vector<8x8xf32>
    %cst_146 = arith.constant dense<0xFF800000> : vector<8xf32>
    %271 = vector.multi_reduction <maximumf>, %270, %cst_146 [1] : vector<8x8xf32> to vector<8xf32>
    %272 = vector.shape_cast %271 : vector<8xf32> to vector<8x1xf32>
    %273 = vector.broadcast %272 : vector<8x1xf32> to vector<8x8xf32>
    %274 = arith.subf %270, %273 : vector<8x8xf32>
    %275 = math.exp %274 : vector<8x8xf32>
    %cst_147 = arith.constant dense<0.000000e+00> : vector<8xf32>
    %276 = vector.multi_reduction <add>, %275, %cst_147 [1] : vector<8x8xf32> to vector<8xf32>
    %277 = vector.shape_cast %276 : vector<8xf32> to vector<8x1xf32>
    %278 = vector.broadcast %277 : vector<8x1xf32> to vector<8x8xf32>
    %279 = arith.divf %275, %278 : vector<8x8xf32>
    %cst_148 = arith.constant dense<0.000000e+00> : vector<8x8xf32>
    %280 = tpu.matmul %279, %266, %cst_148 {dimension_numbers = #tpu.dot_dimension_numbers<[1], [0], [0], [1], [0, 0, 1, 1], [], []>} : vector<8x8xf32>, vector<8x8xf32>, vector<8x8xf32> -> vector<8x8xf32>
    %c0_149 = arith.constant 0 : index
    %c0_150 = arith.constant 0 : index
    %281 = vector.load %arg18[%c0_149, %c0_150] : memref<16x32xf32, #tpu.memory_space<vmem>>, vector<8x8xf32>
    tpu.vector_store %arg18[%c0_149, %c0_150], %280 {strides = array<i32>} : memref<16x32xf32, #tpu.memory_space<vmem>>, vector<8x8xf32>,
    %282 = vector.extract_strided_slice %261 {offsets = [0, 8], sizes = [8, 8], strides = [1, 1]} : vector<16x32xf32> to vector<8x8xf32>
    %283 = vector.extract_strided_slice %262 {offsets = [0, 8], sizes = [8, 8], strides = [1, 1]} : vector<16x32xf32> to vector<8x8xf32>
    %284 = vector.extract_strided_slice %263 {offsets = [0, 8], sizes = [8, 8], strides = [1, 1]} : vector<16x32xf32> to vector<8x8xf32>
    %cst_151 = arith.constant dense<0.000000e+00> : vector<8x8xf32>
    %285 = tpu.matmul %282, %283, %cst_151 {dimension_numbers = #tpu.dot_dimension_numbers<[1], [1], [0], [0], [0, 0, 1, 0], [], []>} : vector<8x8xf32>, vector<8x8xf32>, vector<8x8xf32> -> vector<8x8xf32>
    %cst_152 = arith.constant 0.353553385 : f32
    %286 = vector.broadcast %cst_152 : f32 to vector<8x8xf32>
    %287 = arith.mulf %285, %286 : vector<8x8xf32>
    %288 = arith.addf %287, %1 : vector<8x8xf32>
    %cst_153 = arith.constant dense<0xFF800000> : vector<8xf32>
    %289 = vector.multi_reduction <maximumf>, %288, %cst_153 [1] : vector<8x8xf32> to vector<8xf32>
    %290 = vector.shape_cast %289 : vector<8xf32> to vector<8x1xf32>
    %291 = vector.broadcast %290 : vector<8x1xf32> to vector<8x8xf32>
    %292 = arith.subf %288, %291 : vector<8x8xf32>
    %293 = math.exp %292 : vector<8x8xf32>
    %cst_154 = arith.constant dense<0.000000e+00> : vector<8xf32>
    %294 = vector.multi_reduction <add>, %293, %cst_154 [1] : vector<8x8xf32> to vector<8xf32>
    %295 = vector.shape_cast %294 : vector<8xf32> to vector<8x1xf32>
    %296 = vector.broadcast %295 : vector<8x1xf32> to vector<8x8xf32>
    %297 = arith.divf %293, %296 : vector<8x8xf32>
    %cst_155 = arith.constant dense<0.000000e+00> : vector<8x8xf32>
    %298 = tpu.matmul %297, %284, %cst_155 {dimension_numbers = #tpu.dot_dimension_numbers<[1], [0], [0], [1], [0, 0, 1, 1], [], []>} : vector<8x8xf32>, vector<8x8xf32>, vector<8x8xf32> -> vector<8x8xf32>
    %c0_156 = arith.constant 0 : index
    %c8_157 = arith.constant 8 : index
    %299 = vector.load %arg18[%c0_156, %c8_157] : memref<16x32xf32, #tpu.memory_space<vmem>>, vector<8x8xf32>
    tpu.vector_store %arg18[%c0_156, %c8_157], %298 {strides = array<i32>} : memref<16x32xf32, #tpu.memory_space<vmem>>, vector<8x8xf32>,
    %300 = vector.extract_strided_slice %261 {offsets = [0, 16], sizes = [8, 8], strides = [1, 1]} : vector<16x32xf32> to vector<8x8xf32>
    %301 = vector.extract_strided_slice %262 {offsets = [0, 16], sizes = [8, 8], strides = [1, 1]} : vector<16x32xf32> to vector<8x8xf32>
    %302 = vector.extract_strided_slice %263 {offsets = [0, 16], sizes = [8, 8], strides = [1, 1]} : vector<16x32xf32> to vector<8x8xf32>
    %cst_158 = arith.constant dense<0.000000e+00> : vector<8x8xf32>
    %303 = tpu.matmul %300, %301, %cst_158 {dimension_numbers = #tpu.dot_dimension_numbers<[1], [1], [0], [0], [0, 0, 1, 0], [], []>} : vector<8x8xf32>, vector<8x8xf32>, vector<8x8xf32> -> vector<8x8xf32>
    %cst_159 = arith.constant 0.353553385 : f32
    %304 = vector.broadcast %cst_159 : f32 to vector<8x8xf32>
    %305 = arith.mulf %303, %304 : vector<8x8xf32>
    %306 = arith.addf %305, %1 : vector<8x8xf32>
    %cst_160 = arith.constant dense<0xFF800000> : vector<8xf32>
    %307 = vector.multi_reduction <maximumf>, %306, %cst_160 [1] : vector<8x8xf32> to vector<8xf32>
    %308 = vector.shape_cast %307 : vector<8xf32> to vector<8x1xf32>
    %309 = vector.broadcast %308 : vector<8x1xf32> to vector<8x8xf32>
    %310 = arith.subf %306, %309 : vector<8x8xf32>
    %311 = math.exp %310 : vector<8x8xf32>
    %cst_161 = arith.constant dense<0.000000e+00> : vector<8xf32>
    %312 = vector.multi_reduction <add>, %311, %cst_161 [1] : vector<8x8xf32> to vector<8xf32>
    %313 = vector.shape_cast %312 : vector<8xf32> to vector<8x1xf32>
    %314 = vector.broadcast %313 : vector<8x1xf32> to vector<8x8xf32>
    %315 = arith.divf %311, %314 : vector<8x8xf32>
    %cst_162 = arith.constant dense<0.000000e+00> : vector<8x8xf32>
    %316 = tpu.matmul %315, %302, %cst_162 {dimension_numbers = #tpu.dot_dimension_numbers<[1], [0], [0], [1], [0, 0, 1, 1], [], []>} : vector<8x8xf32>, vector<8x8xf32>, vector<8x8xf32> -> vector<8x8xf32>
    %c0_163 = arith.constant 0 : index
    %c16_164 = arith.constant 16 : index
    %317 = vector.load %arg18[%c0_163, %c16_164] : memref<16x32xf32, #tpu.memory_space<vmem>>, vector<8x8xf32>
    tpu.vector_store %arg18[%c0_163, %c16_164], %316 {strides = array<i32>} : memref<16x32xf32, #tpu.memory_space<vmem>>, vector<8x8xf32>,
    %318 = vector.extract_strided_slice %261 {offsets = [0, 24], sizes = [8, 8], strides = [1, 1]} : vector<16x32xf32> to vector<8x8xf32>
    %319 = vector.extract_strided_slice %262 {offsets = [0, 24], sizes = [8, 8], strides = [1, 1]} : vector<16x32xf32> to vector<8x8xf32>
    %320 = vector.extract_strided_slice %263 {offsets = [0, 24], sizes = [8, 8], strides = [1, 1]} : vector<16x32xf32> to vector<8x8xf32>
    %cst_165 = arith.constant dense<0.000000e+00> : vector<8x8xf32>
    %321 = tpu.matmul %318, %319, %cst_165 {dimension_numbers = #tpu.dot_dimension_numbers<[1], [1], [0], [0], [0, 0, 1, 0], [], []>} : vector<8x8xf32>, vector<8x8xf32>, vector<8x8xf32> -> vector<8x8xf32>
    %cst_166 = arith.constant 0.353553385 : f32
    %322 = vector.broadcast %cst_166 : f32 to vector<8x8xf32>
    %323 = arith.mulf %321, %322 : vector<8x8xf32>
    %324 = arith.addf %323, %1 : vector<8x8xf32>
    %cst_167 = arith.constant dense<0xFF800000> : vector<8xf32>
    %325 = vector.multi_reduction <maximumf>, %324, %cst_167 [1] : vector<8x8xf32> to vector<8xf32>
    %326 = vector.shape_cast %325 : vector<8xf32> to vector<8x1xf32>
    %327 = vector.broadcast %326 : vector<8x1xf32> to vector<8x8xf32>
    %328 = arith.subf %324, %327 : vector<8x8xf32>
    %329 = math.exp %328 : vector<8x8xf32>
    %cst_168 = arith.constant dense<0.000000e+00> : vector<8xf32>
    %330 = vector.multi_reduction <add>, %329, %cst_168 [1] : vector<8x8xf32> to vector<8xf32>
    %331 = vector.shape_cast %330 : vector<8xf32> to vector<8x1xf32>
    %332 = vector.broadcast %331 : vector<8x1xf32> to vector<8x8xf32>
    %333 = arith.divf %329, %332 : vector<8x8xf32>
    %cst_169 = arith.constant dense<0.000000e+00> : vector<8x8xf32>
    %334 = tpu.matmul %333, %320, %cst_169 {dimension_numbers = #tpu.dot_dimension_numbers<[1], [0], [0], [1], [0, 0, 1, 1], [], []>} : vector<8x8xf32>, vector<8x8xf32>, vector<8x8xf32> -> vector<8x8xf32>
    %c0_170 = arith.constant 0 : index
    %c24_171 = arith.constant 24 : index
    %335 = vector.load %arg18[%c0_170, %c24_171] : memref<16x32xf32, #tpu.memory_space<vmem>>, vector<8x8xf32>
    tpu.vector_store %arg18[%c0_170, %c24_171], %334 {strides = array<i32>} : memref<16x32xf32, #tpu.memory_space<vmem>>, vector<8x8xf32>,
    %336 = vector.extract_strided_slice %261 {offsets = [8, 0], sizes = [8, 8], strides = [1, 1]} : vector<16x32xf32> to vector<8x8xf32>
    %337 = vector.extract_strided_slice %262 {offsets = [8, 0], sizes = [8, 8], strides = [1, 1]} : vector<16x32xf32> to vector<8x8xf32>
    %338 = vector.extract_strided_slice %263 {offsets = [8, 0], sizes = [8, 8], strides = [1, 1]} : vector<16x32xf32> to vector<8x8xf32>
    %cst_172 = arith.constant dense<0.000000e+00> : vector<8x8xf32>
    %339 = tpu.matmul %336, %337, %cst_172 {dimension_numbers = #tpu.dot_dimension_numbers<[1], [1], [0], [0], [0, 0, 1, 0], [], []>} : vector<8x8xf32>, vector<8x8xf32>, vector<8x8xf32> -> vector<8x8xf32>
    %cst_173 = arith.constant 0.353553385 : f32
    %340 = vector.broadcast %cst_173 : f32 to vector<8x8xf32>
    %341 = arith.mulf %339, %340 : vector<8x8xf32>
    %342 = arith.addf %341, %1 : vector<8x8xf32>
    %cst_174 = arith.constant dense<0xFF800000> : vector<8xf32>
    %343 = vector.multi_reduction <maximumf>, %342, %cst_174 [1] : vector<8x8xf32> to vector<8xf32>
    %344 = vector.shape_cast %343 : vector<8xf32> to vector<8x1xf32>
    %345 = vector.broadcast %344 : vector<8x1xf32> to vector<8x8xf32>
    %346 = arith.subf %342, %345 : vector<8x8xf32>
    %347 = math.exp %346 : vector<8x8xf32>
    %cst_175 = arith.constant dense<0.000000e+00> : vector<8xf32>
    %348 = vector.multi_reduction <add>, %347, %cst_175 [1] : vector<8x8xf32> to vector<8xf32>
    %349 = vector.shape_cast %348 : vector<8xf32> to vector<8x1xf32>
    %350 = vector.broadcast %349 : vector<8x1xf32> to vector<8x8xf32>
    %351 = arith.divf %347, %350 : vector<8x8xf32>
    %cst_176 = arith.constant dense<0.000000e+00> : vector<8x8xf32>
    %352 = tpu.matmul %351, %338, %cst_176 {dimension_numbers = #tpu.dot_dimension_numbers<[1], [0], [0], [1], [0, 0, 1, 1], [], []>} : vector<8x8xf32>, vector<8x8xf32>, vector<8x8xf32> -> vector<8x8xf32>
    %c8_177 = arith.constant 8 : index
    %c0_178 = arith.constant 0 : index
    %353 = vector.load %arg18[%c8_177, %c0_178] : memref<16x32xf32, #tpu.memory_space<vmem>>, vector<8x8xf32>
    tpu.vector_store %arg18[%c8_177, %c0_178], %352 {strides = array<i32>} : memref<16x32xf32, #tpu.memory_space<vmem>>, vector<8x8xf32>,
    %354 = vector.extract_strided_slice %261 {offsets = [8, 8], sizes = [8, 8], strides = [1, 1]} : vector<16x32xf32> to vector<8x8xf32>
    %355 = vector.extract_strided_slice %262 {offsets = [8, 8], sizes = [8, 8], strides = [1, 1]} : vector<16x32xf32> to vector<8x8xf32>
    %356 = vector.extract_strided_slice %263 {offsets = [8, 8], sizes = [8, 8], strides = [1, 1]} : vector<16x32xf32> to vector<8x8xf32>
    %cst_179 = arith.constant dense<0.000000e+00> : vector<8x8xf32>
    %357 = tpu.matmul %354, %355, %cst_179 {dimension_numbers = #tpu.dot_dimension_numbers<[1], [1], [0], [0], [0, 0, 1, 0], [], []>} : vector<8x8xf32>, vector<8x8xf32>, vector<8x8xf32> -> vector<8x8xf32>
    %cst_180 = arith.constant 0.353553385 : f32
    %358 = vector.broadcast %cst_180 : f32 to vector<8x8xf32>
    %359 = arith.mulf %357, %358 : vector<8x8xf32>
    %360 = arith.addf %359, %1 : vector<8x8xf32>
    %cst_181 = arith.constant dense<0xFF800000> : vector<8xf32>
    %361 = vector.multi_reduction <maximumf>, %360, %cst_181 [1] : vector<8x8xf32> to vector<8xf32>
    %362 = vector.shape_cast %361 : vector<8xf32> to vector<8x1xf32>
    %363 = vector.broadcast %362 : vector<8x1xf32> to vector<8x8xf32>
    %364 = arith.subf %360, %363 : vector<8x8xf32>
    %365 = math.exp %364 : vector<8x8xf32>
    %cst_182 = arith.constant dense<0.000000e+00> : vector<8xf32>
    %366 = vector.multi_reduction <add>, %365, %cst_182 [1] : vector<8x8xf32> to vector<8xf32>
    %367 = vector.shape_cast %366 : vector<8xf32> to vector<8x1xf32>
    %368 = vector.broadcast %367 : vector<8x1xf32> to vector<8x8xf32>
    %369 = arith.divf %365, %368 : vector<8x8xf32>
    %cst_183 = arith.constant dense<0.000000e+00> : vector<8x8xf32>
    %370 = tpu.matmul %369, %356, %cst_183 {dimension_numbers = #tpu.dot_dimension_numbers<[1], [0], [0], [1], [0, 0, 1, 1], [], []>} : vector<8x8xf32>, vector<8x8xf32>, vector<8x8xf32> -> vector<8x8xf32>
    %c8_184 = arith.constant 8 : index
    %c8_185 = arith.constant 8 : index
    %371 = vector.load %arg18[%c8_184, %c8_185] : memref<16x32xf32, #tpu.memory_space<vmem>>, vector<8x8xf32>
    tpu.vector_store %arg18[%c8_184, %c8_185], %370 {strides = array<i32>} : memref<16x32xf32, #tpu.memory_space<vmem>>, vector<8x8xf32>,
    %372 = vector.extract_strided_slice %261 {offsets = [8, 16], sizes = [8, 8], strides = [1, 1]} : vector<16x32xf32> to vector<8x8xf32>
    %373 = vector.extract_strided_slice %262 {offsets = [8, 16], sizes = [8, 8], strides = [1, 1]} : vector<16x32xf32> to vector<8x8xf32>
    %374 = vector.extract_strided_slice %263 {offsets = [8, 16], sizes = [8, 8], strides = [1, 1]} : vector<16x32xf32> to vector<8x8xf32>
    %cst_186 = arith.constant dense<0.000000e+00> : vector<8x8xf32>
    %375 = tpu.matmul %372, %373, %cst_186 {dimension_numbers = #tpu.dot_dimension_numbers<[1], [1], [0], [0], [0, 0, 1, 0], [], []>} : vector<8x8xf32>, vector<8x8xf32>, vector<8x8xf32> -> vector<8x8xf32>
    %cst_187 = arith.constant 0.353553385 : f32
    %376 = vector.broadcast %cst_187 : f32 to vector<8x8xf32>
    %377 = arith.mulf %375, %376 : vector<8x8xf32>
    %378 = arith.addf %377, %1 : vector<8x8xf32>
    %cst_188 = arith.constant dense<0xFF800000> : vector<8xf32>
    %379 = vector.multi_reduction <maximumf>, %378, %cst_188 [1] : vector<8x8xf32> to vector<8xf32>
    %380 = vector.shape_cast %379 : vector<8xf32> to vector<8x1xf32>
    %381 = vector.broadcast %380 : vector<8x1xf32> to vector<8x8xf32>
    %382 = arith.subf %378, %381 : vector<8x8xf32>
    %383 = math.exp %382 : vector<8x8xf32>
    %cst_189 = arith.constant dense<0.000000e+00> : vector<8xf32>
    %384 = vector.multi_reduction <add>, %383, %cst_189 [1] : vector<8x8xf32> to vector<8xf32>
    %385 = vector.shape_cast %384 : vector<8xf32> to vector<8x1xf32>
    %386 = vector.broadcast %385 : vector<8x1xf32> to vector<8x8xf32>
    %387 = arith.divf %383, %386 : vector<8x8xf32>
    %cst_190 = arith.constant dense<0.000000e+00> : vector<8x8xf32>
    %388 = tpu.matmul %387, %374, %cst_190 {dimension_numbers = #tpu.dot_dimension_numbers<[1], [0], [0], [1], [0, 0, 1, 1], [], []>} : vector<8x8xf32>, vector<8x8xf32>, vector<8x8xf32> -> vector<8x8xf32>
    %c8_191 = arith.constant 8 : index
    %c16_192 = arith.constant 16 : index
    %389 = vector.load %arg18[%c8_191, %c16_192] : memref<16x32xf32, #tpu.memory_space<vmem>>, vector<8x8xf32>
    tpu.vector_store %arg18[%c8_191, %c16_192], %388 {strides = array<i32>} : memref<16x32xf32, #tpu.memory_space<vmem>>, vector<8x8xf32>,
    %390 = vector.extract_strided_slice %261 {offsets = [8, 24], sizes = [8, 8], strides = [1, 1]} : vector<16x32xf32> to vector<8x8xf32>
    %391 = vector.extract_strided_slice %262 {offsets = [8, 24], sizes = [8, 8], strides = [1, 1]} : vector<16x32xf32> to vector<8x8xf32>
    %392 = vector.extract_strided_slice %263 {offsets = [8, 24], sizes = [8, 8], strides = [1, 1]} : vector<16x32xf32> to vector<8x8xf32>
    %cst_193 = arith.constant dense<0.000000e+00> : vector<8x8xf32>
    %393 = tpu.matmul %390, %391, %cst_193 {dimension_numbers = #tpu.dot_dimension_numbers<[1], [1], [0], [0], [0, 0, 1, 0], [], []>} : vector<8x8xf32>, vector<8x8xf32>, vector<8x8xf32> -> vector<8x8xf32>
    %cst_194 = arith.constant 0.353553385 : f32
    %394 = vector.broadcast %cst_194 : f32 to vector<8x8xf32>
    %395 = arith.mulf %393, %394 : vector<8x8xf32>
    %396 = arith.addf %395, %1 : vector<8x8xf32>
    %cst_195 = arith.constant dense<0xFF800000> : vector<8xf32>
    %397 = vector.multi_reduction <maximumf>, %396, %cst_195 [1] : vector<8x8xf32> to vector<8xf32>
    %398 = vector.shape_cast %397 : vector<8xf32> to vector<8x1xf32>
    %399 = vector.broadcast %398 : vector<8x1xf32> to vector<8x8xf32>
    %400 = arith.subf %396, %399 : vector<8x8xf32>
    %401 = math.exp %400 : vector<8x8xf32>
    %cst_196 = arith.constant dense<0.000000e+00> : vector<8xf32>
    %402 = vector.multi_reduction <add>, %401, %cst_196 [1] : vector<8x8xf32> to vector<8xf32>
    %403 = vector.shape_cast %402 : vector<8xf32> to vector<8x1xf32>
    %404 = vector.broadcast %403 : vector<8x1xf32> to vector<8x8xf32>
    %405 = arith.divf %401, %404 : vector<8x8xf32>
    %cst_197 = arith.constant dense<0.000000e+00> : vector<8x8xf32>
    %406 = tpu.matmul %405, %392, %cst_197 {dimension_numbers = #tpu.dot_dimension_numbers<[1], [0], [0], [1], [0, 0, 1, 1], [], []>} : vector<8x8xf32>, vector<8x8xf32>, vector<8x8xf32> -> vector<8x8xf32>
    %c8_198 = arith.constant 8 : index
    %c24_199 = arith.constant 24 : index
    %407 = vector.load %arg18[%c8_198, %c24_199] : memref<16x32xf32, #tpu.memory_space<vmem>>, vector<8x8xf32>
    tpu.vector_store %arg18[%c8_198, %c24_199], %406 {strides = array<i32>} : memref<16x32xf32, #tpu.memory_space<vmem>>, vector<8x8xf32>,
    %c0_200 = arith.constant 0 : index
    %c0_201 = arith.constant 0 : index
    %408 = vector.load %arg18[%c0_200, %c0_201] : memref<16x32xf32, #tpu.memory_space<vmem>>, vector<16x32xf32>
    %cst_202 = arith.constant dense<0.000000e+00> : vector<16x32xf32>
    %409 = tpu.matmul %408, %239, %cst_202 {dimension_numbers = #tpu.dot_dimension_numbers<[1], [0], [0], [1], [0, 0, 1, 1], [], []>} : vector<16x32xf32>, vector<32x32xf32>, vector<16x32xf32> -> vector<16x32xf32>
    %410 = vector.broadcast %241 : vector<1x32xf32> to vector<16x32xf32>
    %411 = arith.addf %409, %410 : vector<16x32xf32>
    %412 = arith.addf %233, %411 : vector<16x32xf32>
    %cst_203 = arith.constant dense<0.000000e+00> : vector<16xf32>
    %413 = vector.multi_reduction <add>, %412, %cst_203 [1] : vector<16x32xf32> to vector<16xf32>
    %414 = vector.shape_cast %413 : vector<16xf32> to vector<16x1xf32>
    %cst_204 = arith.constant 3.200000e+01 : f32
    %415 = vector.broadcast %cst_204 : f32 to vector<16x1xf32>
    %416 = arith.divf %414, %415 : vector<16x1xf32>
    %417 = vector.broadcast %416 : vector<16x1xf32> to vector<16x32xf32>
    %418 = arith.subf %412, %417 : vector<16x32xf32>
    %419 = arith.mulf %418, %418 : vector<16x32xf32>
    %cst_205 = arith.constant dense<0.000000e+00> : vector<16xf32>
    %420 = vector.multi_reduction <add>, %419, %cst_205 [1] : vector<16x32xf32> to vector<16xf32>
    %421 = vector.shape_cast %420 : vector<16xf32> to vector<16x1xf32>
    %cst_206 = arith.constant 3.200000e+01 : f32
    %422 = vector.broadcast %cst_206 : f32 to vector<16x1xf32>
    %423 = arith.divf %421, %422 : vector<16x1xf32>
    %424 = vector.broadcast %416 : vector<16x1xf32> to vector<16x32xf32>
    %425 = arith.subf %412, %424 : vector<16x32xf32>
    %cst_207 = arith.constant 9.99999974E-6 : f32
    %426 = vector.broadcast %cst_207 : f32 to vector<16x1xf32>
    %427 = arith.addf %423, %426 : vector<16x1xf32>
    %428 = math.rsqrt %427 : vector<16x1xf32>
    %429 = vector.broadcast %428 : vector<16x1xf32> to vector<16x32xf32>
    %430 = arith.mulf %425, %429 : vector<16x32xf32>
    %431 = vector.broadcast %251 : vector<1x32xf32> to vector<16x32xf32>
    %432 = arith.mulf %430, %431 : vector<16x32xf32>
    %433 = vector.broadcast %253 : vector<1x32xf32> to vector<16x32xf32>
    %434 = arith.addf %432, %433 : vector<16x32xf32>
    %cst_208 = arith.constant dense<0.000000e+00> : vector<16x64xf32>
    %435 = tpu.matmul %434, %243, %cst_208 {dimension_numbers = #tpu.dot_dimension_numbers<[1], [0], [0], [1], [0, 0, 1, 1], [], []>} : vector<16x32xf32>, vector<32x64xf32>, vector<16x64xf32> -> vector<16x64xf32>
    %436 = vector.broadcast %245 : vector<1x64xf32> to vector<16x64xf32>
    %437 = arith.addf %435, %436 : vector<16x64xf32>
    %cst_209 = arith.constant 0.000000e+00 : f32
    %438 = vector.broadcast %cst_209 : f32 to vector<16x64xf32>
    %439 = arith.maximumf %437, %438 : vector<16x64xf32>
    %cst_210 = arith.constant dense<0.000000e+00> : vector<16x32xf32>
    %440 = tpu.matmul %439, %247, %cst_210 {dimension_numbers = #tpu.dot_dimension_numbers<[1], [0], [0], [1], [0, 0, 1, 1], [], []>} : vector<16x64xf32>, vector<64x32xf32>, vector<16x32xf32> -> vector<16x32xf32>
    %441 = vector.broadcast %249 : vector<1x32xf32> to vector<16x32xf32>
    %442 = arith.addf %440, %441 : vector<16x32xf32>
    %443 = arith.addf %434, %442 : vector<16x32xf32>
    %cst_211 = arith.constant dense<0.000000e+00> : vector<16xf32>
    %444 = vector.multi_reduction <add>, %443, %cst_211 [1] : vector<16x32xf32> to vector<16xf32>
    %445 = vector.shape_cast %444 : vector<16xf32> to vector<16x1xf32>
    %cst_212 = arith.constant 3.200000e+01 : f32
    %446 = vector.broadcast %cst_212 : f32 to vector<16x1xf32>
    %447 = arith.divf %445, %446 : vector<16x1xf32>
    %448 = vector.broadcast %447 : vector<16x1xf32> to vector<16x32xf32>
    %449 = arith.subf %443, %448 : vector<16x32xf32>
    %450 = arith.mulf %449, %449 : vector<16x32xf32>
    %cst_213 = arith.constant dense<0.000000e+00> : vector<16xf32>
    %451 = vector.multi_reduction <add>, %450, %cst_213 [1] : vector<16x32xf32> to vector<16xf32>
    %452 = vector.shape_cast %451 : vector<16xf32> to vector<16x1xf32>
    %cst_214 = arith.constant 3.200000e+01 : f32
    %453 = vector.broadcast %cst_214 : f32 to vector<16x1xf32>
    %454 = arith.divf %452, %453 : vector<16x1xf32>
    %455 = vector.broadcast %447 : vector<16x1xf32> to vector<16x32xf32>
    %456 = arith.subf %443, %455 : vector<16x32xf32>
    %cst_215 = arith.constant 9.99999974E-6 : f32
    %457 = vector.broadcast %cst_215 : f32 to vector<16x1xf32>
    %458 = arith.addf %454, %457 : vector<16x1xf32>
    %459 = math.rsqrt %458 : vector<16x1xf32>
    %460 = vector.broadcast %459 : vector<16x1xf32> to vector<16x32xf32>
    %461 = arith.mulf %456, %460 : vector<16x32xf32>
    %462 = vector.broadcast %255 : vector<1x32xf32> to vector<16x32xf32>
    %463 = arith.mulf %461, %462 : vector<16x32xf32>
    %464 = vector.broadcast %257 : vector<1x32xf32> to vector<16x32xf32>
    %465 = arith.addf %463, %464 : vector<16x32xf32>
    %c0_216 = arith.constant 0 : index
    %c0_217 = arith.constant 0 : index
    %466 = vector.load %arg15[%c0_216, %c0_217] : memref<32x128xf32, #tpu.memory_space<vmem>>, vector<32x128xf32>
    %cst_218 = arith.constant dense<0.000000e+00> : vector<16x128xf32>
    %467 = tpu.matmul %465, %466, %cst_218 {dimension_numbers = #tpu.dot_dimension_numbers<[1], [0], [0], [1], [0, 0, 1, 1], [], []>} : vector<16x32xf32>, vector<32x128xf32>, vector<16x128xf32> -> vector<16x128xf32>
    %c0_219 = arith.constant 0 : index
    %c0_220 = arith.constant 0 : index
    %468 = vector.load %arg16[%c0_219, %c0_220] : memref<1x128xf32, #tpu.memory_space<vmem>>, vector<1x128xf32>
    %469 = vector.broadcast %468 : vector<1x128xf32> to vector<16x128xf32>
    %470 = arith.addf %467, %469 : vector<16x128xf32>
    %c0_221 = arith.constant 0 : index
    %c0_222 = arith.constant 0 : index
    %471 = vector.load %arg17[%c0_221, %c0_222] : memref<16x128xf32, #tpu.memory_space<vmem>>, vector<16x128xf32>
    tpu.vector_store %arg17[%c0_221, %c0_222], %470 {strides = array<i32>} : memref<16x128xf32, #tpu.memory_space<vmem>>, vector<16x128xf32>,
    return
  }
  func.func @transform_0(%arg0: i32) -> (i32, i32) {
    %c0_i32 = arith.constant 0 : i32
    %c0_i32_0 = arith.constant 0 : i32
    %c0_i32_1 = arith.constant 0 : i32
    return %c0_i32, %c0_i32_0 : i32, i32
  }
  func.func @transform_1(%arg0: i32) -> (i32, i32) {
    %c0_i32 = arith.constant 0 : i32
    %c0_i32_0 = arith.constant 0 : i32
    %c0_i32_1 = arith.constant 0 : i32
    return %c0_i32, %c0_i32_0 : i32, i32
  }
  func.func @transform_2(%arg0: i32) -> (i32, i32, i32) {
    %c0_i32 = arith.constant 0 : i32
    %c0_i32_0 = arith.constant 0 : i32
    %c0_i32_1 = arith.constant 0 : i32
    %c0_i32_2 = arith.constant 0 : i32
    return %c0_i32, %c0_i32_0, %c0_i32_1 : i32, i32, i32
  }
  func.func @transform_3(%arg0: i32) -> (i32, i32, i32) {
    %c0_i32 = arith.constant 0 : i32
    %c0_i32_0 = arith.constant 0 : i32
    %c0_i32_1 = arith.constant 0 : i32
    %c0_i32_2 = arith.constant 0 : i32
    return %c0_i32, %c0_i32_0, %c0_i32_1 : i32, i32, i32
  }
  func.func @transform_4(%arg0: i32) -> (i32, i32, i32) {
    %c0_i32 = arith.constant 0 : i32
    %c0_i32_0 = arith.constant 0 : i32
    %c0_i32_1 = arith.constant 0 : i32
    %c0_i32_2 = arith.constant 0 : i32
    return %c0_i32, %c0_i32_0, %c0_i32_1 : i32, i32, i32
  }
  func.func @transform_5(%arg0: i32) -> (i32, i32, i32) {
    %c0_i32 = arith.constant 0 : i32
    %c0_i32_0 = arith.constant 0 : i32
    %c0_i32_1 = arith.constant 0 : i32
    %c0_i32_2 = arith.constant 0 : i32
    return %c0_i32, %c0_i32_0, %c0_i32_1 : i32, i32, i32
  }
  func.func @transform_6(%arg0: i32) -> (i32, i32, i32) {
    %c0_i32 = arith.constant 0 : i32
    %c0_i32_0 = arith.constant 0 : i32
    %c0_i32_1 = arith.constant 0 : i32
    %c0_i32_2 = arith.constant 0 : i32
    return %c0_i32, %c0_i32_0, %c0_i32_1 : i32, i32, i32
  }
  func.func @transform_7(%arg0: i32) -> (i32, i32, i32) {
    %c0_i32 = arith.constant 0 : i32
    %c0_i32_0 = arith.constant 0 : i32
    %c0_i32_1 = arith.constant 0 : i32
    %c0_i32_2 = arith.constant 0 : i32
    return %c0_i32, %c0_i32_0, %c0_i32_1 : i32, i32, i32
  }
  func.func @transform_8(%arg0: i32) -> (i32, i32, i32) {
    %c0_i32 = arith.constant 0 : i32
    %c0_i32_0 = arith.constant 0 : i32
    %c0_i32_1 = arith.constant 0 : i32
    %c0_i32_2 = arith.constant 0 : i32
    return %c0_i32, %c0_i32_0, %c0_i32_1 : i32, i32, i32
  }
  func.func @transform_9(%arg0: i32) -> (i32, i32, i32) {
    %c0_i32 = arith.constant 0 : i32
    %c0_i32_0 = arith.constant 0 : i32
    %c0_i32_1 = arith.constant 0 : i32
    %c0_i32_2 = arith.constant 0 : i32
    return %c0_i32, %c0_i32_0, %c0_i32_1 : i32, i32, i32
  }
  func.func @transform_10(%arg0: i32) -> (i32, i32, i32) {
    %c0_i32 = arith.constant 0 : i32
    %c0_i32_0 = arith.constant 0 : i32
    %c0_i32_1 = arith.constant 0 : i32
    %c0_i32_2 = arith.constant 0 : i32
    return %c0_i32, %c0_i32_0, %c0_i32_1 : i32, i32, i32
  }
  func.func @transform_11(%arg0: i32) -> (i32, i32, i32) {
    %c0_i32 = arith.constant 0 : i32
    %c0_i32_0 = arith.constant 0 : i32
    %c0_i32_1 = arith.constant 0 : i32
    %c0_i32_2 = arith.constant 0 : i32
    return %c0_i32, %c0_i32_0, %c0_i32_1 : i32, i32, i32
  }
  func.func @transform_12(%arg0: i32) -> (i32, i32, i32) {
    %c0_i32 = arith.constant 0 : i32
    %c0_i32_0 = arith.constant 0 : i32
    %c0_i32_1 = arith.constant 0 : i32
    %c0_i32_2 = arith.constant 0 : i32
    return %c0_i32, %c0_i32_0, %c0_i32_1 : i32, i32, i32
  }
  func.func @transform_13(%arg0: i32) -> (i32, i32, i32) {
    %c0_i32 = arith.constant 0 : i32
    %c0_i32_0 = arith.constant 0 : i32
    %c0_i32_1 = arith.constant 0 : i32
    %c0_i32_2 = arith.constant 0 : i32
    return %c0_i32, %c0_i32_0, %c0_i32_1 : i32, i32, i32
  }
  func.func @transform_14(%arg0: i32) -> (i32, i32) {
    %c0_i32 = arith.constant 0 : i32
    %c0_i32_0 = arith.constant 0 : i32
    %c0_i32_1 = arith.constant 0 : i32
    return %c0_i32, %c0_i32_0 : i32, i32
  }
  func.func @transform_15(%arg0: i32) -> (i32, i32) {
    %c0_i32 = arith.constant 0 : i32
    %c0_i32_0 = arith.constant 0 : i32
    %c0_i32_1 = arith.constant 0 : i32
    return %c0_i32, %c0_i32_0 : i32, i32
  }
  func.func @transform_16(%arg0: i32) -> (i32, i32) {
    %c0_i32 = arith.constant 0 : i32
    %c0_i32_0 = arith.constant 0 : i32
    %c0_i32_1 = arith.constant 0 : i32
    return %c0_i32, %c0_i32_0 : i32, i32
  }
}

</mosaic_0001>

<llo_original>
// kernel: transformer_forward.1
$region0: #{transformer_forward.1}
  #allocation0 [shape = 'u32[]', space=smem, size = 0x4, offset = 0x4, fixed_abs, tag = 'smem constant byte address 0x4 - core index']
  #allocation1 [shape = 'u32[144,128]{1,0:T(1,128)}', space=vmem, size = 0x12000, scoped, tag = 'internal scratch']
  #allocation2 [shape = 'f32[16,32]{1,0:T(8,128)}', space=vmem, size = 0x2000, scoped, tag = 'scratch operand']
  %s0 = inlined_call_operand.vmem [shape: f32[16,32], index: 0, kind: input, shape index: {}]
  %s1 = inlined_call_operand.vmem [shape: f32[8,8], index: 1, kind: input, shape index: {}]
  %s2 = inlined_call_operand.vmem [shape: f32[2,32,96], index: 2, kind: input, shape index: {}]
  %s3 = inlined_call_operand.vmem [shape: f32[2,1,96], index: 3, kind: input, shape index: {}]
  %s4 = inlined_call_operand.vmem [shape: f32[2,32,32], index: 4, kind: input, shape index: {}]
  %s5 = inlined_call_operand.vmem [shape: f32[2,1,32], index: 5, kind: input, shape index: {}]
  %s6 = inlined_call_operand.vmem [shape: f32[2,32,64], index: 6, kind: input, shape index: {}]
  %s7 = inlined_call_operand.vmem [shape: f32[2,1,64], index: 7, kind: input, shape index: {}]
  %s8 = inlined_call_operand.vmem [shape: f32[2,64,32], index: 8, kind: input, shape index: {}]
  %s9 = inlined_call_operand.vmem [shape: f32[2,1,32], index: 9, kind: input, shape index: {}]
  %s10 = inlined_call_operand.vmem [shape: f32[2,1,32], index: 10, kind: input, shape index: {}]
  %s11 = inlined_call_operand.vmem [shape: f32[2,1,32], index: 11, kind: input, shape index: {}]
  %s12 = inlined_call_operand.vmem [shape: f32[2,1,32], index: 12, kind: input, shape index: {}]
  %s13 = inlined_call_operand.vmem [shape: f32[2,1,32], index: 13, kind: input, shape index: {}]
  %s14 = inlined_call_operand.vmem [shape: f32[32,128], index: 14, kind: input, shape index: {}]
  %s15 = inlined_call_operand.vmem [shape: f32[1,128], index: 15, kind: input, shape index: {}]
  %s16 = inlined_call_operand.vmem [shape: f32[16,128], index: 16, kind: output, shape index: {}]
  %s17 = sld [smem:[#allocation0]]
  $region74: #{transformer_forward.1} parent=0
    _
  %s19 = ssub.s32 1, %s17
  %s20 = scalar_select 0, %s19, %s17
  // Predicated region
  $region2: #{transformer_forward.1} parent=0 // pred_check
    _
  $region3: #{transformer_forward.1} parent=0 // pred_check_branch
    %22 = sbr.rel (0) target = $region5
  $region4: #{transformer_forward.1} parent=0 // pred_region
    _
  $region5: #{transformer_forward.1} parent=0 // pred_fallthru
    _
  // Predicated region
  $region6: #{transformer_forward.1} parent=0 // pred_check
    _
  $region7: #{transformer_forward.1} parent=0 // pred_check_branch
    %24 = sbr.rel (0) target = $region9
  $region8: #{transformer_forward.1} parent=0 // pred_region
    _
  $region9: #{transformer_forward.1} parent=0 // pred_fallthru
    _
  // Predicated region
  $region10: #{transformer_forward.1} parent=0 // pred_check
    _
  $region11: #{transformer_forward.1} parent=0 // pred_check_branch
    %26 = sbr.rel (0) target = $region13
  $region12: #{transformer_forward.1} parent=0 // pred_region
    _
  $region13: #{transformer_forward.1} parent=0 // pred_fallthru
    _
  // Predicated region
  $region14: #{transformer_forward.1} parent=0 // pred_check
    _
  $region15: #{transformer_forward.1} parent=0 // pred_check_branch
    %28 = sbr.rel (0) target = $region17
  $region16: #{transformer_forward.1} parent=0 // pred_region
    _
  $region17: #{transformer_forward.1} parent=0 // pred_fallthru
    _
  // Predicated region
  $region18: #{transformer_forward.1} parent=0 // pred_check
    _
  $region19: #{transformer_forward.1} parent=0 // pred_check_branch
    %30 = sbr.rel (0) target = $region21
  $region20: #{transformer_forward.1} parent=0 // pred_region
    _
  $region21: #{transformer_forward.1} parent=0 // pred_fallthru
    _
  // Predicated region
  $region22: #{transformer_forward.1} parent=0 // pred_check
    _
  $region23: #{transformer_forward.1} parent=0 // pred_check_branch
    %32 = sbr.rel (0) target = $region25
  $region24: #{transformer_forward.1} parent=0 // pred_region
    _
  $region25: #{transformer_forward.1} parent=0 // pred_fallthru
    _
  // Predicated region
  $region26: #{transformer_forward.1} parent=0 // pred_check
    _
  $region27: #{transformer_forward.1} parent=0 // pred_check_branch
    %34 = sbr.rel (0) target = $region29
  $region28: #{transformer_forward.1} parent=0 // pred_region
    _
  $region29: #{transformer_forward.1} parent=0 // pred_fallthru
    _
  // Predicated region
  $region30: #{transformer_forward.1} parent=0 // pred_check
    _
  $region31: #{transformer_forward.1} parent=0 // pred_check_branch
    %36 = sbr.rel (0) target = $region33
  $region32: #{transformer_forward.1} parent=0 // pred_region
    _
  $region33: #{transformer_forward.1} parent=0 // pred_fallthru
    _
  // Predicated region
  $region34: #{transformer_forward.1} parent=0 // pred_check
    _
  $region35: #{transformer_forward.1} parent=0 // pred_check_branch
    %38 = sbr.rel (0) target = $region37
  $region36: #{transformer_forward.1} parent=0 // pred_region
    _
  $region37: #{transformer_forward.1} parent=0 // pred_fallthru
    _
  // Predicated region
  $region38: #{transformer_forward.1} parent=0 // pred_check
    _
  $region39: #{transformer_forward.1} parent=0 // pred_check_branch
    %40 = sbr.rel (0) target = $region41
  $region40: #{transformer_forward.1} parent=0 // pred_region
    _
  $region41: #{transformer_forward.1} parent=0 // pred_fallthru
    _
  // Predicated region
  $region42: #{transformer_forward.1} parent=0 // pred_check
    _
  $region43: #{transformer_forward.1} parent=0 // pred_check_branch
    %42 = sbr.rel (0) target = $region45
  $region44: #{transformer_forward.1} parent=0 // pred_region
    _
  $region45: #{transformer_forward.1} parent=0 // pred_fallthru
    _
  // Predicated region
  $region46: #{transformer_forward.1} parent=0 // pred_check
    _
  $region47: #{transformer_forward.1} parent=0 // pred_check_branch
    %44 = sbr.rel (0) target = $region49
  $region48: #{transformer_forward.1} parent=0 // pred_region
    _
  $region49: #{transformer_forward.1} parent=0 // pred_fallthru
    _
  // Predicated region
  $region50: #{transformer_forward.1} parent=0 // pred_check
    _
  $region51: #{transformer_forward.1} parent=0 // pred_check_branch
    %46 = sbr.rel (0) target = $region53
  $region52: #{transformer_forward.1} parent=0 // pred_region
    _
  $region53: #{transformer_forward.1} parent=0 // pred_fallthru
    _
  // Predicated region
  $region54: #{transformer_forward.1} parent=0 // pred_check
    _
  $region55: #{transformer_forward.1} parent=0 // pred_check_branch
    %48 = sbr.rel (0) target = $region57
  $region56: #{transformer_forward.1} parent=0 // pred_region
    _
  $region57: #{transformer_forward.1} parent=0 // pred_fallthru
    _
  // Predicated region
  $region58: #{transformer_forward.1} parent=0 // pred_check
    _
  $region59: #{transformer_forward.1} parent=0 // pred_check_branch
    %50 = sbr.rel (0) target = $region61
  $region60: #{transformer_forward.1} parent=0 // pred_region
    _
  $region61: #{transformer_forward.1} parent=0 // pred_fallthru
    _
  // Predicated region
  $region62: #{transformer_forward.1} parent=0 // pred_check
    _
  $region63: #{transformer_forward.1} parent=0 // pred_check_branch
    %52 = sbr.rel (0) target = $region65
  $region64: #{transformer_forward.1} parent=0 // pred_region
    _
  $region65: #{transformer_forward.1} parent=0 // pred_fallthru
    _
  %v53 = vld [vmem:[%s0] sm:$0xff]
  %v54 = vld [vmem:[%s0 + $0x8] sm:$0xff]
  %v55 = vld [vmem:[%s1] sm:$0xff]
  %v56 = vld [vmem:[%s2] sm:$0xff]
  %v57 = vld [vmem:[%s2 + $0x8] sm:$0xff]
  %v58 = vld [vmem:[%s2 + $0x10] sm:$0xff]
  %v59 = vld [vmem:[%s2 + $0x18] sm:$0xff]
  %v60 = vld [vmem:[%s3] sm:$0x1]
  %v61 = vld [vmem:[%s4] sm:$0xff]
  %v62 = vld [vmem:[%s4 + $0x8] sm:$0xff]
  %v63 = vld [vmem:[%s4 + $0x10] sm:$0xff]
  %v64 = vld [vmem:[%s4 + $0x18] sm:$0xff]
  %v65 = vld [vmem:[%s5] sm:$0x1]
  %v66 = vld [vmem:[%s6] sm:$0xff]
  %v67 = vld [vmem:[%s6 + $0x8] sm:$0xff]
  %v68 = vld [vmem:[%s6 + $0x10] sm:$0xff]
  %v69 = vld [vmem:[%s6 + $0x18] sm:$0xff]
  %v70 = vld [vmem:[%s7] sm:$0x1]
  %v71 = vld [vmem:[%s8] sm:$0xff]
  %v72 = vld [vmem:[%s8 + $0x8] sm:$0xff]
  %v73 = vld [vmem:[%s8 + $0x10] sm:$0xff]
  %v74 = vld [vmem:[%s8 + $0x18] sm:$0xff]
  %v75 = vld [vmem:[%s8 + $0x20] sm:$0xff]
  %v76 = vld [vmem:[%s8 + $0x28] sm:$0xff]
  %v77 = vld [vmem:[%s8 + $0x30] sm:$0xff]
  %v78 = vld [vmem:[%s8 + $0x38] sm:$0xff]
  %v79 = vld [vmem:[%s9] sm:$0x1]
  %v80 = vld [vmem:[%s10] sm:$0x1]
  %v81 = vld [vmem:[%s11] sm:$0x1]
  %v82 = vld [vmem:[%s12] sm:$0x1]
  %v83 = vld [vmem:[%s13] sm:$0x1]
  %v85 = vlaneseq
  %v86 = vshrl.u32 %v85, 7
  %v87 = vsub.s32 0, %v86
  %v88 = vrot.slane %v60, %v87
  %vm90 = vcmask 261120
  %v92 = vsel %vm90, %v53, 0
  %v95 = vsel %vm90, %v54, 0
  %97 = vmatprep.subr.mxu0 0.0
  %98 = vmatpush1.msra.mxu0 %v56
  %99 = vmatprep.subr.mxu0 0.0
  %100 = vmatpush1.msra.mxu0 %v57
  %101 = vmatprep.subr.mxu0 0.0
  %102 = vmatpush1.msra.mxu0 %v58
  %103 = vmatprep.subr.mxu0 0.0
  %104 = vmatpush1.msra.mxu0 %v59
  %105 = vmatprep.subr.mxu0 0.0
  %106 = vmatpush1.msra.mxu0 0.0
  %107 = vmatprep.subr.mxu0 0.0
  %108 = vmatpush1.msra.mxu0 0.0
  %109 = vmatprep.subr.mxu0 0.0
  %110 = vmatpush1.msra.mxu0 0.0
  %111 = vmatprep.subr.mxu0 0.0
  %112 = vmatpush1.msra.mxu0 0.0
  %113 = vmatprep.subr.mxu0 0.0
  %114 = vmatpush1.msra.mxu0 0.0
  %115 = vmatprep.subr.mxu0 0.0
  %116 = vmatpush1.msra.mxu0 0.0
  %117 = vmatprep.subr.mxu0 0.0
  %118 = vmatpush1.msra.mxu0 0.0
  %119 = vmatprep.subr.mxu0 0.0
  %120 = vmatpush1.msra.mxu0 0.0
  %121 = vmatprep.subr.mxu0 0.0
  %122 = vmatpush1.msra.mxu0 0.0
  %123 = vmatprep.subr.mxu0 0.0
  %124 = vmatpush1.msra.mxu0 0.0
  %125 = vmatprep.subr.mxu0 0.0
  %126 = vmatpush1.msra.mxu0 0.0
  %127 = vmatprep.subr.mxu0 0.0
  %128 = vmatpush1.msra.mxu0 0.0
  %129 = vmatprep.subr.mxu0 0.0
  %130 = vmatpush1.msra.mxu0 0.0
  %131 = vmatprep.subr.mxu0 0.0
  %132 = vmatpush1.msra.mxu0 0.0
  %133 = vmatprep.subr.mxu0 0.0
  %134 = vmatpush1.msra.mxu0 0.0
  %135 = vmatprep.subr.mxu0 0.0
  %136 = vmatpush1.msra.mxu0 0.0
  %137 = vmatprep.subr.mxu0 0.0
  %138 = vmatpush1.msra.mxu0 0.0
  %139 = vmatprep.subr.mxu0 0.0
  %140 = vmatpush1.msra.mxu0 0.0
  %141 = vmatprep.subr.mxu0 0.0
  %142 = vmatpush1.msra.mxu0 0.0
  %143 = vmatprep.subr.mxu0 0.0
  %144 = vmatpush1.msra.mxu0 0.0
  %145 = vmatprep.subr.mxu0 0.0
  %146 = vmatpush1.msra.mxu0 0.0
  %147 = vmatprep.subr.mxu0 0.0
  %148 = vmatpush1.msra.mxu0 0.0
  %149 = vmatprep.subr.mxu0 0.0
  %150 = vmatpush1.msra.mxu0 0.0
  %151 = vmatprep.subr.mxu0 0.0
  %152 = vmatpush1.msra.mxu0 0.0
  %153 = vmatprep.subr.mxu0 0.0
  %154 = vmatpush1.msra.mxu0 0.0
  %155 = vmatprep.subr.mxu0 0.0
  %156 = vmatpush1.msra.mxu0 0.0
  %157 = vmatprep.subr.mxu0 0.0
  %158 = vmatpush1.msra.mxu0 0.0
  %159 = vmatprep.subr.mxu0 0.0
  %160 = vmatpush1.msra.mxu0 0.0
  %161 = vmatprep.mubr.f32.mxu0 0.0
  %162 = vmatmul.mubr.f32.gmra.mrb[0].mxu0 %v92
  %v163 = vpop.f32.mrb[0].mxu0
  %v164 = vadd.f32 %v88, %v163
  %v165 = vpop.f32.mrb[0].mxu0
  %166 = vmatprep.mubr.f32.mxu0 0.0
  %167 = vmatmul.mubr.f32.gmra.mrb[0].mxu0 %v95
  %v168 = vpop.f32.mrb[0].mxu0
  %v169 = vadd.f32 %v88, %v168
  %v170 = vpop.f32.mrb[0].mxu0
  %171 = vdwg.mxu0
  %173 = vrot.lane.b32.xlu0 %v164, 96
  %v174 = vpop.permute.xlu0 %173
  %vm175 = vcmask 64512
  %v176 = vsel %vm175, %v164, 0
  %v178 = vsel %vm175, %v174, 0
  %180 = vmatprep.subr.mxu0 0.0
  %181 = vmatpush1.xpose.msra.mxu0 %v178
  %182 = vmatprep.subr.mxu0 0.0
  %183 = vmatpush1.xpose.msra.mxu0 0.0
  %184 = vmatprep.subr.mxu0 0.0
  %185 = vmatpush1.xpose.msra.mxu0 0.0
  %186 = vmatprep.subr.mxu0 0.0
  %187 = vmatpush1.xpose.msra.mxu0 0.0
  %188 = vmatprep.subr.mxu0 0.0
  %189 = vmatpush1.xpose.msra.mxu0 0.0
  %190 = vmatprep.subr.mxu0 0.0
  %191 = vmatpush1.xpose.msra.mxu0 0.0
  %192 = vmatprep.subr.mxu0 0.0
  %193 = vmatpush1.xpose.msra.mxu0 0.0
  %194 = vmatprep.subr.mxu0 0.0
  %195 = vmatpush1.xpose.msra.mxu0 0.0
  %196 = vmatprep.subr.mxu0 0.0
  %197 = vmatpush1.xpose.msra.mxu0 0.0
  %198 = vmatprep.subr.mxu0 0.0
  %199 = vmatpush1.xpose.msra.mxu0 0.0
  %200 = vmatprep.subr.mxu0 0.0
  %201 = vmatpush1.xpose.msra.mxu0 0.0
  %202 = vmatprep.subr.mxu0 0.0
  %203 = vmatpush1.xpose.msra.mxu0 0.0
  %204 = vmatprep.subr.mxu0 0.0
  %205 = vmatpush1.xpose.msra.mxu0 0.0
  %206 = vmatprep.subr.mxu0 0.0
  %207 = vmatpush1.xpose.msra.mxu0 0.0
  %208 = vmatprep.subr.mxu0 0.0
  %209 = vmatpush1.xpose.msra.mxu0 0.0
  %210 = vmatprep.subr.mxu0 0.0
  %211 = vmatpush1.xpose.msra.mxu0 0.0
  %212 = vmatprep.subr.mxu0 0.0
  %213 = vmatpush1.xpose.msra.mxu0 0.0
  %214 = vmatprep.subr.mxu0 0.0
  %215 = vmatpush1.xpose.msra.mxu0 0.0
  %216 = vmatprep.subr.mxu0 0.0
  %217 = vmatpush1.xpose.msra.mxu0 0.0
  %218 = vmatprep.subr.mxu0 0.0
  %219 = vmatpush1.xpose.msra.mxu0 0.0
  %220 = vmatprep.subr.mxu0 0.0
  %221 = vmatpush1.xpose.msra.mxu0 0.0
  %222 = vmatprep.subr.mxu0 0.0
  %223 = vmatpush1.xpose.msra.mxu0 0.0
  %224 = vmatprep.subr.mxu0 0.0
  %225 = vmatpush1.xpose.msra.mxu0 0.0
  %226 = vmatprep.subr.mxu0 0.0
  %227 = vmatpush1.xpose.msra.mxu0 0.0
  %228 = vmatprep.subr.mxu0 0.0
  %229 = vmatpush1.xpose.msra.mxu0 0.0
  %230 = vmatprep.subr.mxu0 0.0
  %231 = vmatpush1.xpose.msra.mxu0 0.0
  %232 = vmatprep.subr.mxu0 0.0
  %233 = vmatpush1.xpose.msra.mxu0 0.0
  %234 = vmatprep.subr.mxu0 0.0
  %235 = vmatpush1.xpose.msra.mxu0 0.0
  %236 = vmatprep.subr.mxu0 0.0
  %237 = vmatpush1.xpose.msra.mxu0 0.0
  %238 = vmatprep.subr.mxu0 0.0
  %239 = vmatpush1.xpose.msra.mxu0 0.0
  %240 = vmatprep.subr.mxu0 0.0
  %241 = vmatpush1.xpose.msra.mxu0 0.0
  %242 = vmatprep.subr.mxu0 0.0
  %243 = vmatpush1.xpose.msra.mxu0 0.0
  %244 = vmatprep.mubr.f32.mxu0 0.0
  %245 = vmatmul.mubr.f32.gmra.mrb[0].mxu0 %v176
  %v246 = vpop.f32.mrb[0].mxu0
  %v247 = vadd.f32 0.0, %v246
  %v248 = vpop.f32.mrb[0].mxu0
  %249 = vdwg.mxu0
  %v250 = vmul.f32 %v247, 0.35355338
  %v251 = vadd.f32 %v250, %v55
  %v252 = vsel %vm175, %v251, -inf
  %253 = vmax.xlane.f32.xlu0 %v252
  %v254 = vpop.xlane.xlu0 %253
  %v255 = vsub.f32 %v251, %v254
  %v256 = vmul.f32 %v255, 1.442695
  %v257 = vpow.pop %v256
  %v258 = vsel %vm175, %v257, 0.0
  %259 = vadd.xlane.f32.xlu0 %v258
  %v260 = vpop.xlane.xlu0 %259
  %v261 = vrcp.pop %v260
  %v262 = vmul.f32 %v257, %v261
  %263 = vrot.lane.b32.xlu0 %v164, 64
  %v264 = vpop.permute.xlu0 %263
  %v267 = vsel %vm175, %v262, 0
  %269 = vmatprep.subr.mxu0 0.0
  %270 = vmatpush1.msra.mxu0 %v264
  %271 = vmatprep.subr.mxu0 0.0
  %272 = vmatpush1.msra.mxu0 0.0
  %273 = vmatprep.subr.mxu0 0.0
  %274 = vmatpush1.msra.mxu0 0.0
  %275 = vmatprep.subr.mxu0 0.0
  %276 = vmatpush1.msra.mxu0 0.0
  %277 = vmatprep.subr.mxu0 0.0
  %278 = vmatpush1.msra.mxu0 0.0
  %279 = vmatprep.subr.mxu0 0.0
  %280 = vmatpush1.msra.mxu0 0.0
  %281 = vmatprep.subr.mxu0 0.0
  %282 = vmatpush1.msra.mxu0 0.0
  %283 = vmatprep.subr.mxu0 0.0
  %284 = vmatpush1.msra.mxu0 0.0
  %285 = vmatprep.subr.mxu0 0.0
  %286 = vmatpush1.msra.mxu0 0.0
  %287 = vmatprep.subr.mxu0 0.0
  %288 = vmatpush1.msra.mxu0 0.0
  %289 = vmatprep.subr.mxu0 0.0
  %290 = vmatpush1.msra.mxu0 0.0
  %291 = vmatprep.subr.mxu0 0.0
  %292 = vmatpush1.msra.mxu0 0.0
  %293 = vmatprep.subr.mxu0 0.0
  %294 = vmatpush1.msra.mxu0 0.0
  %295 = vmatprep.subr.mxu0 0.0
  %296 = vmatpush1.msra.mxu0 0.0
  %297 = vmatprep.subr.mxu0 0.0
  %298 = vmatpush1.msra.mxu0 0.0
  %299 = vmatprep.subr.mxu0 0.0
  %300 = vmatpush1.msra.mxu0 0.0
  %301 = vmatprep.subr.mxu0 0.0
  %302 = vmatpush1.msra.mxu0 0.0
  %303 = vmatprep.subr.mxu0 0.0
  %304 = vmatpush1.msra.mxu0 0.0
  %305 = vmatprep.subr.mxu0 0.0
  %306 = vmatpush1.msra.mxu0 0.0
  %307 = vmatprep.subr.mxu0 0.0
  %308 = vmatpush1.msra.mxu0 0.0
  %309 = vmatprep.subr.mxu0 0.0
  %310 = vmatpush1.msra.mxu0 0.0
  %311 = vmatprep.subr.mxu0 0.0
  %312 = vmatpush1.msra.mxu0 0.0
  %313 = vmatprep.subr.mxu0 0.0
  %314 = vmatpush1.msra.mxu0 0.0
  %315 = vmatprep.subr.mxu0 0.0
  %316 = vmatpush1.msra.mxu0 0.0
  %317 = vmatprep.subr.mxu0 0.0
  %318 = vmatpush1.msra.mxu0 0.0
  %319 = vmatprep.subr.mxu0 0.0
  %320 = vmatpush1.msra.mxu0 0.0
  %321 = vmatprep.subr.mxu0 0.0
  %322 = vmatpush1.msra.mxu0 0.0
  %323 = vmatprep.subr.mxu0 0.0
  %324 = vmatpush1.msra.mxu0 0.0
  %325 = vmatprep.subr.mxu0 0.0
  %326 = vmatpush1.msra.mxu0 0.0
  %327 = vmatprep.subr.mxu0 0.0
  %328 = vmatpush1.msra.mxu0 0.0
  %329 = vmatprep.subr.mxu0 0.0
  %330 = vmatpush1.msra.mxu0 0.0
  %331 = vmatprep.subr.mxu0 0.0
  %332 = vmatpush1.msra.mxu0 0.0
  %333 = vmatprep.mubr.f32.mxu0 0.0
  %334 = vmatmul.mubr.f32.gmra.mrb[0].mxu0 %v267
  %v335 = vpop.f32.mrb[0].mxu0
  %v336 = vadd.f32 0.0, %v335
  %v337 = vpop.f32.mrb[0].mxu0
  %338 = vdwg.mxu0
  %339 = vst.msk [vmem:[#allocation2] sm:$0xff] %vm175, %v336
  %340 = vrot.lane.b32.xlu0 %v164, 120
  %v341 = vpop.permute.xlu0 %340
  %342 = vrot.lane.b32.xlu0 %v164, 88
  %v343 = vpop.permute.xlu0 %342
  %v344 = vsel %vm175, %v341, 0
  %v346 = vsel %vm175, %v343, 0
  %348 = vmatprep.subr.mxu0 0.0
  %349 = vmatpush1.xpose.msra.mxu0 %v346
  %350 = vmatprep.subr.mxu0 0.0
  %351 = vmatpush1.xpose.msra.mxu0 0.0
  %352 = vmatprep.subr.mxu0 0.0
  %353 = vmatpush1.xpose.msra.mxu0 0.0
  %354 = vmatprep.subr.mxu0 0.0
  %355 = vmatpush1.xpose.msra.mxu0 0.0
  %356 = vmatprep.subr.mxu0 0.0
  %357 = vmatpush1.xpose.msra.mxu0 0.0
  %358 = vmatprep.subr.mxu0 0.0
  %359 = vmatpush1.xpose.msra.mxu0 0.0
  %360 = vmatprep.subr.mxu0 0.0
  %361 = vmatpush1.xpose.msra.mxu0 0.0
  %362 = vmatprep.subr.mxu0 0.0
  %363 = vmatpush1.xpose.msra.mxu0 0.0
  %364 = vmatprep.subr.mxu0 0.0
  %365 = vmatpush1.xpose.msra.mxu0 0.0
  %366 = vmatprep.subr.mxu0 0.0
  %367 = vmatpush1.xpose.msra.mxu0 0.0
  %368 = vmatprep.subr.mxu0 0.0
  %369 = vmatpush1.xpose.msra.mxu0 0.0
  %370 = vmatprep.subr.mxu0 0.0
  %371 = vmatpush1.xpose.msra.mxu0 0.0
  %372 = vmatprep.subr.mxu0 0.0
  %373 = vmatpush1.xpose.msra.mxu0 0.0
  %374 = vmatprep.subr.mxu0 0.0
  %375 = vmatpush1.xpose.msra.mxu0 0.0
  %376 = vmatprep.subr.mxu0 0.0
  %377 = vmatpush1.xpose.msra.mxu0 0.0
  %378 = vmatprep.subr.mxu0 0.0
  %379 = vmatpush1.xpose.msra.mxu0 0.0
  %380 = vmatprep.subr.mxu0 0.0
  %381 = vmatpush1.xpose.msra.mxu0 0.0
  %382 = vmatprep.subr.mxu0 0.0
  %383 = vmatpush1.xpose.msra.mxu0 0.0
  %384 = vmatprep.subr.mxu0 0.0
  %385 = vmatpush1.xpose.msra.mxu0 0.0
  %386 = vmatprep.subr.mxu0 0.0
  %387 = vmatpush1.xpose.msra.mxu0 0.0
  %388 = vmatprep.subr.mxu0 0.0
  %389 = vmatpush1.xpose.msra.mxu0 0.0
  %390 = vmatprep.subr.mxu0 0.0
  %391 = vmatpush1.xpose.msra.mxu0 0.0
  %392 = vmatprep.subr.mxu0 0.0
  %393 = vmatpush1.xpose.msra.mxu0 0.0
  %394 = vmatprep.subr.mxu0 0.0
  %395 = vmatpush1.xpose.msra.mxu0 0.0
  %396 = vmatprep.subr.mxu0 0.0
  %397 = vmatpush1.xpose.msra.mxu0 0.0
  %398 = vmatprep.subr.mxu0 0.0
  %399 = vmatpush1.xpose.msra.mxu0 0.0
  %400 = vmatprep.subr.mxu0 0.0
  %401 = vmatpush1.xpose.msra.mxu0 0.0
  %402 = vmatprep.subr.mxu0 0.0
  %403 = vmatpush1.xpose.msra.mxu0 0.0
  %404 = vmatprep.subr.mxu0 0.0
  %405 = vmatpush1.xpose.msra.mxu0 0.0
  %406 = vmatprep.subr.mxu0 0.0
  %407 = vmatpush1.xpose.msra.mxu0 0.0
  %408 = vmatprep.subr.mxu0 0.0
  %409 = vmatpush1.xpose.msra.mxu0 0.0
  %410 = vmatprep.subr.mxu0 0.0
  %411 = vmatpush1.xpose.msra.mxu0 0.0
  %412 = vmatprep.mubr.f32.mxu0 0.0
  %413 = vmatmul.mubr.f32.gmra.mrb[0].mxu0 %v344
  %v414 = vpop.f32.mrb[0].mxu0
  %v415 = vadd.f32 0.0, %v414
  %v416 = vpop.f32.mrb[0].mxu0
  %417 = vdwg.mxu0
  %v418 = vmul.f32 %v415, 0.35355338
  %v419 = vadd.f32 %v418, %v55
  %v420 = vsel %vm175, %v419, -inf
  %421 = vmax.xlane.f32.xlu0 %v420
  %v422 = vpop.xlane.xlu0 %421
  %v423 = vsub.f32 %v419, %v422
  %v424 = vmul.f32 %v423, 1.442695
  %v425 = vpow.pop %v424
  %v426 = vsel %vm175, %v425, 0.0
  %427 = vadd.xlane.f32.xlu0 %v426
  %v428 = vpop.xlane.xlu0 %427
  %v429 = vrcp.pop %v428
  %v430 = vmul.f32 %v425, %v429
  %431 = vrot.lane.b32.xlu0 %v164, 56
  %v432 = vpop.permute.xlu0 %431
  %v435 = vsel %vm175, %v430, 0
  %437 = vmatprep.subr.mxu0 0.0
  %438 = vmatpush1.msra.mxu0 %v432
  %439 = vmatprep.subr.mxu0 0.0
  %440 = vmatpush1.msra.mxu0 0.0
  %441 = vmatprep.subr.mxu0 0.0
  %442 = vmatpush1.msra.mxu0 0.0
  %443 = vmatprep.subr.mxu0 0.0
  %444 = vmatpush1.msra.mxu0 0.0
  %445 = vmatprep.subr.mxu0 0.0
  %446 = vmatpush1.msra.mxu0 0.0
  %447 = vmatprep.subr.mxu0 0.0
  %448 = vmatpush1.msra.mxu0 0.0
  %449 = vmatprep.subr.mxu0 0.0
  %450 = vmatpush1.msra.mxu0 0.0
  %451 = vmatprep.subr.mxu0 0.0
  %452 = vmatpush1.msra.mxu0 0.0
  %453 = vmatprep.subr.mxu0 0.0
  %454 = vmatpush1.msra.mxu0 0.0
  %455 = vmatprep.subr.mxu0 0.0
  %456 = vmatpush1.msra.mxu0 0.0
  %457 = vmatprep.subr.mxu0 0.0
  %458 = vmatpush1.msra.mxu0 0.0
  %459 = vmatprep.subr.mxu0 0.0
  %460 = vmatpush1.msra.mxu0 0.0
  %461 = vmatprep.subr.mxu0 0.0
  %462 = vmatpush1.msra.mxu0 0.0
  %463 = vmatprep.subr.mxu0 0.0
  %464 = vmatpush1.msra.mxu0 0.0
  %465 = vmatprep.subr.mxu0 0.0
  %466 = vmatpush1.msra.mxu0 0.0
  %467 = vmatprep.subr.mxu0 0.0
  %468 = vmatpush1.msra.mxu0 0.0
  %469 = vmatprep.subr.mxu0 0.0
  %470 = vmatpush1.msra.mxu0 0.0
  %471 = vmatprep.subr.mxu0 0.0
  %472 = vmatpush1.msra.mxu0 0.0
  %473 = vmatprep.subr.mxu0 0.0
  %474 = vmatpush1.msra.mxu0 0.0
  %475 = vmatprep.subr.mxu0 0.0
  %476 = vmatpush1.msra.mxu0 0.0
  %477 = vmatprep.subr.mxu0 0.0
  %478 = vmatpush1.msra.mxu0 0.0
  %479 = vmatprep.subr.mxu0 0.0
  %480 = vmatpush1.msra.mxu0 0.0
  %481 = vmatprep.subr.mxu0 0.0
  %482 = vmatpush1.msra.mxu0 0.0
  %483 = vmatprep.subr.mxu0 0.0
  %484 = vmatpush1.msra.mxu0 0.0
  %485 = vmatprep.subr.mxu0 0.0
  %486 = vmatpush1.msra.mxu0 0.0
  %487 = vmatprep.subr.mxu0 0.0
  %488 = vmatpush1.msra.mxu0 0.0
  %489 = vmatprep.subr.mxu0 0.0
  %490 = vmatpush1.msra.mxu0 0.0
  %491 = vmatprep.subr.mxu0 0.0
  %492 = vmatpush1.msra.mxu0 0.0
  %493 = vmatprep.subr.mxu0 0.0
  %494 = vmatpush1.msra.mxu0 0.0
  %495 = vmatprep.subr.mxu0 0.0
  %496 = vmatpush1.msra.mxu0 0.0
  %497 = vmatprep.subr.mxu0 0.0
  %498 = vmatpush1.msra.mxu0 0.0
  %499 = vmatprep.subr.mxu0 0.0
  %500 = vmatpush1.msra.mxu0 0.0
  %501 = vmatprep.mubr.f32.mxu0 0.0
  %502 = vmatmul.mubr.f32.gmra.mrb[0].mxu0 %v435
  %v503 = vpop.f32.mrb[0].mxu0
  %v504 = vadd.f32 0.0, %v503
  %v505 = vpop.f32.mrb[0].mxu0
  %506 = vdwg.mxu0
  %508 = vrot.lane.b32.xlu0 %v504, 8
  %v509 = vpop.permute.xlu0 %508
  %vm511 = vcmask 130112
  %512 = vst.msk [vmem:[#allocation2] sm:$0xff] %vm511, %v509
  %513 = vrot.lane.b32.xlu0 %v164, 112
  %v514 = vpop.permute.xlu0 %513
  %515 = vrot.lane.b32.xlu0 %v164, 80
  %v516 = vpop.permute.xlu0 %515
  %v517 = vsel %vm175, %v514, 0
  %v519 = vsel %vm175, %v516, 0
  %521 = vmatprep.subr.mxu0 0.0
  %522 = vmatpush1.xpose.msra.mxu0 %v519
  %523 = vmatprep.subr.mxu0 0.0
  %524 = vmatpush1.xpose.msra.mxu0 0.0
  %525 = vmatprep.subr.mxu0 0.0
  %526 = vmatpush1.xpose.msra.mxu0 0.0
  %527 = vmatprep.subr.mxu0 0.0
  %528 = vmatpush1.xpose.msra.mxu0 0.0
  %529 = vmatprep.subr.mxu0 0.0
  %530 = vmatpush1.xpose.msra.mxu0 0.0
  %531 = vmatprep.subr.mxu0 0.0
  %532 = vmatpush1.xpose.msra.mxu0 0.0
  %533 = vmatprep.subr.mxu0 0.0
  %534 = vmatpush1.xpose.msra.mxu0 0.0
  %535 = vmatprep.subr.mxu0 0.0
  %536 = vmatpush1.xpose.msra.mxu0 0.0
  %537 = vmatprep.subr.mxu0 0.0
  %538 = vmatpush1.xpose.msra.mxu0 0.0
  %539 = vmatprep.subr.mxu0 0.0
  %540 = vmatpush1.xpose.msra.mxu0 0.0
  %541 = vmatprep.subr.mxu0 0.0
  %542 = vmatpush1.xpose.msra.mxu0 0.0
  %543 = vmatprep.subr.mxu0 0.0
  %544 = vmatpush1.xpose.msra.mxu0 0.0
  %545 = vmatprep.subr.mxu0 0.0
  %546 = vmatpush1.xpose.msra.mxu0 0.0
  %547 = vmatprep.subr.mxu0 0.0
  %548 = vmatpush1.xpose.msra.mxu0 0.0
  %549 = vmatprep.subr.mxu0 0.0
  %550 = vmatpush1.xpose.msra.mxu0 0.0
  %551 = vmatprep.subr.mxu0 0.0
  %552 = vmatpush1.xpose.msra.mxu0 0.0
  %553 = vmatprep.subr.mxu0 0.0
  %554 = vmatpush1.xpose.msra.mxu0 0.0
  %555 = vmatprep.subr.mxu0 0.0
  %556 = vmatpush1.xpose.msra.mxu0 0.0
  %557 = vmatprep.subr.mxu0 0.0
  %558 = vmatpush1.xpose.msra.mxu0 0.0
  %559 = vmatprep.subr.mxu0 0.0
  %560 = vmatpush1.xpose.msra.mxu0 0.0
  %561 = vmatprep.subr.mxu0 0.0
  %562 = vmatpush1.xpose.msra.mxu0 0.0
  %563 = vmatprep.subr.mxu0 0.0
  %564 = vmatpush1.xpose.msra.mxu0 0.0
  %565 = vmatprep.subr.mxu0 0.0
  %566 = vmatpush1.xpose.msra.mxu0 0.0
  %567 = vmatprep.subr.mxu0 0.0
  %568 = vmatpush1.xpose.msra.mxu0 0.0
  %569 = vmatprep.subr.mxu0 0.0
  %570 = vmatpush1.xpose.msra.mxu0 0.0
  %571 = vmatprep.subr.mxu0 0.0
  %572 = vmatpush1.xpose.msra.mxu0 0.0
  %573 = vmatprep.subr.mxu0 0.0
  %574 = vmatpush1.xpose.msra.mxu0 0.0
  %575 = vmatprep.subr.mxu0 0.0
  %576 = vmatpush1.xpose.msra.mxu0 0.0
  %577 = vmatprep.subr.mxu0 0.0
  %578 = vmatpush1.xpose.msra.mxu0 0.0
  %579 = vmatprep.subr.mxu0 0.0
  %580 = vmatpush1.xpose.msra.mxu0 0.0
  %581 = vmatprep.subr.mxu0 0.0
  %582 = vmatpush1.xpose.msra.mxu0 0.0
  %583 = vmatprep.subr.mxu0 0.0
  %584 = vmatpush1.xpose.msra.mxu0 0.0
  %585 = vmatprep.mubr.f32.mxu0 0.0
  %586 = vmatmul.mubr.f32.gmra.mrb[0].mxu0 %v517
  %v587 = vpop.f32.mrb[0].mxu0
  %v588 = vadd.f32 0.0, %v587
  %v589 = vpop.f32.mrb[0].mxu0
  %590 = vdwg.mxu0
  %v591 = vmul.f32 %v588, 0.35355338
  %v592 = vadd.f32 %v591, %v55
  %v593 = vsel %vm175, %v592, -inf
  %594 = vmax.xlane.f32.xlu0 %v593
  %v595 = vpop.xlane.xlu0 %594
  %v596 = vsub.f32 %v592, %v595
  %v597 = vmul.f32 %v596, 1.442695
  %v598 = vpow.pop %v597
  %v599 = vsel %vm175, %v598, 0.0
  %600 = vadd.xlane.f32.xlu0 %v599
  %v601 = vpop.xlane.xlu0 %600
  %v602 = vrcp.pop %v601
  %v603 = vmul.f32 %v598, %v602
  %604 = vrot.lane.b32.xlu0 %v164, 48
  %v605 = vpop.permute.xlu0 %604
  %v608 = vsel %vm175, %v603, 0
  %610 = vmatprep.subr.mxu0 0.0
  %611 = vmatpush1.msra.mxu0 %v605
  %612 = vmatprep.subr.mxu0 0.0
  %613 = vmatpush1.msra.mxu0 0.0
  %614 = vmatprep.subr.mxu0 0.0
  %615 = vmatpush1.msra.mxu0 0.0
  %616 = vmatprep.subr.mxu0 0.0
  %617 = vmatpush1.msra.mxu0 0.0
  %618 = vmatprep.subr.mxu0 0.0
  %619 = vmatpush1.msra.mxu0 0.0
  %620 = vmatprep.subr.mxu0 0.0
  %621 = vmatpush1.msra.mxu0 0.0
  %622 = vmatprep.subr.mxu0 0.0
  %623 = vmatpush1.msra.mxu0 0.0
  %624 = vmatprep.subr.mxu0 0.0
  %625 = vmatpush1.msra.mxu0 0.0
  %626 = vmatprep.subr.mxu0 0.0
  %627 = vmatpush1.msra.mxu0 0.0
  %628 = vmatprep.subr.mxu0 0.0
  %629 = vmatpush1.msra.mxu0 0.0
  %630 = vmatprep.subr.mxu0 0.0
  %631 = vmatpush1.msra.mxu0 0.0
  %632 = vmatprep.subr.mxu0 0.0
  %633 = vmatpush1.msra.mxu0 0.0
  %634 = vmatprep.subr.mxu0 0.0
  %635 = vmatpush1.msra.mxu0 0.0
  %636 = vmatprep.subr.mxu0 0.0
  %637 = vmatpush1.msra.mxu0 0.0
  %638 = vmatprep.subr.mxu0 0.0
  %639 = vmatpush1.msra.mxu0 0.0
  %640 = vmatprep.subr.mxu0 0.0
  %641 = vmatpush1.msra.mxu0 0.0
  %642 = vmatprep.subr.mxu0 0.0
  %643 = vmatpush1.msra.mxu0 0.0
  %644 = vmatprep.subr.mxu0 0.0
  %645 = vmatpush1.msra.mxu0 0.0
  %646 = vmatprep.subr.mxu0 0.0
  %647 = vmatpush1.msra.mxu0 0.0
  %648 = vmatprep.subr.mxu0 0.0
  %649 = vmatpush1.msra.mxu0 0.0
  %650 = vmatprep.subr.mxu0 0.0
  %651 = vmatpush1.msra.mxu0 0.0
  %652 = vmatprep.subr.mxu0 0.0
  %653 = vmatpush1.msra.mxu0 0.0
  %654 = vmatprep.subr.mxu0 0.0
  %655 = vmatpush1.msra.mxu0 0.0
  %656 = vmatprep.subr.mxu0 0.0
  %657 = vmatpush1.msra.mxu0 0.0
  %658 = vmatprep.subr.mxu0 0.0
  %659 = vmatpush1.msra.mxu0 0.0
  %660 = vmatprep.subr.mxu0 0.0
  %661 = vmatpush1.msra.mxu0 0.0
  %662 = vmatprep.subr.mxu0 0.0
  %663 = vmatpush1.msra.mxu0 0.0
  %664 = vmatprep.subr.mxu0 0.0
  %665 = vmatpush1.msra.mxu0 0.0
  %666 = vmatprep.subr.mxu0 0.0
  %667 = vmatpush1.msra.mxu0 0.0
  %668 = vmatprep.subr.mxu0 0.0
  %669 = vmatpush1.msra.mxu0 0.0
  %670 = vmatprep.subr.mxu0 0.0
  %671 = vmatpush1.msra.mxu0 0.0
  %672 = vmatprep.subr.mxu0 0.0
  %673 = vmatpush1.msra.mxu0 0.0
  %674 = vmatprep.mubr.f32.mxu0 0.0
  %675 = vmatmul.mubr.f32.gmra.mrb[0].mxu0 %v608
  %v676 = vpop.f32.mrb[0].mxu0
  %v677 = vadd.f32 0.0, %v676
  %v678 = vpop.f32.mrb[0].mxu0
  %679 = vdwg.mxu0
  %681 = vrot.lane.b32.xlu0 %v677, 16
  %v682 = vpop.permute.xlu0 %681
  %vm684 = vcmask 195712
  %685 = vst.msk [vmem:[#allocation2] sm:$0xff] %vm684, %v682
  %686 = vrot.lane.b32.xlu0 %v164, 104
  %v687 = vpop.permute.xlu0 %686
  %688 = vrot.lane.b32.xlu0 %v164, 72
  %v689 = vpop.permute.xlu0 %688
  %v690 = vsel %vm175, %v687, 0
  %v692 = vsel %vm175, %v689, 0
  %694 = vmatprep.subr.mxu0 0.0
  %695 = vmatpush1.xpose.msra.mxu0 %v692
  %696 = vmatprep.subr.mxu0 0.0
  %697 = vmatpush1.xpose.msra.mxu0 0.0
  %698 = vmatprep.subr.mxu0 0.0
  %699 = vmatpush1.xpose.msra.mxu0 0.0
  %700 = vmatprep.subr.mxu0 0.0
  %701 = vmatpush1.xpose.msra.mxu0 0.0
  %702 = vmatprep.subr.mxu0 0.0
  %703 = vmatpush1.xpose.msra.mxu0 0.0
  %704 = vmatprep.subr.mxu0 0.0
  %705 = vmatpush1.xpose.msra.mxu0 0.0
  %706 = vmatprep.subr.mxu0 0.0
  %707 = vmatpush1.xpose.msra.mxu0 0.0
  %708 = vmatprep.subr.mxu0 0.0
  %709 = vmatpush1.xpose.msra.mxu0 0.0
  %710 = vmatprep.subr.mxu0 0.0
  %711 = vmatpush1.xpose.msra.mxu0 0.0
  %712 = vmatprep.subr.mxu0 0.0
  %713 = vmatpush1.xpose.msra.mxu0 0.0
  %714 = vmatprep.subr.mxu0 0.0
  %715 = vmatpush1.xpose.msra.mxu0 0.0
  %716 = vmatprep.subr.mxu0 0.0
  %717 = vmatpush1.xpose.msra.mxu0 0.0
  %718 = vmatprep.subr.mxu0 0.0
  %719 = vmatpush1.xpose.msra.mxu0 0.0
  %720 = vmatprep.subr.mxu0 0.0
  %721 = vmatpush1.xpose.msra.mxu0 0.0
  %722 = vmatprep.subr.mxu0 0.0
  %723 = vmatpush1.xpose.msra.mxu0 0.0
  %724 = vmatprep.subr.mxu0 0.0
  %725 = vmatpush1.xpose.msra.mxu0 0.0
  %726 = vmatprep.subr.mxu0 0.0
  %727 = vmatpush1.xpose.msra.mxu0 0.0
  %728 = vmatprep.subr.mxu0 0.0
  %729 = vmatpush1.xpose.msra.mxu0 0.0
  %730 = vmatprep.subr.mxu0 0.0
  %731 = vmatpush1.xpose.msra.mxu0 0.0
  %732 = vmatprep.subr.mxu0 0.0
  %733 = vmatpush1.xpose.msra.mxu0 0.0
  %734 = vmatprep.subr.mxu0 0.0
  %735 = vmatpush1.xpose.msra.mxu0 0.0
  %736 = vmatprep.subr.mxu0 0.0
  %737 = vmatpush1.xpose.msra.mxu0 0.0
  %738 = vmatprep.subr.mxu0 0.0
  %739 = vmatpush1.xpose.msra.mxu0 0.0
  %740 = vmatprep.subr.mxu0 0.0
  %741 = vmatpush1.xpose.msra.mxu0 0.0
  %742 = vmatprep.subr.mxu0 0.0
  %743 = vmatpush1.xpose.msra.mxu0 0.0
  %744 = vmatprep.subr.mxu0 0.0
  %745 = vmatpush1.xpose.msra.mxu0 0.0
  %746 = vmatprep.subr.mxu0 0.0
  %747 = vmatpush1.xpose.msra.mxu0 0.0
  %748 = vmatprep.subr.mxu0 0.0
  %749 = vmatpush1.xpose.msra.mxu0 0.0
  %750 = vmatprep.subr.mxu0 0.0
  %751 = vmatpush1.xpose.msra.mxu0 0.0
  %752 = vmatprep.subr.mxu0 0.0
  %753 = vmatpush1.xpose.msra.mxu0 0.0
  %754 = vmatprep.subr.mxu0 0.0
  %755 = vmatpush1.xpose.msra.mxu0 0.0
  %756 = vmatprep.subr.mxu0 0.0
  %757 = vmatpush1.xpose.msra.mxu0 0.0
  %758 = vmatprep.mubr.f32.mxu0 0.0
  %759 = vmatmul.mubr.f32.gmra.mrb[0].mxu0 %v690
  %v760 = vpop.f32.mrb[0].mxu0
  %v761 = vadd.f32 0.0, %v760
  %v762 = vpop.f32.mrb[0].mxu0
  %763 = vdwg.mxu0
  %v764 = vmul.f32 %v761, 0.35355338
  %v765 = vadd.f32 %v764, %v55
  %v766 = vsel %vm175, %v765, -inf
  %767 = vmax.xlane.f32.xlu0 %v766
  %v768 = vpop.xlane.xlu0 %767
  %v769 = vsub.f32 %v765, %v768
  %v770 = vmul.f32 %v769, 1.442695
  %v771 = vpow.pop %v770
  %v772 = vsel %vm175, %v771, 0.0
  %773 = vadd.xlane.f32.xlu0 %v772
  %v774 = vpop.xlane.xlu0 %773
  %v775 = vrcp.pop %v774
  %v776 = vmul.f32 %v771, %v775
  %777 = vrot.lane.b32.xlu0 %v164, 40
  %v778 = vpop.permute.xlu0 %777
  %v781 = vsel %vm175, %v776, 0
  %783 = vmatprep.subr.mxu0 0.0
  %784 = vmatpush1.msra.mxu0 %v778
  %785 = vmatprep.subr.mxu0 0.0
  %786 = vmatpush1.msra.mxu0 0.0
  %787 = vmatprep.subr.mxu0 0.0
  %788 = vmatpush1.msra.mxu0 0.0
  %789 = vmatprep.subr.mxu0 0.0
  %790 = vmatpush1.msra.mxu0 0.0
  %791 = vmatprep.subr.mxu0 0.0
  %792 = vmatpush1.msra.mxu0 0.0
  %793 = vmatprep.subr.mxu0 0.0
  %794 = vmatpush1.msra.mxu0 0.0
  %795 = vmatprep.subr.mxu0 0.0
  %796 = vmatpush1.msra.mxu0 0.0
  %797 = vmatprep.subr.mxu0 0.0
  %798 = vmatpush1.msra.mxu0 0.0
  %799 = vmatprep.subr.mxu0 0.0
  %800 = vmatpush1.msra.mxu0 0.0
  %801 = vmatprep.subr.mxu0 0.0
  %802 = vmatpush1.msra.mxu0 0.0
  %803 = vmatprep.subr.mxu0 0.0
  %804 = vmatpush1.msra.mxu0 0.0
  %805 = vmatprep.subr.mxu0 0.0
  %806 = vmatpush1.msra.mxu0 0.0
  %807 = vmatprep.subr.mxu0 0.0
  %808 = vmatpush1.msra.mxu0 0.0
  %809 = vmatprep.subr.mxu0 0.0
  %810 = vmatpush1.msra.mxu0 0.0
  %811 = vmatprep.subr.mxu0 0.0
  %812 = vmatpush1.msra.mxu0 0.0
  %813 = vmatprep.subr.mxu0 0.0
  %814 = vmatpush1.msra.mxu0 0.0
  %815 = vmatprep.subr.mxu0 0.0
  %816 = vmatpush1.msra.mxu0 0.0
  %817 = vmatprep.subr.mxu0 0.0
  %818 = vmatpush1.msra.mxu0 0.0
  %819 = vmatprep.subr.mxu0 0.0
  %820 = vmatpush1.msra.mxu0 0.0
  %821 = vmatprep.subr.mxu0 0.0
  %822 = vmatpush1.msra.mxu0 0.0
  %823 = vmatprep.subr.mxu0 0.0
  %824 = vmatpush1.msra.mxu0 0.0
  %825 = vmatprep.subr.mxu0 0.0
  %826 = vmatpush1.msra.mxu0 0.0
  %827 = vmatprep.subr.mxu0 0.0
  %828 = vmatpush1.msra.mxu0 0.0
  %829 = vmatprep.subr.mxu0 0.0
  %830 = vmatpush1.msra.mxu0 0.0
  %831 = vmatprep.subr.mxu0 0.0
  %832 = vmatpush1.msra.mxu0 0.0
  %833 = vmatprep.subr.mxu0 0.0
  %834 = vmatpush1.msra.mxu0 0.0
  %835 = vmatprep.subr.mxu0 0.0
  %836 = vmatpush1.msra.mxu0 0.0
  %837 = vmatprep.subr.mxu0 0.0
  %838 = vmatpush1.msra.mxu0 0.0
  %839 = vmatprep.subr.mxu0 0.0
  %840 = vmatpush1.msra.mxu0 0.0
  %841 = vmatprep.subr.mxu0 0.0
  %842 = vmatpush1.msra.mxu0 0.0
  %843 = vmatprep.subr.mxu0 0.0
  %844 = vmatpush1.msra.mxu0 0.0
  %845 = vmatprep.subr.mxu0 0.0
  %846 = vmatpush1.msra.mxu0 0.0
  %847 = vmatprep.mubr.f32.mxu0 0.0
  %848 = vmatmul.mubr.f32.gmra.mrb[0].mxu0 %v781
  %v849 = vpop.f32.mrb[0].mxu0
  %v850 = vadd.f32 0.0, %v849
  %v851 = vpop.f32.mrb[0].mxu0
  %852 = vdwg.mxu0
  %854 = vrot.lane.b32.xlu0 %v850, 24
  %v855 = vpop.permute.xlu0 %854
  %vm857 = vcmask 261312
  %858 = vst.msk [vmem:[#allocation2] sm:$0xff] %vm857, %v855
  %860 = vrot.lane.b32.xlu0 %v169, 96
  %v861 = vpop.permute.xlu0 %860
  %v862 = vsel %vm175, %v169, 0
  %v864 = vsel %vm175, %v861, 0
  %866 = vmatprep.subr.mxu0 0.0
  %867 = vmatpush1.xpose.msra.mxu0 %v864
  %868 = vmatprep.subr.mxu0 0.0
  %869 = vmatpush1.xpose.msra.mxu0 0.0
  %870 = vmatprep.subr.mxu0 0.0
  %871 = vmatpush1.xpose.msra.mxu0 0.0
  %872 = vmatprep.subr.mxu0 0.0
  %873 = vmatpush1.xpose.msra.mxu0 0.0
  %874 = vmatprep.subr.mxu0 0.0
  %875 = vmatpush1.xpose.msra.mxu0 0.0
  %876 = vmatprep.subr.mxu0 0.0
  %877 = vmatpush1.xpose.msra.mxu0 0.0
  %878 = vmatprep.subr.mxu0 0.0
  %879 = vmatpush1.xpose.msra.mxu0 0.0
  %880 = vmatprep.subr.mxu0 0.0
  %881 = vmatpush1.xpose.msra.mxu0 0.0
  %882 = vmatprep.subr.mxu0 0.0
  %883 = vmatpush1.xpose.msra.mxu0 0.0
  %884 = vmatprep.subr.mxu0 0.0
  %885 = vmatpush1.xpose.msra.mxu0 0.0
  %886 = vmatprep.subr.mxu0 0.0
  %887 = vmatpush1.xpose.msra.mxu0 0.0
  %888 = vmatprep.subr.mxu0 0.0
  %889 = vmatpush1.xpose.msra.mxu0 0.0
  %890 = vmatprep.subr.mxu0 0.0
  %891 = vmatpush1.xpose.msra.mxu0 0.0
  %892 = vmatprep.subr.mxu0 0.0
  %893 = vmatpush1.xpose.msra.mxu0 0.0
  %894 = vmatprep.subr.mxu0 0.0
  %895 = vmatpush1.xpose.msra.mxu0 0.0
  %896 = vmatprep.subr.mxu0 0.0
  %897 = vmatpush1.xpose.msra.mxu0 0.0
  %898 = vmatprep.subr.mxu0 0.0
  %899 = vmatpush1.xpose.msra.mxu0 0.0
  %900 = vmatprep.subr.mxu0 0.0
  %901 = vmatpush1.xpose.msra.mxu0 0.0
  %902 = vmatprep.subr.mxu0 0.0
  %903 = vmatpush1.xpose.msra.mxu0 0.0
  %904 = vmatprep.subr.mxu0 0.0
  %905 = vmatpush1.xpose.msra.mxu0 0.0
  %906 = vmatprep.subr.mxu0 0.0
  %907 = vmatpush1.xpose.msra.mxu0 0.0
  %908 = vmatprep.subr.mxu0 0.0
  %909 = vmatpush1.xpose.msra.mxu0 0.0
  %910 = vmatprep.subr.mxu0 0.0
  %911 = vmatpush1.xpose.msra.mxu0 0.0
  %912 = vmatprep.subr.mxu0 0.0
  %913 = vmatpush1.xpose.msra.mxu0 0.0
  %914 = vmatprep.subr.mxu0 0.0
  %915 = vmatpush1.xpose.msra.mxu0 0.0
  %916 = vmatprep.subr.mxu0 0.0
  %917 = vmatpush1.xpose.msra.mxu0 0.0
  %918 = vmatprep.subr.mxu0 0.0
  %919 = vmatpush1.xpose.msra.mxu0 0.0
  %920 = vmatprep.subr.mxu0 0.0
  %921 = vmatpush1.xpose.msra.mxu0 0.0
  %922 = vmatprep.subr.mxu0 0.0
  %923 = vmatpush1.xpose.msra.mxu0 0.0
  %924 = vmatprep.subr.mxu0 0.0
  %925 = vmatpush1.xpose.msra.mxu0 0.0
  %926 = vmatprep.subr.mxu0 0.0
  %927 = vmatpush1.xpose.msra.mxu0 0.0
  %928 = vmatprep.subr.mxu0 0.0
  %929 = vmatpush1.xpose.msra.mxu0 0.0
  %930 = vmatprep.mubr.f32.mxu0 0.0
  %931 = vmatmul.mubr.f32.gmra.mrb[0].mxu0 %v862
  %v932 = vpop.f32.mrb[0].mxu0
  %v933 = vadd.f32 0.0, %v932
  %v934 = vpop.f32.mrb[0].mxu0
  %935 = vdwg.mxu0
  %v936 = vmul.f32 %v933, 0.35355338
  %v937 = vadd.f32 %v936, %v55
  %v938 = vsel %vm175, %v937, -inf
  %939 = vmax.xlane.f32.xlu0 %v938
  %v940 = vpop.xlane.xlu0 %939
  %v941 = vsub.f32 %v937, %v940
  %v942 = vmul.f32 %v941, 1.442695
  %v943 = vpow.pop %v942
  %v944 = vsel %vm175, %v943, 0.0
  %945 = vadd.xlane.f32.xlu0 %v944
  %v946 = vpop.xlane.xlu0 %945
  %v947 = vrcp.pop %v946
  %v948 = vmul.f32 %v943, %v947
  %949 = vrot.lane.b32.xlu0 %v169, 64
  %v950 = vpop.permute.xlu0 %949
  %v953 = vsel %vm175, %v948, 0
  %955 = vmatprep.subr.mxu0 0.0
  %956 = vmatpush1.msra.mxu0 %v950
  %957 = vmatprep.subr.mxu0 0.0
  %958 = vmatpush1.msra.mxu0 0.0
  %959 = vmatprep.subr.mxu0 0.0
  %960 = vmatpush1.msra.mxu0 0.0
  %961 = vmatprep.subr.mxu0 0.0
  %962 = vmatpush1.msra.mxu0 0.0
  %963 = vmatprep.subr.mxu0 0.0
  %964 = vmatpush1.msra.mxu0 0.0
  %965 = vmatprep.subr.mxu0 0.0
  %966 = vmatpush1.msra.mxu0 0.0
  %967 = vmatprep.subr.mxu0 0.0
  %968 = vmatpush1.msra.mxu0 0.0
  %969 = vmatprep.subr.mxu0 0.0
  %970 = vmatpush1.msra.mxu0 0.0
  %971 = vmatprep.subr.mxu0 0.0
  %972 = vmatpush1.msra.mxu0 0.0
  %973 = vmatprep.subr.mxu0 0.0
  %974 = vmatpush1.msra.mxu0 0.0
  %975 = vmatprep.subr.mxu0 0.0
  %976 = vmatpush1.msra.mxu0 0.0
  %977 = vmatprep.subr.mxu0 0.0
  %978 = vmatpush1.msra.mxu0 0.0
  %979 = vmatprep.subr.mxu0 0.0
  %980 = vmatpush1.msra.mxu0 0.0
  %981 = vmatprep.subr.mxu0 0.0
  %982 = vmatpush1.msra.mxu0 0.0
  %983 = vmatprep.subr.mxu0 0.0
  %984 = vmatpush1.msra.mxu0 0.0
  %985 = vmatprep.subr.mxu0 0.0
  %986 = vmatpush1.msra.mxu0 0.0
  %987 = vmatprep.subr.mxu0 0.0
  %988 = vmatpush1.msra.mxu0 0.0
  %989 = vmatprep.subr.mxu0 0.0
  %990 = vmatpush1.msra.mxu0 0.0
  %991 = vmatprep.subr.mxu0 0.0
  %992 = vmatpush1.msra.mxu0 0.0
  %993 = vmatprep.subr.mxu0 0.0
  %994 = vmatpush1.msra.mxu0 0.0
  %995 = vmatprep.subr.mxu0 0.0
  %996 = vmatpush1.msra.mxu0 0.0
  %997 = vmatprep.subr.mxu0 0.0
  %998 = vmatpush1.msra.mxu0 0.0
  %999 = vmatprep.subr.mxu0 0.0
  %1000 = vmatpush1.msra.mxu0 0.0
  %1001 = vmatprep.subr.mxu0 0.0
  %1002 = vmatpush1.msra.mxu0 0.0
  %1003 = vmatprep.subr.mxu0 0.0
  %1004 = vmatpush1.msra.mxu0 0.0
  %1005 = vmatprep.subr.mxu0 0.0
  %1006 = vmatpush1.msra.mxu0 0.0
  %1007 = vmatprep.subr.mxu0 0.0
  %1008 = vmatpush1.msra.mxu0 0.0
  %1009 = vmatprep.subr.mxu0 0.0
  %1010 = vmatpush1.msra.mxu0 0.0
  %1011 = vmatprep.subr.mxu0 0.0
  %1012 = vmatpush1.msra.mxu0 0.0
  %1013 = vmatprep.subr.mxu0 0.0
  %1014 = vmatpush1.msra.mxu0 0.0
  %1015 = vmatprep.subr.mxu0 0.0
  %1016 = vmatpush1.msra.mxu0 0.0
  %1017 = vmatprep.subr.mxu0 0.0
  %1018 = vmatpush1.msra.mxu0 0.0
  %1019 = vmatprep.mubr.f32.mxu0 0.0
  %1020 = vmatmul.mubr.f32.gmra.mrb[0].mxu0 %v953
  %v1021 = vpop.f32.mrb[0].mxu0
  %v1022 = vadd.f32 0.0, %v1021
  %v1023 = vpop.f32.mrb[0].mxu0
  %1024 = vdwg.mxu0
  %1025 = vst.msk [vmem:[#allocation2 + $0x8] sm:$0xff] %vm175, %v1022
  %1026 = vrot.lane.b32.xlu0 %v169, 120
  %v1027 = vpop.permute.xlu0 %1026
  %1028 = vrot.lane.b32.xlu0 %v169, 88
  %v1029 = vpop.permute.xlu0 %1028
  %v1030 = vsel %vm175, %v1027, 0
  %v1032 = vsel %vm175, %v1029, 0
  %1034 = vmatprep.subr.mxu0 0.0
  %1035 = vmatpush1.xpose.msra.mxu0 %v1032
  %1036 = vmatprep.subr.mxu0 0.0
  %1037 = vmatpush1.xpose.msra.mxu0 0.0
  %1038 = vmatprep.subr.mxu0 0.0
  %1039 = vmatpush1.xpose.msra.mxu0 0.0
  %1040 = vmatprep.subr.mxu0 0.0
  %1041 = vmatpush1.xpose.msra.mxu0 0.0
  %1042 = vmatprep.subr.mxu0 0.0
  %1043 = vmatpush1.xpose.msra.mxu0 0.0
  %1044 = vmatprep.subr.mxu0 0.0
  %1045 = vmatpush1.xpose.msra.mxu0 0.0
  %1046 = vmatprep.subr.mxu0 0.0
  %1047 = vmatpush1.xpose.msra.mxu0 0.0
  %1048 = vmatprep.subr.mxu0 0.0
  %1049 = vmatpush1.xpose.msra.mxu0 0.0
  %1050 = vmatprep.subr.mxu0 0.0
  %1051 = vmatpush1.xpose.msra.mxu0 0.0
  %1052 = vmatprep.subr.mxu0 0.0
  %1053 = vmatpush1.xpose.msra.mxu0 0.0
  %1054 = vmatprep.subr.mxu0 0.0
  %1055 = vmatpush1.xpose.msra.mxu0 0.0
  %1056 = vmatprep.subr.mxu0 0.0
  %1057 = vmatpush1.xpose.msra.mxu0 0.0
  %1058 = vmatprep.subr.mxu0 0.0
  %1059 = vmatpush1.xpose.msra.mxu0 0.0
  %1060 = vmatprep.subr.mxu0 0.0
  %1061 = vmatpush1.xpose.msra.mxu0 0.0
  %1062 = vmatprep.subr.mxu0 0.0
  %1063 = vmatpush1.xpose.msra.mxu0 0.0
  %1064 = vmatprep.subr.mxu0 0.0
  %1065 = vmatpush1.xpose.msra.mxu0 0.0
  %1066 = vmatprep.subr.mxu0 0.0
  %1067 = vmatpush1.xpose.msra.mxu0 0.0
  %1068 = vmatprep.subr.mxu0 0.0
  %1069 = vmatpush1.xpose.msra.mxu0 0.0
  %1070 = vmatprep.subr.mxu0 0.0
  %1071 = vmatpush1.xpose.msra.mxu0 0.0
  %1072 = vmatprep.subr.mxu0 0.0
  %1073 = vmatpush1.xpose.msra.mxu0 0.0
  %1074 = vmatprep.subr.mxu0 0.0
  %1075 = vmatpush1.xpose.msra.mxu0 0.0
  %1076 = vmatprep.subr.mxu0 0.0
  %1077 = vmatpush1.xpose.msra.mxu0 0.0
  %1078 = vmatprep.subr.mxu0 0.0
  %1079 = vmatpush1.xpose.msra.mxu0 0.0
  %1080 = vmatprep.subr.mxu0 0.0
  %1081 = vmatpush1.xpose.msra.mxu0 0.0
  %1082 = vmatprep.subr.mxu0 0.0
  %1083 = vmatpush1.xpose.msra.mxu0 0.0
  %1084 = vmatprep.subr.mxu0 0.0
  %1085 = vmatpush1.xpose.msra.mxu0 0.0
  %1086 = vmatprep.subr.mxu0 0.0
  %1087 = vmatpush1.xpose.msra.mxu0 0.0
  %1088 = vmatprep.subr.mxu0 0.0
  %1089 = vmatpush1.xpose.msra.mxu0 0.0
  %1090 = vmatprep.subr.mxu0 0.0
  %1091 = vmatpush1.xpose.msra.mxu0 0.0
  %1092 = vmatprep.subr.mxu0 0.0
  %1093 = vmatpush1.xpose.msra.mxu0 0.0
  %1094 = vmatprep.subr.mxu0 0.0
  %1095 = vmatpush1.xpose.msra.mxu0 0.0
  %1096 = vmatprep.subr.mxu0 0.0
  %1097 = vmatpush1.xpose.msra.mxu0 0.0
  %1098 = vmatprep.mubr.f32.mxu0 0.0
  %1099 = vmatmul.mubr.f32.gmra.mrb[0].mxu0 %v1030
  %v1100 = vpop.f32.mrb[0].mxu0
  %v1101 = vadd.f32 0.0, %v1100
  %v1102 = vpop.f32.mrb[0].mxu0
  %1103 = vdwg.mxu0
  %v1104 = vmul.f32 %v1101, 0.35355338
  %v1105 = vadd.f32 %v1104, %v55
  %v1106 = vsel %vm175, %v1105, -inf
  %1107 = vmax.xlane.f32.xlu0 %v1106
  %v1108 = vpop.xlane.xlu0 %1107
  %v1109 = vsub.f32 %v1105, %v1108
  %v1110 = vmul.f32 %v1109, 1.442695
  %v1111 = vpow.pop %v1110
  %v1112 = vsel %vm175, %v1111, 0.0
  %1113 = vadd.xlane.f32.xlu0 %v1112
  %v1114 = vpop.xlane.xlu0 %1113
  %v1115 = vrcp.pop %v1114
  %v1116 = vmul.f32 %v1111, %v1115
  %1117 = vrot.lane.b32.xlu0 %v169, 56
  %v1118 = vpop.permute.xlu0 %1117
  %v1121 = vsel %vm175, %v1116, 0
  %1123 = vmatprep.subr.mxu0 0.0
  %1124 = vmatpush1.msra.mxu0 %v1118
  %1125 = vmatprep.subr.mxu0 0.0
  %1126 = vmatpush1.msra.mxu0 0.0
  %1127 = vmatprep.subr.mxu0 0.0
  %1128 = vmatpush1.msra.mxu0 0.0
  %1129 = vmatprep.subr.mxu0 0.0
  %1130 = vmatpush1.msra.mxu0 0.0
  %1131 = vmatprep.subr.mxu0 0.0
  %1132 = vmatpush1.msra.mxu0 0.0
  %1133 = vmatprep.subr.mxu0 0.0
  %1134 = vmatpush1.msra.mxu0 0.0
  %1135 = vmatprep.subr.mxu0 0.0
  %1136 = vmatpush1.msra.mxu0 0.0
  %1137 = vmatprep.subr.mxu0 0.0
  %1138 = vmatpush1.msra.mxu0 0.0
  %1139 = vmatprep.subr.mxu0 0.0
  %1140 = vmatpush1.msra.mxu0 0.0
  %1141 = vmatprep.subr.mxu0 0.0
  %1142 = vmatpush1.msra.mxu0 0.0
  %1143 = vmatprep.subr.mxu0 0.0
  %1144 = vmatpush1.msra.mxu0 0.0
  %1145 = vmatprep.subr.mxu0 0.0
  %1146 = vmatpush1.msra.mxu0 0.0
  %1147 = vmatprep.subr.mxu0 0.0
  %1148 = vmatpush1.msra.mxu0 0.0
  %1149 = vmatprep.subr.mxu0 0.0
  %1150 = vmatpush1.msra.mxu0 0.0
  %1151 = vmatprep.subr.mxu0 0.0
  %1152 = vmatpush1.msra.mxu0 0.0
  %1153 = vmatprep.subr.mxu0 0.0
  %1154 = vmatpush1.msra.mxu0 0.0
  %1155 = vmatprep.subr.mxu0 0.0
  %1156 = vmatpush1.msra.mxu0 0.0
  %1157 = vmatprep.subr.mxu0 0.0
  %1158 = vmatpush1.msra.mxu0 0.0
  %1159 = vmatprep.subr.mxu0 0.0
  %1160 = vmatpush1.msra.mxu0 0.0
  %1161 = vmatprep.subr.mxu0 0.0
  %1162 = vmatpush1.msra.mxu0 0.0
  %1163 = vmatprep.subr.mxu0 0.0
  %1164 = vmatpush1.msra.mxu0 0.0
  %1165 = vmatprep.subr.mxu0 0.0
  %1166 = vmatpush1.msra.mxu0 0.0
  %1167 = vmatprep.subr.mxu0 0.0
  %1168 = vmatpush1.msra.mxu0 0.0
  %1169 = vmatprep.subr.mxu0 0.0
  %1170 = vmatpush1.msra.mxu0 0.0
  %1171 = vmatprep.subr.mxu0 0.0
  %1172 = vmatpush1.msra.mxu0 0.0
  %1173 = vmatprep.subr.mxu0 0.0
  %1174 = vmatpush1.msra.mxu0 0.0
  %1175 = vmatprep.subr.mxu0 0.0
  %1176 = vmatpush1.msra.mxu0 0.0
  %1177 = vmatprep.subr.mxu0 0.0
  %1178 = vmatpush1.msra.mxu0 0.0
  %1179 = vmatprep.subr.mxu0 0.0
  %1180 = vmatpush1.msra.mxu0 0.0
  %1181 = vmatprep.subr.mxu0 0.0
  %1182 = vmatpush1.msra.mxu0 0.0
  %1183 = vmatprep.subr.mxu0 0.0
  %1184 = vmatpush1.msra.mxu0 0.0
  %1185 = vmatprep.subr.mxu0 0.0
  %1186 = vmatpush1.msra.mxu0 0.0
  %1187 = vmatprep.mubr.f32.mxu0 0.0
  %1188 = vmatmul.mubr.f32.gmra.mrb[0].mxu0 %v1121
  %v1189 = vpop.f32.mrb[0].mxu0
  %v1190 = vadd.f32 0.0, %v1189
  %v1191 = vpop.f32.mrb[0].mxu0
  %1192 = vdwg.mxu0
  %1194 = vrot.lane.b32.xlu0 %v1190, 8
  %v1195 = vpop.permute.xlu0 %1194
  %1197 = vst.msk [vmem:[#allocation2 + $0x8] sm:$0xff] %vm511, %v1195
  %1198 = vrot.lane.b32.xlu0 %v169, 112
  %v1199 = vpop.permute.xlu0 %1198
  %1200 = vrot.lane.b32.xlu0 %v169, 80
  %v1201 = vpop.permute.xlu0 %1200
  %v1202 = vsel %vm175, %v1199, 0
  %v1204 = vsel %vm175, %v1201, 0
  %1206 = vmatprep.subr.mxu0 0.0
  %1207 = vmatpush1.xpose.msra.mxu0 %v1204
  %1208 = vmatprep.subr.mxu0 0.0
  %1209 = vmatpush1.xpose.msra.mxu0 0.0
  %1210 = vmatprep.subr.mxu0 0.0
  %1211 = vmatpush1.xpose.msra.mxu0 0.0
  %1212 = vmatprep.subr.mxu0 0.0
  %1213 = vmatpush1.xpose.msra.mxu0 0.0
  %1214 = vmatprep.subr.mxu0 0.0
  %1215 = vmatpush1.xpose.msra.mxu0 0.0
  %1216 = vmatprep.subr.mxu0 0.0
  %1217 = vmatpush1.xpose.msra.mxu0 0.0
  %1218 = vmatprep.subr.mxu0 0.0
  %1219 = vmatpush1.xpose.msra.mxu0 0.0
  %1220 = vmatprep.subr.mxu0 0.0
  %1221 = vmatpush1.xpose.msra.mxu0 0.0
  %1222 = vmatprep.subr.mxu0 0.0
  %1223 = vmatpush1.xpose.msra.mxu0 0.0
  %1224 = vmatprep.subr.mxu0 0.0
  %1225 = vmatpush1.xpose.msra.mxu0 0.0
  %1226 = vmatprep.subr.mxu0 0.0
  %1227 = vmatpush1.xpose.msra.mxu0 0.0
  %1228 = vmatprep.subr.mxu0 0.0
  %1229 = vmatpush1.xpose.msra.mxu0 0.0
  %1230 = vmatprep.subr.mxu0 0.0
  %1231 = vmatpush1.xpose.msra.mxu0 0.0
  %1232 = vmatprep.subr.mxu0 0.0
  %1233 = vmatpush1.xpose.msra.mxu0 0.0
  %1234 = vmatprep.subr.mxu0 0.0
  %1235 = vmatpush1.xpose.msra.mxu0 0.0
  %1236 = vmatprep.subr.mxu0 0.0
  %1237 = vmatpush1.xpose.msra.mxu0 0.0
  %1238 = vmatprep.subr.mxu0 0.0
  %1239 = vmatpush1.xpose.msra.mxu0 0.0
  %1240 = vmatprep.subr.mxu0 0.0
  %1241 = vmatpush1.xpose.msra.mxu0 0.0
  %1242 = vmatprep.subr.mxu0 0.0
  %1243 = vmatpush1.xpose.msra.mxu0 0.0
  %1244 = vmatprep.subr.mxu0 0.0
  %1245 = vmatpush1.xpose.msra.mxu0 0.0
  %1246 = vmatprep.subr.mxu0 0.0
  %1247 = vmatpush1.xpose.msra.mxu0 0.0
  %1248 = vmatprep.subr.mxu0 0.0
  %1249 = vmatpush1.xpose.msra.mxu0 0.0
  %1250 = vmatprep.subr.mxu0 0.0
  %1251 = vmatpush1.xpose.msra.mxu0 0.0
  %1252 = vmatprep.subr.mxu0 0.0
  %1253 = vmatpush1.xpose.msra.mxu0 0.0
  %1254 = vmatprep.subr.mxu0 0.0
  %1255 = vmatpush1.xpose.msra.mxu0 0.0
  %1256 = vmatprep.subr.mxu0 0.0
  %1257 = vmatpush1.xpose.msra.mxu0 0.0
  %1258 = vmatprep.subr.mxu0 0.0
  %1259 = vmatpush1.xpose.msra.mxu0 0.0
  %1260 = vmatprep.subr.mxu0 0.0
  %1261 = vmatpush1.xpose.msra.mxu0 0.0
  %1262 = vmatprep.subr.mxu0 0.0
  %1263 = vmatpush1.xpose.msra.mxu0 0.0
  %1264 = vmatprep.subr.mxu0 0.0
  %1265 = vmatpush1.xpose.msra.mxu0 0.0
  %1266 = vmatprep.subr.mxu0 0.0
  %1267 = vmatpush1.xpose.msra.mxu0 0.0
  %1268 = vmatprep.subr.mxu0 0.0
  %1269 = vmatpush1.xpose.msra.mxu0 0.0
  %1270 = vmatprep.mubr.f32.mxu0 0.0
  %1271 = vmatmul.mubr.f32.gmra.mrb[0].mxu0 %v1202
  %v1272 = vpop.f32.mrb[0].mxu0
  %v1273 = vadd.f32 0.0, %v1272
  %v1274 = vpop.f32.mrb[0].mxu0
  %1275 = vdwg.mxu0
  %v1276 = vmul.f32 %v1273, 0.35355338
  %v1277 = vadd.f32 %v1276, %v55
  %v1278 = vsel %vm175, %v1277, -inf
  %1279 = vmax.xlane.f32.xlu0 %v1278
  %v1280 = vpop.xlane.xlu0 %1279
  %v1281 = vsub.f32 %v1277, %v1280
  %v1282 = vmul.f32 %v1281, 1.442695
  %v1283 = vpow.pop %v1282
  %v1284 = vsel %vm175, %v1283, 0.0
  %1285 = vadd.xlane.f32.xlu0 %v1284
  %v1286 = vpop.xlane.xlu0 %1285
  %v1287 = vrcp.pop %v1286
  %v1288 = vmul.f32 %v1283, %v1287
  %1289 = vrot.lane.b32.xlu0 %v169, 48
  %v1290 = vpop.permute.xlu0 %1289
  %v1293 = vsel %vm175, %v1288, 0
  %1295 = vmatprep.subr.mxu0 0.0
  %1296 = vmatpush1.msra.mxu0 %v1290
  %1297 = vmatprep.subr.mxu0 0.0
  %1298 = vmatpush1.msra.mxu0 0.0
  %1299 = vmatprep.subr.mxu0 0.0
  %1300 = vmatpush1.msra.mxu0 0.0
  %1301 = vmatprep.subr.mxu0 0.0
  %1302 = vmatpush1.msra.mxu0 0.0
  %1303 = vmatprep.subr.mxu0 0.0
  %1304 = vmatpush1.msra.mxu0 0.0
  %1305 = vmatprep.subr.mxu0 0.0
  %1306 = vmatpush1.msra.mxu0 0.0
  %1307 = vmatprep.subr.mxu0 0.0
  %1308 = vmatpush1.msra.mxu0 0.0
  %1309 = vmatprep.subr.mxu0 0.0
  %1310 = vmatpush1.msra.mxu0 0.0
  %1311 = vmatprep.subr.mxu0 0.0
  %1312 = vmatpush1.msra.mxu0 0.0
  %1313 = vmatprep.subr.mxu0 0.0
  %1314 = vmatpush1.msra.mxu0 0.0
  %1315 = vmatprep.subr.mxu0 0.0
  %1316 = vmatpush1.msra.mxu0 0.0
  %1317 = vmatprep.subr.mxu0 0.0
  %1318 = vmatpush1.msra.mxu0 0.0
  %1319 = vmatprep.subr.mxu0 0.0
  %1320 = vmatpush1.msra.mxu0 0.0
  %1321 = vmatprep.subr.mxu0 0.0
  %1322 = vmatpush1.msra.mxu0 0.0
  %1323 = vmatprep.subr.mxu0 0.0
  %1324 = vmatpush1.msra.mxu0 0.0
  %1325 = vmatprep.subr.mxu0 0.0
  %1326 = vmatpush1.msra.mxu0 0.0
  %1327 = vmatprep.subr.mxu0 0.0
  %1328 = vmatpush1.msra.mxu0 0.0
  %1329 = vmatprep.subr.mxu0 0.0
  %1330 = vmatpush1.msra.mxu0 0.0
  %1331 = vmatprep.subr.mxu0 0.0
  %1332 = vmatpush1.msra.mxu0 0.0
  %1333 = vmatprep.subr.mxu0 0.0
  %1334 = vmatpush1.msra.mxu0 0.0
  %1335 = vmatprep.subr.mxu0 0.0
  %1336 = vmatpush1.msra.mxu0 0.0
  %1337 = vmatprep.subr.mxu0 0.0
  %1338 = vmatpush1.msra.mxu0 0.0
  %1339 = vmatprep.subr.mxu0 0.0
  %1340 = vmatpush1.msra.mxu0 0.0
  %1341 = vmatprep.subr.mxu0 0.0
  %1342 = vmatpush1.msra.mxu0 0.0
  %1343 = vmatprep.subr.mxu0 0.0
  %1344 = vmatpush1.msra.mxu0 0.0
  %1345 = vmatprep.subr.mxu0 0.0
  %1346 = vmatpush1.msra.mxu0 0.0
  %1347 = vmatprep.subr.mxu0 0.0
  %1348 = vmatpush1.msra.mxu0 0.0
  %1349 = vmatprep.subr.mxu0 0.0
  %1350 = vmatpush1.msra.mxu0 0.0
  %1351 = vmatprep.subr.mxu0 0.0
  %1352 = vmatpush1.msra.mxu0 0.0
  %1353 = vmatprep.subr.mxu0 0.0
  %1354 = vmatpush1.msra.mxu0 0.0
  %1355 = vmatprep.subr.mxu0 0.0
  %1356 = vmatpush1.msra.mxu0 0.0
  %1357 = vmatprep.subr.mxu0 0.0
  %1358 = vmatpush1.msra.mxu0 0.0
  %1359 = vmatprep.mubr.f32.mxu0 0.0
  %1360 = vmatmul.mubr.f32.gmra.mrb[0].mxu0 %v1293
  %v1361 = vpop.f32.mrb[0].mxu0
  %v1362 = vadd.f32 0.0, %v1361
  %v1363 = vpop.f32.mrb[0].mxu0
  %1364 = vdwg.mxu0
  %1366 = vrot.lane.b32.xlu0 %v1362, 16
  %v1367 = vpop.permute.xlu0 %1366
  %1369 = vst.msk [vmem:[#allocation2 + $0x8] sm:$0xff] %vm684, %v1367
  %1370 = vrot.lane.b32.xlu0 %v169, 104
  %v1371 = vpop.permute.xlu0 %1370
  %1372 = vrot.lane.b32.xlu0 %v169, 72
  %v1373 = vpop.permute.xlu0 %1372
  %v1374 = vsel %vm175, %v1371, 0
  %v1376 = vsel %vm175, %v1373, 0
  %1378 = vmatprep.subr.mxu0 0.0
  %1379 = vmatpush1.xpose.msra.mxu0 %v1376
  %1380 = vmatprep.subr.mxu0 0.0
  %1381 = vmatpush1.xpose.msra.mxu0 0.0
  %1382 = vmatprep.subr.mxu0 0.0
  %1383 = vmatpush1.xpose.msra.mxu0 0.0
  %1384 = vmatprep.subr.mxu0 0.0
  %1385 = vmatpush1.xpose.msra.mxu0 0.0
  %1386 = vmatprep.subr.mxu0 0.0
  %1387 = vmatpush1.xpose.msra.mxu0 0.0
  %1388 = vmatprep.subr.mxu0 0.0
  %1389 = vmatpush1.xpose.msra.mxu0 0.0
  %1390 = vmatprep.subr.mxu0 0.0
  %1391 = vmatpush1.xpose.msra.mxu0 0.0
  %1392 = vmatprep.subr.mxu0 0.0
  %1393 = vmatpush1.xpose.msra.mxu0 0.0
  %1394 = vmatprep.subr.mxu0 0.0
  %1395 = vmatpush1.xpose.msra.mxu0 0.0
  %1396 = vmatprep.subr.mxu0 0.0
  %1397 = vmatpush1.xpose.msra.mxu0 0.0
  %1398 = vmatprep.subr.mxu0 0.0
  %1399 = vmatpush1.xpose.msra.mxu0 0.0
  %1400 = vmatprep.subr.mxu0 0.0
  %1401 = vmatpush1.xpose.msra.mxu0 0.0
  %1402 = vmatprep.subr.mxu0 0.0
  %1403 = vmatpush1.xpose.msra.mxu0 0.0
  %1404 = vmatprep.subr.mxu0 0.0
  %1405 = vmatpush1.xpose.msra.mxu0 0.0
  %1406 = vmatprep.subr.mxu0 0.0
  %1407 = vmatpush1.xpose.msra.mxu0 0.0
  %1408 = vmatprep.subr.mxu0 0.0
  %1409 = vmatpush1.xpose.msra.mxu0 0.0
  %1410 = vmatprep.subr.mxu0 0.0
  %1411 = vmatpush1.xpose.msra.mxu0 0.0
  %1412 = vmatprep.subr.mxu0 0.0
  %1413 = vmatpush1.xpose.msra.mxu0 0.0
  %1414 = vmatprep.subr.mxu0 0.0
  %1415 = vmatpush1.xpose.msra.mxu0 0.0
  %1416 = vmatprep.subr.mxu0 0.0
  %1417 = vmatpush1.xpose.msra.mxu0 0.0
  %1418 = vmatprep.subr.mxu0 0.0
  %1419 = vmatpush1.xpose.msra.mxu0 0.0
  %1420 = vmatprep.subr.mxu0 0.0
  %1421 = vmatpush1.xpose.msra.mxu0 0.0
  %1422 = vmatprep.subr.mxu0 0.0
  %1423 = vmatpush1.xpose.msra.mxu0 0.0
  %1424 = vmatprep.subr.mxu0 0.0
  %1425 = vmatpush1.xpose.msra.mxu0 0.0
  %1426 = vmatprep.subr.mxu0 0.0
  %1427 = vmatpush1.xpose.msra.mxu0 0.0
  %1428 = vmatprep.subr.mxu0 0.0
  %1429 = vmatpush1.xpose.msra.mxu0 0.0
  %1430 = vmatprep.subr.mxu0 0.0
  %1431 = vmatpush1.xpose.msra.mxu0 0.0
  %1432 = vmatprep.subr.mxu0 0.0
  %1433 = vmatpush1.xpose.msra.mxu0 0.0
  %1434 = vmatprep.subr.mxu0 0.0
  %1435 = vmatpush1.xpose.msra.mxu0 0.0
  %1436 = vmatprep.subr.mxu0 0.0
  %1437 = vmatpush1.xpose.msra.mxu0 0.0
  %1438 = vmatprep.subr.mxu0 0.0
  %1439 = vmatpush1.xpose.msra.mxu0 0.0
  %1440 = vmatprep.subr.mxu0 0.0
  %1441 = vmatpush1.xpose.msra.mxu0 0.0
  %1442 = vmatprep.mubr.f32.mxu0 0.0
  %1443 = vmatmul.mubr.f32.gmra.mrb[0].mxu0 %v1374
  %v1444 = vpop.f32.mrb[0].mxu0
  %v1445 = vadd.f32 0.0, %v1444
  %v1446 = vpop.f32.mrb[0].mxu0
  %1447 = vdwg.mxu0
  %v1448 = vmul.f32 %v1445, 0.35355338
  %v1449 = vadd.f32 %v1448, %v55
  %v1450 = vsel %vm175, %v1449, -inf
  %1451 = vmax.xlane.f32.xlu0 %v1450
  %v1452 = vpop.xlane.xlu0 %1451
  %v1453 = vsub.f32 %v1449, %v1452
  %v1454 = vmul.f32 %v1453, 1.442695
  %v1455 = vpow.pop %v1454
  %v1456 = vsel %vm175, %v1455, 0.0
  %1457 = vadd.xlane.f32.xlu0 %v1456
  %v1458 = vpop.xlane.xlu0 %1457
  %v1459 = vrcp.pop %v1458
  %v1460 = vmul.f32 %v1455, %v1459
  %1461 = vrot.lane.b32.xlu0 %v169, 40
  %v1462 = vpop.permute.xlu0 %1461
  %v1465 = vsel %vm175, %v1460, 0
  %1467 = vmatprep.subr.mxu0 0.0
  %1468 = vmatpush1.msra.mxu0 %v1462
  %1469 = vmatprep.subr.mxu0 0.0
  %1470 = vmatpush1.msra.mxu0 0.0
  %1471 = vmatprep.subr.mxu0 0.0
  %1472 = vmatpush1.msra.mxu0 0.0
  %1473 = vmatprep.subr.mxu0 0.0
  %1474 = vmatpush1.msra.mxu0 0.0
  %1475 = vmatprep.subr.mxu0 0.0
  %1476 = vmatpush1.msra.mxu0 0.0
  %1477 = vmatprep.subr.mxu0 0.0
  %1478 = vmatpush1.msra.mxu0 0.0
  %1479 = vmatprep.subr.mxu0 0.0
  %1480 = vmatpush1.msra.mxu0 0.0
  %1481 = vmatprep.subr.mxu0 0.0
  %1482 = vmatpush1.msra.mxu0 0.0
  %1483 = vmatprep.subr.mxu0 0.0
  %1484 = vmatpush1.msra.mxu0 0.0
  %1485 = vmatprep.subr.mxu0 0.0
  %1486 = vmatpush1.msra.mxu0 0.0
  %1487 = vmatprep.subr.mxu0 0.0
  %1488 = vmatpush1.msra.mxu0 0.0
  %1489 = vmatprep.subr.mxu0 0.0
  %1490 = vmatpush1.msra.mxu0 0.0
  %1491 = vmatprep.subr.mxu0 0.0
  %1492 = vmatpush1.msra.mxu0 0.0
  %1493 = vmatprep.subr.mxu0 0.0
  %1494 = vmatpush1.msra.mxu0 0.0
  %1495 = vmatprep.subr.mxu0 0.0
  %1496 = vmatpush1.msra.mxu0 0.0
  %1497 = vmatprep.subr.mxu0 0.0
  %1498 = vmatpush1.msra.mxu0 0.0
  %1499 = vmatprep.subr.mxu0 0.0
  %1500 = vmatpush1.msra.mxu0 0.0
  %1501 = vmatprep.subr.mxu0 0.0
  %1502 = vmatpush1.msra.mxu0 0.0
  %1503 = vmatprep.subr.mxu0 0.0
  %1504 = vmatpush1.msra.mxu0 0.0
  %1505 = vmatprep.subr.mxu0 0.0
  %1506 = vmatpush1.msra.mxu0 0.0
  %1507 = vmatprep.subr.mxu0 0.0
  %1508 = vmatpush1.msra.mxu0 0.0
  %1509 = vmatprep.subr.mxu0 0.0
  %1510 = vmatpush1.msra.mxu0 0.0
  %1511 = vmatprep.subr.mxu0 0.0
  %1512 = vmatpush1.msra.mxu0 0.0
  %1513 = vmatprep.subr.mxu0 0.0
  %1514 = vmatpush1.msra.mxu0 0.0
  %1515 = vmatprep.subr.mxu0 0.0
  %1516 = vmatpush1.msra.mxu0 0.0
  %1517 = vmatprep.subr.mxu0 0.0
  %1518 = vmatpush1.msra.mxu0 0.0
  %1519 = vmatprep.subr.mxu0 0.0
  %1520 = vmatpush1.msra.mxu0 0.0
  %1521 = vmatprep.subr.mxu0 0.0
  %1522 = vmatpush1.msra.mxu0 0.0
  %1523 = vmatprep.subr.mxu0 0.0
  %1524 = vmatpush1.msra.mxu0 0.0
  %1525 = vmatprep.subr.mxu0 0.0
  %1526 = vmatpush1.msra.mxu0 0.0
  %1527 = vmatprep.subr.mxu0 0.0
  %1528 = vmatpush1.msra.mxu0 0.0
  %1529 = vmatprep.subr.mxu0 0.0
  %1530 = vmatpush1.msra.mxu0 0.0
  %1531 = vmatprep.mubr.f32.mxu0 0.0
  %1532 = vmatmul.mubr.f32.gmra.mrb[0].mxu0 %v1465
  %v1533 = vpop.f32.mrb[0].mxu0
  %v1534 = vadd.f32 0.0, %v1533
  %v1535 = vpop.f32.mrb[0].mxu0
  %1536 = vdwg.mxu0
  %1538 = vrot.lane.b32.xlu0 %v1534, 24
  %v1539 = vpop.permute.xlu0 %1538
  %1541 = vst.msk [vmem:[#allocation2 + $0x8] sm:$0xff] %vm857, %v1539
  %v1542 = vld [vmem:[#allocation2] sm:$0xff]
  %v1543 = vld [vmem:[#allocation2 + $0x8] sm:$0xff]
  %v1545 = vlaneseq
  %v1546 = vshrl.u32 %v1545, 7
  %v1547 = vsub.s32 0, %v1546
  %v1548 = vrot.slane %v65, %v1547
  %v1551 = vsel %vm90, %v1542, 0
  %v1554 = vsel %vm90, %v1543, 0
  %1556 = vmatprep.subr.mxu0 0.0
  %1557 = vmatpush1.msra.mxu0 %v61
  %1558 = vmatprep.subr.mxu0 0.0
  %1559 = vmatpush1.msra.mxu0 %v62
  %1560 = vmatprep.subr.mxu0 0.0
  %1561 = vmatpush1.msra.mxu0 %v63
  %1562 = vmatprep.subr.mxu0 0.0
  %1563 = vmatpush1.msra.mxu0 %v64
  %1564 = vmatprep.subr.mxu0 0.0
  %1565 = vmatpush1.msra.mxu0 0.0
  %1566 = vmatprep.subr.mxu0 0.0
  %1567 = vmatpush1.msra.mxu0 0.0
  %1568 = vmatprep.subr.mxu0 0.0
  %1569 = vmatpush1.msra.mxu0 0.0
  %1570 = vmatprep.subr.mxu0 0.0
  %1571 = vmatpush1.msra.mxu0 0.0
  %1572 = vmatprep.subr.mxu0 0.0
  %1573 = vmatpush1.msra.mxu0 0.0
  %1574 = vmatprep.subr.mxu0 0.0
  %1575 = vmatpush1.msra.mxu0 0.0
  %1576 = vmatprep.subr.mxu0 0.0
  %1577 = vmatpush1.msra.mxu0 0.0
  %1578 = vmatprep.subr.mxu0 0.0
  %1579 = vmatpush1.msra.mxu0 0.0
  %1580 = vmatprep.subr.mxu0 0.0
  %1581 = vmatpush1.msra.mxu0 0.0
  %1582 = vmatprep.subr.mxu0 0.0
  %1583 = vmatpush1.msra.mxu0 0.0
  %1584 = vmatprep.subr.mxu0 0.0
  %1585 = vmatpush1.msra.mxu0 0.0
  %1586 = vmatprep.subr.mxu0 0.0
  %1587 = vmatpush1.msra.mxu0 0.0
  %1588 = vmatprep.subr.mxu0 0.0
  %1589 = vmatpush1.msra.mxu0 0.0
  %1590 = vmatprep.subr.mxu0 0.0
  %1591 = vmatpush1.msra.mxu0 0.0
  %1592 = vmatprep.subr.mxu0 0.0
  %1593 = vmatpush1.msra.mxu0 0.0
  %1594 = vmatprep.subr.mxu0 0.0
  %1595 = vmatpush1.msra.mxu0 0.0
  %1596 = vmatprep.subr.mxu0 0.0
  %1597 = vmatpush1.msra.mxu0 0.0
  %1598 = vmatprep.subr.mxu0 0.0
  %1599 = vmatpush1.msra.mxu0 0.0
  %1600 = vmatprep.subr.mxu0 0.0
  %1601 = vmatpush1.msra.mxu0 0.0
  %1602 = vmatprep.subr.mxu0 0.0
  %1603 = vmatpush1.msra.mxu0 0.0
  %1604 = vmatprep.subr.mxu0 0.0
  %1605 = vmatpush1.msra.mxu0 0.0
  %1606 = vmatprep.subr.mxu0 0.0
  %1607 = vmatpush1.msra.mxu0 0.0
  %1608 = vmatprep.subr.mxu0 0.0
  %1609 = vmatpush1.msra.mxu0 0.0
  %1610 = vmatprep.subr.mxu0 0.0
  %1611 = vmatpush1.msra.mxu0 0.0
  %1612 = vmatprep.subr.mxu0 0.0
  %1613 = vmatpush1.msra.mxu0 0.0
  %1614 = vmatprep.subr.mxu0 0.0
  %1615 = vmatpush1.msra.mxu0 0.0
  %1616 = vmatprep.subr.mxu0 0.0
  %1617 = vmatpush1.msra.mxu0 0.0
  %1618 = vmatprep.subr.mxu0 0.0
  %1619 = vmatpush1.msra.mxu0 0.0
  %1620 = vmatprep.mubr.f32.mxu0 0.0
  %1621 = vmatmul.mubr.f32.gmra.mrb[0].mxu0 %v1551
  %v1622 = vpop.f32.mrb[0].mxu0
  %v1623 = vadd.f32 %v1548, %v1622
  %v1624 = vpop.f32.mrb[0].mxu0
  %1625 = vmatprep.mubr.f32.mxu0 0.0
  %1626 = vmatmul.mubr.f32.gmra.mrb[0].mxu0 %v1554
  %v1627 = vpop.f32.mrb[0].mxu0
  %v1628 = vadd.f32 %v1548, %v1627
  %v1629 = vpop.f32.mrb[0].mxu0
  %1630 = vdwg.mxu0
  %v1631 = vadd.f32 %v53, %v1623
  %v1632 = vadd.f32 %v54, %v1628
  %v1633 = vsel %vm90, %v1631, 0.0
  %1634 = vadd.xlane.f32.xlu0 %v1633
  %v1635 = vpop.xlane.xlu0 %1634
  %v1636 = vsel %vm90, %v1632, 0.0
  %1637 = vadd.xlane.f32.xlu0 %v1636
  %v1638 = vpop.xlane.xlu0 %1637
  %v1639 = vrcp.pop 32.0
  %v1640 = vmul.f32 %v1635, %v1639
  %v1641 = vmul.f32 %v1638, %v1639
  %v1642 = vsub.f32 %v1631, %v1640
  %v1643 = vsub.f32 %v1632, %v1641
  %v1644 = vmul.f32 %v1642, %v1642
  %v1645 = vmul.f32 %v1643, %v1643
  %v1646 = vsel %vm90, %v1644, 0.0
  %1647 = vadd.xlane.f32.xlu0 %v1646
  %v1648 = vpop.xlane.xlu0 %1647
  %v1649 = vsel %vm90, %v1645, 0.0
  %1650 = vadd.xlane.f32.xlu0 %v1649
  %v1651 = vpop.xlane.xlu0 %1650
  %v1652 = vmul.f32 %v1648, %v1639
  %v1653 = vmul.f32 %v1651, %v1639
  %v1654 = vadd.f32 %v1652, 1e-05
  %v1655 = vadd.f32 %v1653, 1e-05
  %v1656 = vrsqrt.pop %v1654
  %v1657 = vrsqrt.pop %v1655
  %v1658 = vmul.f32 %v1642, %v1656
  %v1659 = vmul.f32 %v1643, %v1657
  %v1661 = vlaneseq
  %v1662 = vshrl.u32 %v1661, 7
  %v1663 = vsub.s32 0, %v1662
  %v1664 = vrot.slane %v80, %v1663
  %v1666 = vmul.f32 %v1658, %v1664
  %v1667 = vmul.f32 %v1659, %v1664
  %v1669 = vlaneseq
  %v1670 = vshrl.u32 %v1669, 7
  %v1671 = vsub.s32 0, %v1670
  %v1672 = vrot.slane %v81, %v1671
  %v1674 = vadd.f32 %v1666, %v1672
  %v1675 = vadd.f32 %v1667, %v1672
  %v1677 = vlaneseq
  %v1678 = vshrl.u32 %v1677, 7
  %v1679 = vsub.s32 0, %v1678
  %v1680 = vrot.slane %v70, %v1679
  %v1683 = vsel %vm90, %v1674, 0
  %v1686 = vsel %vm90, %v1675, 0
  %1688 = vmatprep.subr.mxu0 0.0
  %1689 = vmatpush1.msra.mxu0 %v66
  %1690 = vmatprep.subr.mxu0 0.0
  %1691 = vmatpush1.msra.mxu0 %v67
  %1692 = vmatprep.subr.mxu0 0.0
  %1693 = vmatpush1.msra.mxu0 %v68
  %1694 = vmatprep.subr.mxu0 0.0
  %1695 = vmatpush1.msra.mxu0 %v69
  %1696 = vmatprep.subr.mxu0 0.0
  %1697 = vmatpush1.msra.mxu0 0.0
  %1698 = vmatprep.subr.mxu0 0.0
  %1699 = vmatpush1.msra.mxu0 0.0
  %1700 = vmatprep.subr.mxu0 0.0
  %1701 = vmatpush1.msra.mxu0 0.0
  %1702 = vmatprep.subr.mxu0 0.0
  %1703 = vmatpush1.msra.mxu0 0.0
  %1704 = vmatprep.subr.mxu0 0.0
  %1705 = vmatpush1.msra.mxu0 0.0
  %1706 = vmatprep.subr.mxu0 0.0
  %1707 = vmatpush1.msra.mxu0 0.0
  %1708 = vmatprep.subr.mxu0 0.0
  %1709 = vmatpush1.msra.mxu0 0.0
  %1710 = vmatprep.subr.mxu0 0.0
  %1711 = vmatpush1.msra.mxu0 0.0
  %1712 = vmatprep.subr.mxu0 0.0
  %1713 = vmatpush1.msra.mxu0 0.0
  %1714 = vmatprep.subr.mxu0 0.0
  %1715 = vmatpush1.msra.mxu0 0.0
  %1716 = vmatprep.subr.mxu0 0.0
  %1717 = vmatpush1.msra.mxu0 0.0
  %1718 = vmatprep.subr.mxu0 0.0
  %1719 = vmatpush1.msra.mxu0 0.0
  %1720 = vmatprep.subr.mxu0 0.0
  %1721 = vmatpush1.msra.mxu0 0.0
  %1722 = vmatprep.subr.mxu0 0.0
  %1723 = vmatpush1.msra.mxu0 0.0
  %1724 = vmatprep.subr.mxu0 0.0
  %1725 = vmatpush1.msra.mxu0 0.0
  %1726 = vmatprep.subr.mxu0 0.0
  %1727 = vmatpush1.msra.mxu0 0.0
  %1728 = vmatprep.subr.mxu0 0.0
  %1729 = vmatpush1.msra.mxu0 0.0
  %1730 = vmatprep.subr.mxu0 0.0
  %1731 = vmatpush1.msra.mxu0 0.0
  %1732 = vmatprep.subr.mxu0 0.0
  %1733 = vmatpush1.msra.mxu0 0.0
  %1734 = vmatprep.subr.mxu0 0.0
  %1735 = vmatpush1.msra.mxu0 0.0
  %1736 = vmatprep.subr.mxu0 0.0
  %1737 = vmatpush1.msra.mxu0 0.0
  %1738 = vmatprep.subr.mxu0 0.0
  %1739 = vmatpush1.msra.mxu0 0.0
  %1740 = vmatprep.subr.mxu0 0.0
  %1741 = vmatpush1.msra.mxu0 0.0
  %1742 = vmatprep.subr.mxu0 0.0
  %1743 = vmatpush1.msra.mxu0 0.0
  %1744 = vmatprep.subr.mxu0 0.0
  %1745 = vmatpush1.msra.mxu0 0.0
  %1746 = vmatprep.subr.mxu0 0.0
  %1747 = vmatpush1.msra.mxu0 0.0
  %1748 = vmatprep.subr.mxu0 0.0
  %1749 = vmatpush1.msra.mxu0 0.0
  %1750 = vmatprep.subr.mxu0 0.0
  %1751 = vmatpush1.msra.mxu0 0.0
  %1752 = vmatprep.mubr.f32.mxu0 0.0
  %1753 = vmatmul.mubr.f32.gmra.mrb[0].mxu0 %v1683
  %v1754 = vpop.f32.mrb[0].mxu0
  %v1755 = vadd.f32 %v1680, %v1754
  %v1756 = vpop.f32.mrb[0].mxu0
  %1757 = vmatprep.mubr.f32.mxu0 0.0
  %1758 = vmatmul.mubr.f32.gmra.mrb[0].mxu0 %v1686
  %v1759 = vpop.f32.mrb[0].mxu0
  %v1760 = vadd.f32 %v1680, %v1759
  %v1761 = vpop.f32.mrb[0].mxu0
  %1762 = vdwg.mxu0
  %v1763 = vmax.f32 %v1755, 0.0
  %v1764 = vmax.f32 %v1760, 0.0
  %v1766 = vlaneseq
  %v1767 = vshrl.u32 %v1766, 7
  %v1768 = vsub.s32 0, %v1767
  %v1769 = vrot.slane %v79, %v1768
  %vm1771 = vcmask 523264
  %v1773 = vsel %vm1771, %v1763, 0
  %v1776 = vsel %vm1771, %v1764, 0
  %1778 = vmatprep.subr.mxu0 0.0
  %1779 = vmatpush1.msra.mxu0 %v71
  %1780 = vmatprep.subr.mxu0 0.0
  %1781 = vmatpush1.msra.mxu0 %v72
  %1782 = vmatprep.subr.mxu0 0.0
  %1783 = vmatpush1.msra.mxu0 %v73
  %1784 = vmatprep.subr.mxu0 0.0
  %1785 = vmatpush1.msra.mxu0 %v74
  %1786 = vmatprep.subr.mxu0 0.0
  %1787 = vmatpush1.msra.mxu0 %v75
  %1788 = vmatprep.subr.mxu0 0.0
  %1789 = vmatpush1.msra.mxu0 %v76
  %1790 = vmatprep.subr.mxu0 0.0
  %1791 = vmatpush1.msra.mxu0 %v77
  %1792 = vmatprep.subr.mxu0 0.0
  %1793 = vmatpush1.msra.mxu0 %v78
  %1794 = vmatprep.subr.mxu0 0.0
  %1795 = vmatpush1.msra.mxu0 0.0
  %1796 = vmatprep.subr.mxu0 0.0
  %1797 = vmatpush1.msra.mxu0 0.0
  %1798 = vmatprep.subr.mxu0 0.0
  %1799 = vmatpush1.msra.mxu0 0.0
  %1800 = vmatprep.subr.mxu0 0.0
  %1801 = vmatpush1.msra.mxu0 0.0
  %1802 = vmatprep.subr.mxu0 0.0
  %1803 = vmatpush1.msra.mxu0 0.0
  %1804 = vmatprep.subr.mxu0 0.0
  %1805 = vmatpush1.msra.mxu0 0.0
  %1806 = vmatprep.subr.mxu0 0.0
  %1807 = vmatpush1.msra.mxu0 0.0
  %1808 = vmatprep.subr.mxu0 0.0
  %1809 = vmatpush1.msra.mxu0 0.0
  %1810 = vmatprep.subr.mxu0 0.0
  %1811 = vmatpush1.msra.mxu0 0.0
  %1812 = vmatprep.subr.mxu0 0.0
  %1813 = vmatpush1.msra.mxu0 0.0
  %1814 = vmatprep.subr.mxu0 0.0
  %1815 = vmatpush1.msra.mxu0 0.0
  %1816 = vmatprep.subr.mxu0 0.0
  %1817 = vmatpush1.msra.mxu0 0.0
  %1818 = vmatprep.subr.mxu0 0.0
  %1819 = vmatpush1.msra.mxu0 0.0
  %1820 = vmatprep.subr.mxu0 0.0
  %1821 = vmatpush1.msra.mxu0 0.0
  %1822 = vmatprep.subr.mxu0 0.0
  %1823 = vmatpush1.msra.mxu0 0.0
  %1824 = vmatprep.subr.mxu0 0.0
  %1825 = vmatpush1.msra.mxu0 0.0
  %1826 = vmatprep.subr.mxu0 0.0
  %1827 = vmatpush1.msra.mxu0 0.0
  %1828 = vmatprep.subr.mxu0 0.0
  %1829 = vmatpush1.msra.mxu0 0.0
  %1830 = vmatprep.subr.mxu0 0.0
  %1831 = vmatpush1.msra.mxu0 0.0
  %1832 = vmatprep.subr.mxu0 0.0
  %1833 = vmatpush1.msra.mxu0 0.0
  %1834 = vmatprep.subr.mxu0 0.0
  %1835 = vmatpush1.msra.mxu0 0.0
  %1836 = vmatprep.subr.mxu0 0.0
  %1837 = vmatpush1.msra.mxu0 0.0
  %1838 = vmatprep.subr.mxu0 0.0
  %1839 = vmatpush1.msra.mxu0 0.0
  %1840 = vmatprep.subr.mxu0 0.0
  %1841 = vmatpush1.msra.mxu0 0.0
  %1842 = vmatprep.mubr.f32.mxu0 0.0
  %1843 = vmatmul.mubr.f32.gmra.mrb[0].mxu0 %v1773
  %v1844 = vpop.f32.mrb[0].mxu0
  %v1845 = vadd.f32 %v1769, %v1844
  %v1846 = vpop.f32.mrb[0].mxu0
  %1847 = vmatprep.mubr.f32.mxu0 0.0
  %1848 = vmatmul.mubr.f32.gmra.mrb[0].mxu0 %v1776
  %v1849 = vpop.f32.mrb[0].mxu0
  %v1850 = vadd.f32 %v1769, %v1849
  %v1851 = vpop.f32.mrb[0].mxu0
  %1852 = vdwg.mxu0
  %v1853 = vadd.f32 %v1674, %v1845
  %v1854 = vadd.f32 %v1675, %v1850
  %v1855 = vsel %vm90, %v1853, 0.0
  %1856 = vadd.xlane.f32.xlu0 %v1855
  %v1857 = vpop.xlane.xlu0 %1856
  %v1858 = vsel %vm90, %v1854, 0.0
  %1859 = vadd.xlane.f32.xlu0 %v1858
  %v1860 = vpop.xlane.xlu0 %1859
  %v1861 = vmul.f32 %v1857, %v1639
  %v1862 = vmul.f32 %v1860, %v1639
  %v1863 = vsub.f32 %v1853, %v1861
  %v1864 = vsub.f32 %v1854, %v1862
  %v1865 = vmul.f32 %v1863, %v1863
  %v1866 = vmul.f32 %v1864, %v1864
  %v1867 = vsel %vm90, %v1865, 0.0
  %1868 = vadd.xlane.f32.xlu0 %v1867
  %v1869 = vpop.xlane.xlu0 %1868
  %v1870 = vsel %vm90, %v1866, 0.0
  %1871 = vadd.xlane.f32.xlu0 %v1870
  %v1872 = vpop.xlane.xlu0 %1871
  %v1873 = vmul.f32 %v1869, %v1639
  %v1874 = vmul.f32 %v1872, %v1639
  %v1875 = vadd.f32 %v1873, 1e-05
  %v1876 = vadd.f32 %v1874, 1e-05
  %v1877 = vrsqrt.pop %v1875
  %v1878 = vrsqrt.pop %v1876
  %v1879 = vmul.f32 %v1863, %v1877
  %v1880 = vmul.f32 %v1864, %v1878
  %v1882 = vlaneseq
  %v1883 = vshrl.u32 %v1882, 7
  %v1884 = vsub.s32 0, %v1883
  %v1885 = vrot.slane %v82, %v1884
  %v1887 = vmul.f32 %v1879, %v1885
  %v1888 = vmul.f32 %v1880, %v1885
  %v1890 = vlaneseq
  %v1891 = vshrl.u32 %v1890, 7
  %v1892 = vsub.s32 0, %v1891
  %v1893 = vrot.slane %v83, %v1892
  %v1895 = vadd.f32 %v1887, %v1893
  %v1896 = vadd.f32 %v1888, %v1893
  %s1897 = scalar_lea.vmem %s2, 32
  %v1898 = vld [vmem:[%s1897] sm:$0xff]
  %v1899 = vld [vmem:[%s1897 + $0x8] sm:$0xff]
  %v1900 = vld [vmem:[%s1897 + $0x10] sm:$0xff]
  %v1901 = vld [vmem:[%s1897 + $0x18] sm:$0xff]
  %s1902 = scalar_lea.vmem %s3, 1
  %v1903 = vld [vmem:[%s1902] sm:$0x1]
  %s1904 = scalar_lea.vmem %s4, 32
  %v1905 = vld [vmem:[%s1904] sm:$0xff]
  %v1906 = vld [vmem:[%s1904 + $0x8] sm:$0xff]
  %v1907 = vld [vmem:[%s1904 + $0x10] sm:$0xff]
  %v1908 = vld [vmem:[%s1904 + $0x18] sm:$0xff]
  %s1909 = scalar_lea.vmem %s5, 1
  %v1910 = vld [vmem:[%s1909] sm:$0x1]
  %s1911 = scalar_lea.vmem %s6, 32
  %v1912 = vld [vmem:[%s1911] sm:$0xff]
  %v1913 = vld [vmem:[%s1911 + $0x8] sm:$0xff]
  %v1914 = vld [vmem:[%s1911 + $0x10] sm:$0xff]
  %v1915 = vld [vmem:[%s1911 + $0x18] sm:$0xff]
  %s1916 = scalar_lea.vmem %s7, 1
  %v1917 = vld [vmem:[%s1916] sm:$0x1]
  %s1918 = scalar_lea.vmem %s8, 64
  %v1919 = vld [vmem:[%s1918] sm:$0xff]
  %v1920 = vld [vmem:[%s1918 + $0x8] sm:$0xff]
  %v1921 = vld [vmem:[%s1918 + $0x10] sm:$0xff]
  %v1922 = vld [vmem:[%s1918 + $0x18] sm:$0xff]
  %v1923 = vld [vmem:[%s1918 + $0x20] sm:$0xff]
  %v1924 = vld [vmem:[%s1918 + $0x28] sm:$0xff]
  %v1925 = vld [vmem:[%s1918 + $0x30] sm:$0xff]
  %v1926 = vld [vmem:[%s1918 + $0x38] sm:$0xff]
  %s1927 = scalar_lea.vmem %s9, 1
  %v1928 = vld [vmem:[%s1927] sm:$0x1]
  %s1929 = scalar_lea.vmem %s10, 1
  %v1930 = vld [vmem:[%s1929] sm:$0x1]
  %s1931 = scalar_lea.vmem %s11, 1
  %v1932 = vld [vmem:[%s1931] sm:$0x1]
  %s1933 = scalar_lea.vmem %s12, 1
  %v1934 = vld [vmem:[%s1933] sm:$0x1]
  %s1935 = scalar_lea.vmem %s13, 1
  %v1936 = vld [vmem:[%s1935] sm:$0x1]
  %v1938 = vlaneseq
  %v1939 = vshrl.u32 %v1938, 7
  %v1940 = vsub.s32 0, %v1939
  %v1941 = vrot.slane %v1903, %v1940
  %v1944 = vsel %vm90, %v1895, 0
  %v1947 = vsel %vm90, %v1896, 0
  %1949 = vmatprep.subr.mxu0 0.0
  %1950 = vmatpush1.msra.mxu0 %v1898
  %1951 = vmatprep.subr.mxu0 0.0
  %1952 = vmatpush1.msra.mxu0 %v1899
  %1953 = vmatprep.subr.mxu0 0.0
  %1954 = vmatpush1.msra.mxu0 %v1900
  %1955 = vmatprep.subr.mxu0 0.0
  %1956 = vmatpush1.msra.mxu0 %v1901
  %1957 = vmatprep.subr.mxu0 0.0
  %1958 = vmatpush1.msra.mxu0 0.0
  %1959 = vmatprep.subr.mxu0 0.0
  %1960 = vmatpush1.msra.mxu0 0.0
  %1961 = vmatprep.subr.mxu0 0.0
  %1962 = vmatpush1.msra.mxu0 0.0
  %1963 = vmatprep.subr.mxu0 0.0
  %1964 = vmatpush1.msra.mxu0 0.0
  %1965 = vmatprep.subr.mxu0 0.0
  %1966 = vmatpush1.msra.mxu0 0.0
  %1967 = vmatprep.subr.mxu0 0.0
  %1968 = vmatpush1.msra.mxu0 0.0
  %1969 = vmatprep.subr.mxu0 0.0
  %1970 = vmatpush1.msra.mxu0 0.0
  %1971 = vmatprep.subr.mxu0 0.0
  %1972 = vmatpush1.msra.mxu0 0.0
  %1973 = vmatprep.subr.mxu0 0.0
  %1974 = vmatpush1.msra.mxu0 0.0
  %1975 = vmatprep.subr.mxu0 0.0
  %1976 = vmatpush1.msra.mxu0 0.0
  %1977 = vmatprep.subr.mxu0 0.0
  %1978 = vmatpush1.msra.mxu0 0.0
  %1979 = vmatprep.subr.mxu0 0.0
  %1980 = vmatpush1.msra.mxu0 0.0
  %1981 = vmatprep.subr.mxu0 0.0
  %1982 = vmatpush1.msra.mxu0 0.0
  %1983 = vmatprep.subr.mxu0 0.0
  %1984 = vmatpush1.msra.mxu0 0.0
  %1985 = vmatprep.subr.mxu0 0.0
  %1986 = vmatpush1.msra.mxu0 0.0
  %1987 = vmatprep.subr.mxu0 0.0
  %1988 = vmatpush1.msra.mxu0 0.0
  %1989 = vmatprep.subr.mxu0 0.0
  %1990 = vmatpush1.msra.mxu0 0.0
  %1991 = vmatprep.subr.mxu0 0.0
  %1992 = vmatpush1.msra.mxu0 0.0
  %1993 = vmatprep.subr.mxu0 0.0
  %1994 = vmatpush1.msra.mxu0 0.0
  %1995 = vmatprep.subr.mxu0 0.0
  %1996 = vmatpush1.msra.mxu0 0.0
  %1997 = vmatprep.subr.mxu0 0.0
  %1998 = vmatpush1.msra.mxu0 0.0
  %1999 = vmatprep.subr.mxu0 0.0
  %2000 = vmatpush1.msra.mxu0 0.0
  %2001 = vmatprep.subr.mxu0 0.0
  %2002 = vmatpush1.msra.mxu0 0.0
  %2003 = vmatprep.subr.mxu0 0.0
  %2004 = vmatpush1.msra.mxu0 0.0
  %2005 = vmatprep.subr.mxu0 0.0
  %2006 = vmatpush1.msra.mxu0 0.0
  %2007 = vmatprep.subr.mxu0 0.0
  %2008 = vmatpush1.msra.mxu0 0.0
  %2009 = vmatprep.subr.mxu0 0.0
  %2010 = vmatpush1.msra.mxu0 0.0
  %2011 = vmatprep.subr.mxu0 0.0
  %2012 = vmatpush1.msra.mxu0 0.0
  %2013 = vmatprep.mubr.f32.mxu0 0.0
  %2014 = vmatmul.mubr.f32.gmra.mrb[0].mxu0 %v1944
  %v2015 = vpop.f32.mrb[0].mxu0
  %v2016 = vadd.f32 %v1941, %v2015
  %v2017 = vpop.f32.mrb[0].mxu0
  %2018 = vmatprep.mubr.f32.mxu0 0.0
  %2019 = vmatmul.mubr.f32.gmra.mrb[0].mxu0 %v1947
  %v2020 = vpop.f32.mrb[0].mxu0
  %v2021 = vadd.f32 %v1941, %v2020
  %v2022 = vpop.f32.mrb[0].mxu0
  %2023 = vdwg.mxu0
  %2025 = vrot.lane.b32.xlu0 %v2016, 96
  %v2026 = vpop.permute.xlu0 %2025
  %v2027 = vsel %vm175, %v2016, 0
  %v2029 = vsel %vm175, %v2026, 0
  %2031 = vmatprep.subr.mxu0 0.0
  %2032 = vmatpush1.xpose.msra.mxu0 %v2029
  %2033 = vmatprep.subr.mxu0 0.0
  %2034 = vmatpush1.xpose.msra.mxu0 0.0
  %2035 = vmatprep.subr.mxu0 0.0
  %2036 = vmatpush1.xpose.msra.mxu0 0.0
  %2037 = vmatprep.subr.mxu0 0.0
  %2038 = vmatpush1.xpose.msra.mxu0 0.0
  %2039 = vmatprep.subr.mxu0 0.0
  %2040 = vmatpush1.xpose.msra.mxu0 0.0
  %2041 = vmatprep.subr.mxu0 0.0
  %2042 = vmatpush1.xpose.msra.mxu0 0.0
  %2043 = vmatprep.subr.mxu0 0.0
  %2044 = vmatpush1.xpose.msra.mxu0 0.0
  %2045 = vmatprep.subr.mxu0 0.0
  %2046 = vmatpush1.xpose.msra.mxu0 0.0
  %2047 = vmatprep.subr.mxu0 0.0
  %2048 = vmatpush1.xpose.msra.mxu0 0.0
  %2049 = vmatprep.subr.mxu0 0.0
  %2050 = vmatpush1.xpose.msra.mxu0 0.0
  %2051 = vmatprep.subr.mxu0 0.0
  %2052 = vmatpush1.xpose.msra.mxu0 0.0
  %2053 = vmatprep.subr.mxu0 0.0
  %2054 = vmatpush1.xpose.msra.mxu0 0.0
  %2055 = vmatprep.subr.mxu0 0.0
  %2056 = vmatpush1.xpose.msra.mxu0 0.0
  %2057 = vmatprep.subr.mxu0 0.0
  %2058 = vmatpush1.xpose.msra.mxu0 0.0
  %2059 = vmatprep.subr.mxu0 0.0
  %2060 = vmatpush1.xpose.msra.mxu0 0.0
  %2061 = vmatprep.subr.mxu0 0.0
  %2062 = vmatpush1.xpose.msra.mxu0 0.0
  %2063 = vmatprep.subr.mxu0 0.0
  %2064 = vmatpush1.xpose.msra.mxu0 0.0
  %2065 = vmatprep.subr.mxu0 0.0
  %2066 = vmatpush1.xpose.msra.mxu0 0.0
  %2067 = vmatprep.subr.mxu0 0.0
  %2068 = vmatpush1.xpose.msra.mxu0 0.0
  %2069 = vmatprep.subr.mxu0 0.0
  %2070 = vmatpush1.xpose.msra.mxu0 0.0
  %2071 = vmatprep.subr.mxu0 0.0
  %2072 = vmatpush1.xpose.msra.mxu0 0.0
  %2073 = vmatprep.subr.mxu0 0.0
  %2074 = vmatpush1.xpose.msra.mxu0 0.0
  %2075 = vmatprep.subr.mxu0 0.0
  %2076 = vmatpush1.xpose.msra.mxu0 0.0
  %2077 = vmatprep.subr.mxu0 0.0
  %2078 = vmatpush1.xpose.msra.mxu0 0.0
  %2079 = vmatprep.subr.mxu0 0.0
  %2080 = vmatpush1.xpose.msra.mxu0 0.0
  %2081 = vmatprep.subr.mxu0 0.0
  %2082 = vmatpush1.xpose.msra.mxu0 0.0
  %2083 = vmatprep.subr.mxu0 0.0
  %2084 = vmatpush1.xpose.msra.mxu0 0.0
  %2085 = vmatprep.subr.mxu0 0.0
  %2086 = vmatpush1.xpose.msra.mxu0 0.0
  %2087 = vmatprep.subr.mxu0 0.0
  %2088 = vmatpush1.xpose.msra.mxu0 0.0
  %2089 = vmatprep.subr.mxu0 0.0
  %2090 = vmatpush1.xpose.msra.mxu0 0.0
  %2091 = vmatprep.subr.mxu0 0.0
  %2092 = vmatpush1.xpose.msra.mxu0 0.0
  %2093 = vmatprep.subr.mxu0 0.0
  %2094 = vmatpush1.xpose.msra.mxu0 0.0
  %2095 = vmatprep.mubr.f32.mxu0 0.0
  %2096 = vmatmul.mubr.f32.gmra.mrb[0].mxu0 %v2027
  %v2097 = vpop.f32.mrb[0].mxu0
  %v2098 = vadd.f32 0.0, %v2097
  %v2099 = vpop.f32.mrb[0].mxu0
  %2100 = vdwg.mxu0
  %v2101 = vmul.f32 %v2098, 0.35355338
  %v2102 = vadd.f32 %v2101, %v55
  %v2103 = vsel %vm175, %v2102, -inf
  %2104 = vmax.xlane.f32.xlu0 %v2103
  %v2105 = vpop.xlane.xlu0 %2104
  %v2106 = vsub.f32 %v2102, %v2105
  %v2107 = vmul.f32 %v2106, 1.442695
  %v2108 = vpow.pop %v2107
  %v2109 = vsel %vm175, %v2108, 0.0
  %2110 = vadd.xlane.f32.xlu0 %v2109
  %v2111 = vpop.xlane.xlu0 %2110
  %v2112 = vrcp.pop %v2111
  %v2113 = vmul.f32 %v2108, %v2112
  %2114 = vrot.lane.b32.xlu0 %v2016, 64
  %v2115 = vpop.permute.xlu0 %2114
  %v2118 = vsel %vm175, %v2113, 0
  %2120 = vmatprep.subr.mxu0 0.0
  %2121 = vmatpush1.msra.mxu0 %v2115
  %2122 = vmatprep.subr.mxu0 0.0
  %2123 = vmatpush1.msra.mxu0 0.0
  %2124 = vmatprep.subr.mxu0 0.0
  %2125 = vmatpush1.msra.mxu0 0.0
  %2126 = vmatprep.subr.mxu0 0.0
  %2127 = vmatpush1.msra.mxu0 0.0
  %2128 = vmatprep.subr.mxu0 0.0
  %2129 = vmatpush1.msra.mxu0 0.0
  %2130 = vmatprep.subr.mxu0 0.0
  %2131 = vmatpush1.msra.mxu0 0.0
  %2132 = vmatprep.subr.mxu0 0.0
  %2133 = vmatpush1.msra.mxu0 0.0
  %2134 = vmatprep.subr.mxu0 0.0
  %2135 = vmatpush1.msra.mxu0 0.0
  %2136 = vmatprep.subr.mxu0 0.0
  %2137 = vmatpush1.msra.mxu0 0.0
  %2138 = vmatprep.subr.mxu0 0.0
  %2139 = vmatpush1.msra.mxu0 0.0
  %2140 = vmatprep.subr.mxu0 0.0
  %2141 = vmatpush1.msra.mxu0 0.0
  %2142 = vmatprep.subr.mxu0 0.0
  %2143 = vmatpush1.msra.mxu0 0.0
  %2144 = vmatprep.subr.mxu0 0.0
  %2145 = vmatpush1.msra.mxu0 0.0
  %2146 = vmatprep.subr.mxu0 0.0
  %2147 = vmatpush1.msra.mxu0 0.0
  %2148 = vmatprep.subr.mxu0 0.0
  %2149 = vmatpush1.msra.mxu0 0.0
  %2150 = vmatprep.subr.mxu0 0.0
  %2151 = vmatpush1.msra.mxu0 0.0
  %2152 = vmatprep.subr.mxu0 0.0
  %2153 = vmatpush1.msra.mxu0 0.0
  %2154 = vmatprep.subr.mxu0 0.0
  %2155 = vmatpush1.msra.mxu0 0.0
  %2156 = vmatprep.subr.mxu0 0.0
  %2157 = vmatpush1.msra.mxu0 0.0
  %2158 = vmatprep.subr.mxu0 0.0
  %2159 = vmatpush1.msra.mxu0 0.0
  %2160 = vmatprep.subr.mxu0 0.0
  %2161 = vmatpush1.msra.mxu0 0.0
  %2162 = vmatprep.subr.mxu0 0.0
  %2163 = vmatpush1.msra.mxu0 0.0
  %2164 = vmatprep.subr.mxu0 0.0
  %2165 = vmatpush1.msra.mxu0 0.0
  %2166 = vmatprep.subr.mxu0 0.0
  %2167 = vmatpush1.msra.mxu0 0.0
  %2168 = vmatprep.subr.mxu0 0.0
  %2169 = vmatpush1.msra.mxu0 0.0
  %2170 = vmatprep.subr.mxu0 0.0
  %2171 = vmatpush1.msra.mxu0 0.0
  %2172 = vmatprep.subr.mxu0 0.0
  %2173 = vmatpush1.msra.mxu0 0.0
  %2174 = vmatprep.subr.mxu0 0.0
  %2175 = vmatpush1.msra.mxu0 0.0
  %2176 = vmatprep.subr.mxu0 0.0
  %2177 = vmatpush1.msra.mxu0 0.0
  %2178 = vmatprep.subr.mxu0 0.0
  %2179 = vmatpush1.msra.mxu0 0.0
  %2180 = vmatprep.subr.mxu0 0.0
  %2181 = vmatpush1.msra.mxu0 0.0
  %2182 = vmatprep.subr.mxu0 0.0
  %2183 = vmatpush1.msra.mxu0 0.0
  %2184 = vmatprep.mubr.f32.mxu0 0.0
  %2185 = vmatmul.mubr.f32.gmra.mrb[0].mxu0 %v2118
  %v2186 = vpop.f32.mrb[0].mxu0
  %v2187 = vadd.f32 0.0, %v2186
  %v2188 = vpop.f32.mrb[0].mxu0
  %2189 = vdwg.mxu0
  %2190 = vst.msk [vmem:[#allocation2] sm:$0xff] %vm175, %v2187
  %2191 = vrot.lane.b32.xlu0 %v2016, 120
  %v2192 = vpop.permute.xlu0 %2191
  %2193 = vrot.lane.b32.xlu0 %v2016, 88
  %v2194 = vpop.permute.xlu0 %2193
  %v2195 = vsel %vm175, %v2192, 0
  %v2197 = vsel %vm175, %v2194, 0
  %2199 = vmatprep.subr.mxu0 0.0
  %2200 = vmatpush1.xpose.msra.mxu0 %v2197
  %2201 = vmatprep.subr.mxu0 0.0
  %2202 = vmatpush1.xpose.msra.mxu0 0.0
  %2203 = vmatprep.subr.mxu0 0.0
  %2204 = vmatpush1.xpose.msra.mxu0 0.0
  %2205 = vmatprep.subr.mxu0 0.0
  %2206 = vmatpush1.xpose.msra.mxu0 0.0
  %2207 = vmatprep.subr.mxu0 0.0
  %2208 = vmatpush1.xpose.msra.mxu0 0.0
  %2209 = vmatprep.subr.mxu0 0.0
  %2210 = vmatpush1.xpose.msra.mxu0 0.0
  %2211 = vmatprep.subr.mxu0 0.0
  %2212 = vmatpush1.xpose.msra.mxu0 0.0
  %2213 = vmatprep.subr.mxu0 0.0
  %2214 = vmatpush1.xpose.msra.mxu0 0.0
  %2215 = vmatprep.subr.mxu0 0.0
  %2216 = vmatpush1.xpose.msra.mxu0 0.0
  %2217 = vmatprep.subr.mxu0 0.0
  %2218 = vmatpush1.xpose.msra.mxu0 0.0
  %2219 = vmatprep.subr.mxu0 0.0
  %2220 = vmatpush1.xpose.msra.mxu0 0.0
  %2221 = vmatprep.subr.mxu0 0.0
  %2222 = vmatpush1.xpose.msra.mxu0 0.0
  %2223 = vmatprep.subr.mxu0 0.0
  %2224 = vmatpush1.xpose.msra.mxu0 0.0
  %2225 = vmatprep.subr.mxu0 0.0
  %2226 = vmatpush1.xpose.msra.mxu0 0.0
  %2227 = vmatprep.subr.mxu0 0.0
  %2228 = vmatpush1.xpose.msra.mxu0 0.0
  %2229 = vmatprep.subr.mxu0 0.0
  %2230 = vmatpush1.xpose.msra.mxu0 0.0
  %2231 = vmatprep.subr.mxu0 0.0
  %2232 = vmatpush1.xpose.msra.mxu0 0.0
  %2233 = vmatprep.subr.mxu0 0.0
  %2234 = vmatpush1.xpose.msra.mxu0 0.0
  %2235 = vmatprep.subr.mxu0 0.0
  %2236 = vmatpush1.xpose.msra.mxu0 0.0
  %2237 = vmatprep.subr.mxu0 0.0
  %2238 = vmatpush1.xpose.msra.mxu0 0.0
  %2239 = vmatprep.subr.mxu0 0.0
  %2240 = vmatpush1.xpose.msra.mxu0 0.0
  %2241 = vmatprep.subr.mxu0 0.0
  %2242 = vmatpush1.xpose.msra.mxu0 0.0
  %2243 = vmatprep.subr.mxu0 0.0
  %2244 = vmatpush1.xpose.msra.mxu0 0.0
  %2245 = vmatprep.subr.mxu0 0.0
  %2246 = vmatpush1.xpose.msra.mxu0 0.0
  %2247 = vmatprep.subr.mxu0 0.0
  %2248 = vmatpush1.xpose.msra.mxu0 0.0
  %2249 = vmatprep.subr.mxu0 0.0
  %2250 = vmatpush1.xpose.msra.mxu0 0.0
  %2251 = vmatprep.subr.mxu0 0.0
  %2252 = vmatpush1.xpose.msra.mxu0 0.0
  %2253 = vmatprep.subr.mxu0 0.0
  %2254 = vmatpush1.xpose.msra.mxu0 0.0
  %2255 = vmatprep.subr.mxu0 0.0
  %2256 = vmatpush1.xpose.msra.mxu0 0.0
  %2257 = vmatprep.subr.mxu0 0.0
  %2258 = vmatpush1.xpose.msra.mxu0 0.0
  %2259 = vmatprep.subr.mxu0 0.0
  %2260 = vmatpush1.xpose.msra.mxu0 0.0
  %2261 = vmatprep.subr.mxu0 0.0
  %2262 = vmatpush1.xpose.msra.mxu0 0.0
  %2263 = vmatprep.mubr.f32.mxu0 0.0
  %2264 = vmatmul.mubr.f32.gmra.mrb[0].mxu0 %v2195
  %v2265 = vpop.f32.mrb[0].mxu0
  %v2266 = vadd.f32 0.0, %v2265
  %v2267 = vpop.f32.mrb[0].mxu0
  %2268 = vdwg.mxu0
  %v2269 = vmul.f32 %v2266, 0.35355338
  %v2270 = vadd.f32 %v2269, %v55
  %v2271 = vsel %vm175, %v2270, -inf
  %2272 = vmax.xlane.f32.xlu0 %v2271
  %v2273 = vpop.xlane.xlu0 %2272
  %v2274 = vsub.f32 %v2270, %v2273
  %v2275 = vmul.f32 %v2274, 1.442695
  %v2276 = vpow.pop %v2275
  %v2277 = vsel %vm175, %v2276, 0.0
  %2278 = vadd.xlane.f32.xlu0 %v2277
  %v2279 = vpop.xlane.xlu0 %2278
  %v2280 = vrcp.pop %v2279
  %v2281 = vmul.f32 %v2276, %v2280
  %2282 = vrot.lane.b32.xlu0 %v2016, 56
  %v2283 = vpop.permute.xlu0 %2282
  %v2286 = vsel %vm175, %v2281, 0
  %2288 = vmatprep.subr.mxu0 0.0
  %2289 = vmatpush1.msra.mxu0 %v2283
  %2290 = vmatprep.subr.mxu0 0.0
  %2291 = vmatpush1.msra.mxu0 0.0
  %2292 = vmatprep.subr.mxu0 0.0
  %2293 = vmatpush1.msra.mxu0 0.0
  %2294 = vmatprep.subr.mxu0 0.0
  %2295 = vmatpush1.msra.mxu0 0.0
  %2296 = vmatprep.subr.mxu0 0.0
  %2297 = vmatpush1.msra.mxu0 0.0
  %2298 = vmatprep.subr.mxu0 0.0
  %2299 = vmatpush1.msra.mxu0 0.0
  %2300 = vmatprep.subr.mxu0 0.0
  %2301 = vmatpush1.msra.mxu0 0.0
  %2302 = vmatprep.subr.mxu0 0.0
  %2303 = vmatpush1.msra.mxu0 0.0
  %2304 = vmatprep.subr.mxu0 0.0
  %2305 = vmatpush1.msra.mxu0 0.0
  %2306 = vmatprep.subr.mxu0 0.0
  %2307 = vmatpush1.msra.mxu0 0.0
  %2308 = vmatprep.subr.mxu0 0.0
  %2309 = vmatpush1.msra.mxu0 0.0
  %2310 = vmatprep.subr.mxu0 0.0
  %2311 = vmatpush1.msra.mxu0 0.0
  %2312 = vmatprep.subr.mxu0 0.0
  %2313 = vmatpush1.msra.mxu0 0.0
  %2314 = vmatprep.subr.mxu0 0.0
  %2315 = vmatpush1.msra.mxu0 0.0
  %2316 = vmatprep.subr.mxu0 0.0
  %2317 = vmatpush1.msra.mxu0 0.0
  %2318 = vmatprep.subr.mxu0 0.0
  %2319 = vmatpush1.msra.mxu0 0.0
  %2320 = vmatprep.subr.mxu0 0.0
  %2321 = vmatpush1.msra.mxu0 0.0
  %2322 = vmatprep.subr.mxu0 0.0
  %2323 = vmatpush1.msra.mxu0 0.0
  %2324 = vmatprep.subr.mxu0 0.0
  %2325 = vmatpush1.msra.mxu0 0.0
  %2326 = vmatprep.subr.mxu0 0.0
  %2327 = vmatpush1.msra.mxu0 0.0
  %2328 = vmatprep.subr.mxu0 0.0
  %2329 = vmatpush1.msra.mxu0 0.0
  %2330 = vmatprep.subr.mxu0 0.0
  %2331 = vmatpush1.msra.mxu0 0.0
  %2332 = vmatprep.subr.mxu0 0.0
  %2333 = vmatpush1.msra.mxu0 0.0
  %2334 = vmatprep.subr.mxu0 0.0
  %2335 = vmatpush1.msra.mxu0 0.0
  %2336 = vmatprep.subr.mxu0 0.0
  %2337 = vmatpush1.msra.mxu0 0.0
  %2338 = vmatprep.subr.mxu0 0.0
  %2339 = vmatpush1.msra.mxu0 0.0
  %2340 = vmatprep.subr.mxu0 0.0
  %2341 = vmatpush1.msra.mxu0 0.0
  %2342 = vmatprep.subr.mxu0 0.0
  %2343 = vmatpush1.msra.mxu0 0.0
  %2344 = vmatprep.subr.mxu0 0.0
  %2345 = vmatpush1.msra.mxu0 0.0
  %2346 = vmatprep.subr.mxu0 0.0
  %2347 = vmatpush1.msra.mxu0 0.0
  %2348 = vmatprep.subr.mxu0 0.0
  %2349 = vmatpush1.msra.mxu0 0.0
  %2350 = vmatprep.subr.mxu0 0.0
  %2351 = vmatpush1.msra.mxu0 0.0
  %2352 = vmatprep.mubr.f32.mxu0 0.0
  %2353 = vmatmul.mubr.f32.gmra.mrb[0].mxu0 %v2286
  %v2354 = vpop.f32.mrb[0].mxu0
  %v2355 = vadd.f32 0.0, %v2354
  %v2356 = vpop.f32.mrb[0].mxu0
  %2357 = vdwg.mxu0
  %2359 = vrot.lane.b32.xlu0 %v2355, 8
  %v2360 = vpop.permute.xlu0 %2359
  %2362 = vst.msk [vmem:[#allocation2] sm:$0xff] %vm511, %v2360
  %2363 = vrot.lane.b32.xlu0 %v2016, 112
  %v2364 = vpop.permute.xlu0 %2363
  %2365 = vrot.lane.b32.xlu0 %v2016, 80
  %v2366 = vpop.permute.xlu0 %2365
  %v2367 = vsel %vm175, %v2364, 0
  %v2369 = vsel %vm175, %v2366, 0
  %2371 = vmatprep.subr.mxu0 0.0
  %2372 = vmatpush1.xpose.msra.mxu0 %v2369
  %2373 = vmatprep.subr.mxu0 0.0
  %2374 = vmatpush1.xpose.msra.mxu0 0.0
  %2375 = vmatprep.subr.mxu0 0.0
  %2376 = vmatpush1.xpose.msra.mxu0 0.0
  %2377 = vmatprep.subr.mxu0 0.0
  %2378 = vmatpush1.xpose.msra.mxu0 0.0
  %2379 = vmatprep.subr.mxu0 0.0
  %2380 = vmatpush1.xpose.msra.mxu0 0.0
  %2381 = vmatprep.subr.mxu0 0.0
  %2382 = vmatpush1.xpose.msra.mxu0 0.0
  %2383 = vmatprep.subr.mxu0 0.0
  %2384 = vmatpush1.xpose.msra.mxu0 0.0
  %2385 = vmatprep.subr.mxu0 0.0
  %2386 = vmatpush1.xpose.msra.mxu0 0.0
  %2387 = vmatprep.subr.mxu0 0.0
  %2388 = vmatpush1.xpose.msra.mxu0 0.0
  %2389 = vmatprep.subr.mxu0 0.0
  %2390 = vmatpush1.xpose.msra.mxu0 0.0
  %2391 = vmatprep.subr.mxu0 0.0
  %2392 = vmatpush1.xpose.msra.mxu0 0.0
  %2393 = vmatprep.subr.mxu0 0.0
  %2394 = vmatpush1.xpose.msra.mxu0 0.0
  %2395 = vmatprep.subr.mxu0 0.0
  %2396 = vmatpush1.xpose.msra.mxu0 0.0
  %2397 = vmatprep.subr.mxu0 0.0
  %2398 = vmatpush1.xpose.msra.mxu0 0.0
  %2399 = vmatprep.subr.mxu0 0.0
  %2400 = vmatpush1.xpose.msra.mxu0 0.0
  %2401 = vmatprep.subr.mxu0 0.0
  %2402 = vmatpush1.xpose.msra.mxu0 0.0
  %2403 = vmatprep.subr.mxu0 0.0
  %2404 = vmatpush1.xpose.msra.mxu0 0.0
  %2405 = vmatprep.subr.mxu0 0.0
  %2406 = vmatpush1.xpose.msra.mxu0 0.0
  %2407 = vmatprep.subr.mxu0 0.0
  %2408 = vmatpush1.xpose.msra.mxu0 0.0
  %2409 = vmatprep.subr.mxu0 0.0
  %2410 = vmatpush1.xpose.msra.mxu0 0.0
  %2411 = vmatprep.subr.mxu0 0.0
  %2412 = vmatpush1.xpose.msra.mxu0 0.0
  %2413 = vmatprep.subr.mxu0 0.0
  %2414 = vmatpush1.xpose.msra.mxu0 0.0
  %2415 = vmatprep.subr.mxu0 0.0
  %2416 = vmatpush1.xpose.msra.mxu0 0.0
  %2417 = vmatprep.subr.mxu0 0.0
  %2418 = vmatpush1.xpose.msra.mxu0 0.0
  %2419 = vmatprep.subr.mxu0 0.0
  %2420 = vmatpush1.xpose.msra.mxu0 0.0
  %2421 = vmatprep.subr.mxu0 0.0
  %2422 = vmatpush1.xpose.msra.mxu0 0.0
  %2423 = vmatprep.subr.mxu0 0.0
  %2424 = vmatpush1.xpose.msra.mxu0 0.0
  %2425 = vmatprep.subr.mxu0 0.0
  %2426 = vmatpush1.xpose.msra.mxu0 0.0
  %2427 = vmatprep.subr.mxu0 0.0
  %2428 = vmatpush1.xpose.msra.mxu0 0.0
  %2429 = vmatprep.subr.mxu0 0.0
  %2430 = vmatpush1.xpose.msra.mxu0 0.0
  %2431 = vmatprep.subr.mxu0 0.0
  %2432 = vmatpush1.xpose.msra.mxu0 0.0
  %2433 = vmatprep.subr.mxu0 0.0
  %2434 = vmatpush1.xpose.msra.mxu0 0.0
  %2435 = vmatprep.mubr.f32.mxu0 0.0
  %2436 = vmatmul.mubr.f32.gmra.mrb[0].mxu0 %v2367
  %v2437 = vpop.f32.mrb[0].mxu0
  %v2438 = vadd.f32 0.0, %v2437
  %v2439 = vpop.f32.mrb[0].mxu0
  %2440 = vdwg.mxu0
  %v2441 = vmul.f32 %v2438, 0.35355338
  %v2442 = vadd.f32 %v2441, %v55
  %v2443 = vsel %vm175, %v2442, -inf
  %2444 = vmax.xlane.f32.xlu0 %v2443
  %v2445 = vpop.xlane.xlu0 %2444
  %v2446 = vsub.f32 %v2442, %v2445
  %v2447 = vmul.f32 %v2446, 1.442695
  %v2448 = vpow.pop %v2447
  %v2449 = vsel %vm175, %v2448, 0.0
  %2450 = vadd.xlane.f32.xlu0 %v2449
  %v2451 = vpop.xlane.xlu0 %2450
  %v2452 = vrcp.pop %v2451
  %v2453 = vmul.f32 %v2448, %v2452
  %2454 = vrot.lane.b32.xlu0 %v2016, 48
  %v2455 = vpop.permute.xlu0 %2454
  %v2458 = vsel %vm175, %v2453, 0
  %2460 = vmatprep.subr.mxu0 0.0
  %2461 = vmatpush1.msra.mxu0 %v2455
  %2462 = vmatprep.subr.mxu0 0.0
  %2463 = vmatpush1.msra.mxu0 0.0
  %2464 = vmatprep.subr.mxu0 0.0
  %2465 = vmatpush1.msra.mxu0 0.0
  %2466 = vmatprep.subr.mxu0 0.0
  %2467 = vmatpush1.msra.mxu0 0.0
  %2468 = vmatprep.subr.mxu0 0.0
  %2469 = vmatpush1.msra.mxu0 0.0
  %2470 = vmatprep.subr.mxu0 0.0
  %2471 = vmatpush1.msra.mxu0 0.0
  %2472 = vmatprep.subr.mxu0 0.0
  %2473 = vmatpush1.msra.mxu0 0.0
  %2474 = vmatprep.subr.mxu0 0.0
  %2475 = vmatpush1.msra.mxu0 0.0
  %2476 = vmatprep.subr.mxu0 0.0
  %2477 = vmatpush1.msra.mxu0 0.0
  %2478 = vmatprep.subr.mxu0 0.0
  %2479 = vmatpush1.msra.mxu0 0.0
  %2480 = vmatprep.subr.mxu0 0.0
  %2481 = vmatpush1.msra.mxu0 0.0
  %2482 = vmatprep.subr.mxu0 0.0
  %2483 = vmatpush1.msra.mxu0 0.0
  %2484 = vmatprep.subr.mxu0 0.0
  %2485 = vmatpush1.msra.mxu0 0.0
  %2486 = vmatprep.subr.mxu0 0.0
  %2487 = vmatpush1.msra.mxu0 0.0
  %2488 = vmatprep.subr.mxu0 0.0
  %2489 = vmatpush1.msra.mxu0 0.0
  %2490 = vmatprep.subr.mxu0 0.0
  %2491 = vmatpush1.msra.mxu0 0.0
  %2492 = vmatprep.subr.mxu0 0.0
  %2493 = vmatpush1.msra.mxu0 0.0
  %2494 = vmatprep.subr.mxu0 0.0
  %2495 = vmatpush1.msra.mxu0 0.0
  %2496 = vmatprep.subr.mxu0 0.0
  %2497 = vmatpush1.msra.mxu0 0.0
  %2498 = vmatprep.subr.mxu0 0.0
  %2499 = vmatpush1.msra.mxu0 0.0
  %2500 = vmatprep.subr.mxu0 0.0
  %2501 = vmatpush1.msra.mxu0 0.0
  %2502 = vmatprep.subr.mxu0 0.0
  %2503 = vmatpush1.msra.mxu0 0.0
  %2504 = vmatprep.subr.mxu0 0.0
  %2505 = vmatpush1.msra.mxu0 0.0
  %2506 = vmatprep.subr.mxu0 0.0
  %2507 = vmatpush1.msra.mxu0 0.0
  %2508 = vmatprep.subr.mxu0 0.0
  %2509 = vmatpush1.msra.mxu0 0.0
  %2510 = vmatprep.subr.mxu0 0.0
  %2511 = vmatpush1.msra.mxu0 0.0
  %2512 = vmatprep.subr.mxu0 0.0
  %2513 = vmatpush1.msra.mxu0 0.0
  %2514 = vmatprep.subr.mxu0 0.0
  %2515 = vmatpush1.msra.mxu0 0.0
  %2516 = vmatprep.subr.mxu0 0.0
  %2517 = vmatpush1.msra.mxu0 0.0
  %2518 = vmatprep.subr.mxu0 0.0
  %2519 = vmatpush1.msra.mxu0 0.0
  %2520 = vmatprep.subr.mxu0 0.0
  %2521 = vmatpush1.msra.mxu0 0.0
  %2522 = vmatprep.subr.mxu0 0.0
  %2523 = vmatpush1.msra.mxu0 0.0
  %2524 = vmatprep.mubr.f32.mxu0 0.0
  %2525 = vmatmul.mubr.f32.gmra.mrb[0].mxu0 %v2458
  %v2526 = vpop.f32.mrb[0].mxu0
  %v2527 = vadd.f32 0.0, %v2526
  %v2528 = vpop.f32.mrb[0].mxu0
  %2529 = vdwg.mxu0
  %2531 = vrot.lane.b32.xlu0 %v2527, 16
  %v2532 = vpop.permute.xlu0 %2531
  %2534 = vst.msk [vmem:[#allocation2] sm:$0xff] %vm684, %v2532
  %2535 = vrot.lane.b32.xlu0 %v2016, 104
  %v2536 = vpop.permute.xlu0 %2535
  %2537 = vrot.lane.b32.xlu0 %v2016, 72
  %v2538 = vpop.permute.xlu0 %2537
  %v2539 = vsel %vm175, %v2536, 0
  %v2541 = vsel %vm175, %v2538, 0
  %2543 = vmatprep.subr.mxu0 0.0
  %2544 = vmatpush1.xpose.msra.mxu0 %v2541
  %2545 = vmatprep.subr.mxu0 0.0
  %2546 = vmatpush1.xpose.msra.mxu0 0.0
  %2547 = vmatprep.subr.mxu0 0.0
  %2548 = vmatpush1.xpose.msra.mxu0 0.0
  %2549 = vmatprep.subr.mxu0 0.0
  %2550 = vmatpush1.xpose.msra.mxu0 0.0
  %2551 = vmatprep.subr.mxu0 0.0
  %2552 = vmatpush1.xpose.msra.mxu0 0.0
  %2553 = vmatprep.subr.mxu0 0.0
  %2554 = vmatpush1.xpose.msra.mxu0 0.0
  %2555 = vmatprep.subr.mxu0 0.0
  %2556 = vmatpush1.xpose.msra.mxu0 0.0
  %2557 = vmatprep.subr.mxu0 0.0
  %2558 = vmatpush1.xpose.msra.mxu0 0.0
  %2559 = vmatprep.subr.mxu0 0.0
  %2560 = vmatpush1.xpose.msra.mxu0 0.0
  %2561 = vmatprep.subr.mxu0 0.0
  %2562 = vmatpush1.xpose.msra.mxu0 0.0
  %2563 = vmatprep.subr.mxu0 0.0
  %2564 = vmatpush1.xpose.msra.mxu0 0.0
  %2565 = vmatprep.subr.mxu0 0.0
  %2566 = vmatpush1.xpose.msra.mxu0 0.0
  %2567 = vmatprep.subr.mxu0 0.0
  %2568 = vmatpush1.xpose.msra.mxu0 0.0
  %2569 = vmatprep.subr.mxu0 0.0
  %2570 = vmatpush1.xpose.msra.mxu0 0.0
  %2571 = vmatprep.subr.mxu0 0.0
  %2572 = vmatpush1.xpose.msra.mxu0 0.0
  %2573 = vmatprep.subr.mxu0 0.0
  %2574 = vmatpush1.xpose.msra.mxu0 0.0
  %2575 = vmatprep.subr.mxu0 0.0
  %2576 = vmatpush1.xpose.msra.mxu0 0.0
  %2577 = vmatprep.subr.mxu0 0.0
  %2578 = vmatpush1.xpose.msra.mxu0 0.0
  %2579 = vmatprep.subr.mxu0 0.0
  %2580 = vmatpush1.xpose.msra.mxu0 0.0
  %2581 = vmatprep.subr.mxu0 0.0
  %2582 = vmatpush1.xpose.msra.mxu0 0.0
  %2583 = vmatprep.subr.mxu0 0.0
  %2584 = vmatpush1.xpose.msra.mxu0 0.0
  %2585 = vmatprep.subr.mxu0 0.0
  %2586 = vmatpush1.xpose.msra.mxu0 0.0
  %2587 = vmatprep.subr.mxu0 0.0
  %2588 = vmatpush1.xpose.msra.mxu0 0.0
  %2589 = vmatprep.subr.mxu0 0.0
  %2590 = vmatpush1.xpose.msra.mxu0 0.0
  %2591 = vmatprep.subr.mxu0 0.0
  %2592 = vmatpush1.xpose.msra.mxu0 0.0
  %2593 = vmatprep.subr.mxu0 0.0
  %2594 = vmatpush1.xpose.msra.mxu0 0.0
  %2595 = vmatprep.subr.mxu0 0.0
  %2596 = vmatpush1.xpose.msra.mxu0 0.0
  %2597 = vmatprep.subr.mxu0 0.0
  %2598 = vmatpush1.xpose.msra.mxu0 0.0
  %2599 = vmatprep.subr.mxu0 0.0
  %2600 = vmatpush1.xpose.msra.mxu0 0.0
  %2601 = vmatprep.subr.mxu0 0.0
  %2602 = vmatpush1.xpose.msra.mxu0 0.0
  %2603 = vmatprep.subr.mxu0 0.0
  %2604 = vmatpush1.xpose.msra.mxu0 0.0
  %2605 = vmatprep.subr.mxu0 0.0
  %2606 = vmatpush1.xpose.msra.mxu0 0.0
  %2607 = vmatprep.mubr.f32.mxu0 0.0
  %2608 = vmatmul.mubr.f32.gmra.mrb[0].mxu0 %v2539
  %v2609 = vpop.f32.mrb[0].mxu0
  %v2610 = vadd.f32 0.0, %v2609
  %v2611 = vpop.f32.mrb[0].mxu0
  %2612 = vdwg.mxu0
  %v2613 = vmul.f32 %v2610, 0.35355338
  %v2614 = vadd.f32 %v2613, %v55
  %v2615 = vsel %vm175, %v2614, -inf
  %2616 = vmax.xlane.f32.xlu0 %v2615
  %v2617 = vpop.xlane.xlu0 %2616
  %v2618 = vsub.f32 %v2614, %v2617
  %v2619 = vmul.f32 %v2618, 1.442695
  %v2620 = vpow.pop %v2619
  %v2621 = vsel %vm175, %v2620, 0.0
  %2622 = vadd.xlane.f32.xlu0 %v2621
  %v2623 = vpop.xlane.xlu0 %2622
  %v2624 = vrcp.pop %v2623
  %v2625 = vmul.f32 %v2620, %v2624
  %2626 = vrot.lane.b32.xlu0 %v2016, 40
  %v2627 = vpop.permute.xlu0 %2626
  %v2630 = vsel %vm175, %v2625, 0
  %2632 = vmatprep.subr.mxu0 0.0
  %2633 = vmatpush1.msra.mxu0 %v2627
  %2634 = vmatprep.subr.mxu0 0.0
  %2635 = vmatpush1.msra.mxu0 0.0
  %2636 = vmatprep.subr.mxu0 0.0
  %2637 = vmatpush1.msra.mxu0 0.0
  %2638 = vmatprep.subr.mxu0 0.0
  %2639 = vmatpush1.msra.mxu0 0.0
  %2640 = vmatprep.subr.mxu0 0.0
  %2641 = vmatpush1.msra.mxu0 0.0
  %2642 = vmatprep.subr.mxu0 0.0
  %2643 = vmatpush1.msra.mxu0 0.0
  %2644 = vmatprep.subr.mxu0 0.0
  %2645 = vmatpush1.msra.mxu0 0.0
  %2646 = vmatprep.subr.mxu0 0.0
  %2647 = vmatpush1.msra.mxu0 0.0
  %2648 = vmatprep.subr.mxu0 0.0
  %2649 = vmatpush1.msra.mxu0 0.0
  %2650 = vmatprep.subr.mxu0 0.0
  %2651 = vmatpush1.msra.mxu0 0.0
  %2652 = vmatprep.subr.mxu0 0.0
  %2653 = vmatpush1.msra.mxu0 0.0
  %2654 = vmatprep.subr.mxu0 0.0
  %2655 = vmatpush1.msra.mxu0 0.0
  %2656 = vmatprep.subr.mxu0 0.0
  %2657 = vmatpush1.msra.mxu0 0.0
  %2658 = vmatprep.subr.mxu0 0.0
  %2659 = vmatpush1.msra.mxu0 0.0
  %2660 = vmatprep.subr.mxu0 0.0
  %2661 = vmatpush1.msra.mxu0 0.0
  %2662 = vmatprep.subr.mxu0 0.0
  %2663 = vmatpush1.msra.mxu0 0.0
  %2664 = vmatprep.subr.mxu0 0.0
  %2665 = vmatpush1.msra.mxu0 0.0
  %2666 = vmatprep.subr.mxu0 0.0
  %2667 = vmatpush1.msra.mxu0 0.0
  %2668 = vmatprep.subr.mxu0 0.0
  %2669 = vmatpush1.msra.mxu0 0.0
  %2670 = vmatprep.subr.mxu0 0.0
  %2671 = vmatpush1.msra.mxu0 0.0
  %2672 = vmatprep.subr.mxu0 0.0
  %2673 = vmatpush1.msra.mxu0 0.0
  %2674 = vmatprep.subr.mxu0 0.0
  %2675 = vmatpush1.msra.mxu0 0.0
  %2676 = vmatprep.subr.mxu0 0.0
  %2677 = vmatpush1.msra.mxu0 0.0
  %2678 = vmatprep.subr.mxu0 0.0
  %2679 = vmatpush1.msra.mxu0 0.0
  %2680 = vmatprep.subr.mxu0 0.0
  %2681 = vmatpush1.msra.mxu0 0.0
  %2682 = vmatprep.subr.mxu0 0.0
  %2683 = vmatpush1.msra.mxu0 0.0
  %2684 = vmatprep.subr.mxu0 0.0
  %2685 = vmatpush1.msra.mxu0 0.0
  %2686 = vmatprep.subr.mxu0 0.0
  %2687 = vmatpush1.msra.mxu0 0.0
  %2688 = vmatprep.subr.mxu0 0.0
  %2689 = vmatpush1.msra.mxu0 0.0
  %2690 = vmatprep.subr.mxu0 0.0
  %2691 = vmatpush1.msra.mxu0 0.0
  %2692 = vmatprep.subr.mxu0 0.0
  %2693 = vmatpush1.msra.mxu0 0.0
  %2694 = vmatprep.subr.mxu0 0.0
  %2695 = vmatpush1.msra.mxu0 0.0
  %2696 = vmatprep.mubr.f32.mxu0 0.0
  %2697 = vmatmul.mubr.f32.gmra.mrb[0].mxu0 %v2630
  %v2698 = vpop.f32.mrb[0].mxu0
  %v2699 = vadd.f32 0.0, %v2698
  %v2700 = vpop.f32.mrb[0].mxu0
  %2701 = vdwg.mxu0
  %2703 = vrot.lane.b32.xlu0 %v2699, 24
  %v2704 = vpop.permute.xlu0 %2703
  %2706 = vst.msk [vmem:[#allocation2] sm:$0xff] %vm857, %v2704
  %2708 = vrot.lane.b32.xlu0 %v2021, 96
  %v2709 = vpop.permute.xlu0 %2708
  %v2710 = vsel %vm175, %v2021, 0
  %v2712 = vsel %vm175, %v2709, 0
  %2714 = vmatprep.subr.mxu0 0.0
  %2715 = vmatpush1.xpose.msra.mxu0 %v2712
  %2716 = vmatprep.subr.mxu0 0.0
  %2717 = vmatpush1.xpose.msra.mxu0 0.0
  %2718 = vmatprep.subr.mxu0 0.0
  %2719 = vmatpush1.xpose.msra.mxu0 0.0
  %2720 = vmatprep.subr.mxu0 0.0
  %2721 = vmatpush1.xpose.msra.mxu0 0.0
  %2722 = vmatprep.subr.mxu0 0.0
  %2723 = vmatpush1.xpose.msra.mxu0 0.0
  %2724 = vmatprep.subr.mxu0 0.0
  %2725 = vmatpush1.xpose.msra.mxu0 0.0
  %2726 = vmatprep.subr.mxu0 0.0
  %2727 = vmatpush1.xpose.msra.mxu0 0.0
  %2728 = vmatprep.subr.mxu0 0.0
  %2729 = vmatpush1.xpose.msra.mxu0 0.0
  %2730 = vmatprep.subr.mxu0 0.0
  %2731 = vmatpush1.xpose.msra.mxu0 0.0
  %2732 = vmatprep.subr.mxu0 0.0
  %2733 = vmatpush1.xpose.msra.mxu0 0.0
  %2734 = vmatprep.subr.mxu0 0.0
  %2735 = vmatpush1.xpose.msra.mxu0 0.0
  %2736 = vmatprep.subr.mxu0 0.0
  %2737 = vmatpush1.xpose.msra.mxu0 0.0
  %2738 = vmatprep.subr.mxu0 0.0
  %2739 = vmatpush1.xpose.msra.mxu0 0.0
  %2740 = vmatprep.subr.mxu0 0.0
  %2741 = vmatpush1.xpose.msra.mxu0 0.0
  %2742 = vmatprep.subr.mxu0 0.0
  %2743 = vmatpush1.xpose.msra.mxu0 0.0
  %2744 = vmatprep.subr.mxu0 0.0
  %2745 = vmatpush1.xpose.msra.mxu0 0.0
  %2746 = vmatprep.subr.mxu0 0.0
  %2747 = vmatpush1.xpose.msra.mxu0 0.0
  %2748 = vmatprep.subr.mxu0 0.0
  %2749 = vmatpush1.xpose.msra.mxu0 0.0
  %2750 = vmatprep.subr.mxu0 0.0
  %2751 = vmatpush1.xpose.msra.mxu0 0.0
  %2752 = vmatprep.subr.mxu0 0.0
  %2753 = vmatpush1.xpose.msra.mxu0 0.0
  %2754 = vmatprep.subr.mxu0 0.0
  %2755 = vmatpush1.xpose.msra.mxu0 0.0
  %2756 = vmatprep.subr.mxu0 0.0
  %2757 = vmatpush1.xpose.msra.mxu0 0.0
  %2758 = vmatprep.subr.mxu0 0.0
  %2759 = vmatpush1.xpose.msra.mxu0 0.0
  %2760 = vmatprep.subr.mxu0 0.0
  %2761 = vmatpush1.xpose.msra.mxu0 0.0
  %2762 = vmatprep.subr.mxu0 0.0
  %2763 = vmatpush1.xpose.msra.mxu0 0.0
  %2764 = vmatprep.subr.mxu0 0.0
  %2765 = vmatpush1.xpose.msra.mxu0 0.0
  %2766 = vmatprep.subr.mxu0 0.0
  %2767 = vmatpush1.xpose.msra.mxu0 0.0
  %2768 = vmatprep.subr.mxu0 0.0
  %2769 = vmatpush1.xpose.msra.mxu0 0.0
  %2770 = vmatprep.subr.mxu0 0.0
  %2771 = vmatpush1.xpose.msra.mxu0 0.0
  %2772 = vmatprep.subr.mxu0 0.0
  %2773 = vmatpush1.xpose.msra.mxu0 0.0
  %2774 = vmatprep.subr.mxu0 0.0
  %2775 = vmatpush1.xpose.msra.mxu0 0.0
  %2776 = vmatprep.subr.mxu0 0.0
  %2777 = vmatpush1.xpose.msra.mxu0 0.0
  %2778 = vmatprep.mubr.f32.mxu0 0.0
  %2779 = vmatmul.mubr.f32.gmra.mrb[0].mxu0 %v2710
  %v2780 = vpop.f32.mrb[0].mxu0
  %v2781 = vadd.f32 0.0, %v2780
  %v2782 = vpop.f32.mrb[0].mxu0
  %2783 = vdwg.mxu0
  %v2784 = vmul.f32 %v2781, 0.35355338
  %v2785 = vadd.f32 %v2784, %v55
  %v2786 = vsel %vm175, %v2785, -inf
  %2787 = vmax.xlane.f32.xlu0 %v2786
  %v2788 = vpop.xlane.xlu0 %2787
  %v2789 = vsub.f32 %v2785, %v2788
  %v2790 = vmul.f32 %v2789, 1.442695
  %v2791 = vpow.pop %v2790
  %v2792 = vsel %vm175, %v2791, 0.0
  %2793 = vadd.xlane.f32.xlu0 %v2792
  %v2794 = vpop.xlane.xlu0 %2793
  %v2795 = vrcp.pop %v2794
  %v2796 = vmul.f32 %v2791, %v2795
  %2797 = vrot.lane.b32.xlu0 %v2021, 64
  %v2798 = vpop.permute.xlu0 %2797
  %v2801 = vsel %vm175, %v2796, 0
  %2803 = vmatprep.subr.mxu0 0.0
  %2804 = vmatpush1.msra.mxu0 %v2798
  %2805 = vmatprep.subr.mxu0 0.0
  %2806 = vmatpush1.msra.mxu0 0.0
  %2807 = vmatprep.subr.mxu0 0.0
  %2808 = vmatpush1.msra.mxu0 0.0
  %2809 = vmatprep.subr.mxu0 0.0
  %2810 = vmatpush1.msra.mxu0 0.0
  %2811 = vmatprep.subr.mxu0 0.0
  %2812 = vmatpush1.msra.mxu0 0.0
  %2813 = vmatprep.subr.mxu0 0.0
  %2814 = vmatpush1.msra.mxu0 0.0
  %2815 = vmatprep.subr.mxu0 0.0
  %2816 = vmatpush1.msra.mxu0 0.0
  %2817 = vmatprep.subr.mxu0 0.0
  %2818 = vmatpush1.msra.mxu0 0.0
  %2819 = vmatprep.subr.mxu0 0.0
  %2820 = vmatpush1.msra.mxu0 0.0
  %2821 = vmatprep.subr.mxu0 0.0
  %2822 = vmatpush1.msra.mxu0 0.0
  %2823 = vmatprep.subr.mxu0 0.0
  %2824 = vmatpush1.msra.mxu0 0.0
  %2825 = vmatprep.subr.mxu0 0.0
  %2826 = vmatpush1.msra.mxu0 0.0
  %2827 = vmatprep.subr.mxu0 0.0
  %2828 = vmatpush1.msra.mxu0 0.0
  %2829 = vmatprep.subr.mxu0 0.0
  %2830 = vmatpush1.msra.mxu0 0.0
  %2831 = vmatprep.subr.mxu0 0.0
  %2832 = vmatpush1.msra.mxu0 0.0
  %2833 = vmatprep.subr.mxu0 0.0
  %2834 = vmatpush1.msra.mxu0 0.0
  %2835 = vmatprep.subr.mxu0 0.0
  %2836 = vmatpush1.msra.mxu0 0.0
  %2837 = vmatprep.subr.mxu0 0.0
  %2838 = vmatpush1.msra.mxu0 0.0
  %2839 = vmatprep.subr.mxu0 0.0
  %2840 = vmatpush1.msra.mxu0 0.0
  %2841 = vmatprep.subr.mxu0 0.0
  %2842 = vmatpush1.msra.mxu0 0.0
  %2843 = vmatprep.subr.mxu0 0.0
  %2844 = vmatpush1.msra.mxu0 0.0
  %2845 = vmatprep.subr.mxu0 0.0
  %2846 = vmatpush1.msra.mxu0 0.0
  %2847 = vmatprep.subr.mxu0 0.0
  %2848 = vmatpush1.msra.mxu0 0.0
  %2849 = vmatprep.subr.mxu0 0.0
  %2850 = vmatpush1.msra.mxu0 0.0
  %2851 = vmatprep.subr.mxu0 0.0
  %2852 = vmatpush1.msra.mxu0 0.0
  %2853 = vmatprep.subr.mxu0 0.0
  %2854 = vmatpush1.msra.mxu0 0.0
  %2855 = vmatprep.subr.mxu0 0.0
  %2856 = vmatpush1.msra.mxu0 0.0
  %2857 = vmatprep.subr.mxu0 0.0
  %2858 = vmatpush1.msra.mxu0 0.0
  %2859 = vmatprep.subr.mxu0 0.0
  %2860 = vmatpush1.msra.mxu0 0.0
  %2861 = vmatprep.subr.mxu0 0.0
  %2862 = vmatpush1.msra.mxu0 0.0
  %2863 = vmatprep.subr.mxu0 0.0
  %2864 = vmatpush1.msra.mxu0 0.0
  %2865 = vmatprep.subr.mxu0 0.0
  %2866 = vmatpush1.msra.mxu0 0.0
  %2867 = vmatprep.mubr.f32.mxu0 0.0
  %2868 = vmatmul.mubr.f32.gmra.mrb[0].mxu0 %v2801
  %v2869 = vpop.f32.mrb[0].mxu0
  %v2870 = vadd.f32 0.0, %v2869
  %v2871 = vpop.f32.mrb[0].mxu0
  %2872 = vdwg.mxu0
  %2873 = vst.msk [vmem:[#allocation2 + $0x8] sm:$0xff] %vm175, %v2870
  %2874 = vrot.lane.b32.xlu0 %v2021, 120
  %v2875 = vpop.permute.xlu0 %2874
  %2876 = vrot.lane.b32.xlu0 %v2021, 88
  %v2877 = vpop.permute.xlu0 %2876
  %v2878 = vsel %vm175, %v2875, 0
  %v2880 = vsel %vm175, %v2877, 0
  %2882 = vmatprep.subr.mxu0 0.0
  %2883 = vmatpush1.xpose.msra.mxu0 %v2880
  %2884 = vmatprep.subr.mxu0 0.0
  %2885 = vmatpush1.xpose.msra.mxu0 0.0
  %2886 = vmatprep.subr.mxu0 0.0
  %2887 = vmatpush1.xpose.msra.mxu0 0.0
  %2888 = vmatprep.subr.mxu0 0.0
  %2889 = vmatpush1.xpose.msra.mxu0 0.0
  %2890 = vmatprep.subr.mxu0 0.0
  %2891 = vmatpush1.xpose.msra.mxu0 0.0
  %2892 = vmatprep.subr.mxu0 0.0
  %2893 = vmatpush1.xpose.msra.mxu0 0.0
  %2894 = vmatprep.subr.mxu0 0.0
  %2895 = vmatpush1.xpose.msra.mxu0 0.0
  %2896 = vmatprep.subr.mxu0 0.0
  %2897 = vmatpush1.xpose.msra.mxu0 0.0
  %2898 = vmatprep.subr.mxu0 0.0
  %2899 = vmatpush1.xpose.msra.mxu0 0.0
  %2900 = vmatprep.subr.mxu0 0.0
  %2901 = vmatpush1.xpose.msra.mxu0 0.0
  %2902 = vmatprep.subr.mxu0 0.0
  %2903 = vmatpush1.xpose.msra.mxu0 0.0
  %2904 = vmatprep.subr.mxu0 0.0
  %2905 = vmatpush1.xpose.msra.mxu0 0.0
  %2906 = vmatprep.subr.mxu0 0.0
  %2907 = vmatpush1.xpose.msra.mxu0 0.0
  %2908 = vmatprep.subr.mxu0 0.0
  %2909 = vmatpush1.xpose.msra.mxu0 0.0
  %2910 = vmatprep.subr.mxu0 0.0
  %2911 = vmatpush1.xpose.msra.mxu0 0.0
  %2912 = vmatprep.subr.mxu0 0.0
  %2913 = vmatpush1.xpose.msra.mxu0 0.0
  %2914 = vmatprep.subr.mxu0 0.0
  %2915 = vmatpush1.xpose.msra.mxu0 0.0
  %2916 = vmatprep.subr.mxu0 0.0
  %2917 = vmatpush1.xpose.msra.mxu0 0.0
  %2918 = vmatprep.subr.mxu0 0.0
  %2919 = vmatpush1.xpose.msra.mxu0 0.0
  %2920 = vmatprep.subr.mxu0 0.0
  %2921 = vmatpush1.xpose.msra.mxu0 0.0
  %2922 = vmatprep.subr.mxu0 0.0
  %2923 = vmatpush1.xpose.msra.mxu0 0.0
  %2924 = vmatprep.subr.mxu0 0.0
  %2925 = vmatpush1.xpose.msra.mxu0 0.0
  %2926 = vmatprep.subr.mxu0 0.0
  %2927 = vmatpush1.xpose.msra.mxu0 0.0
  %2928 = vmatprep.subr.mxu0 0.0
  %2929 = vmatpush1.xpose.msra.mxu0 0.0
  %2930 = vmatprep.subr.mxu0 0.0
  %2931 = vmatpush1.xpose.msra.mxu0 0.0
  %2932 = vmatprep.subr.mxu0 0.0
  %2933 = vmatpush1.xpose.msra.mxu0 0.0
  %2934 = vmatprep.subr.mxu0 0.0
  %2935 = vmatpush1.xpose.msra.mxu0 0.0
  %2936 = vmatprep.subr.mxu0 0.0
  %2937 = vmatpush1.xpose.msra.mxu0 0.0
  %2938 = vmatprep.subr.mxu0 0.0
  %2939 = vmatpush1.xpose.msra.mxu0 0.0
  %2940 = vmatprep.subr.mxu0 0.0
  %2941 = vmatpush1.xpose.msra.mxu0 0.0
  %2942 = vmatprep.subr.mxu0 0.0
  %2943 = vmatpush1.xpose.msra.mxu0 0.0
  %2944 = vmatprep.subr.mxu0 0.0
  %2945 = vmatpush1.xpose.msra.mxu0 0.0
  %2946 = vmatprep.mubr.f32.mxu0 0.0
  %2947 = vmatmul.mubr.f32.gmra.mrb[0].mxu0 %v2878
  %v2948 = vpop.f32.mrb[0].mxu0
  %v2949 = vadd.f32 0.0, %v2948
  %v2950 = vpop.f32.mrb[0].mxu0
  %2951 = vdwg.mxu0
  %v2952 = vmul.f32 %v2949, 0.35355338
  %v2953 = vadd.f32 %v2952, %v55
  %v2954 = vsel %vm175, %v2953, -inf
  %2955 = vmax.xlane.f32.xlu0 %v2954
  %v2956 = vpop.xlane.xlu0 %2955
  %v2957 = vsub.f32 %v2953, %v2956
  %v2958 = vmul.f32 %v2957, 1.442695
  %v2959 = vpow.pop %v2958
  %v2960 = vsel %vm175, %v2959, 0.0
  %2961 = vadd.xlane.f32.xlu0 %v2960
  %v2962 = vpop.xlane.xlu0 %2961
  %v2963 = vrcp.pop %v2962
  %v2964 = vmul.f32 %v2959, %v2963
  %2965 = vrot.lane.b32.xlu0 %v2021, 56
  %v2966 = vpop.permute.xlu0 %2965
  %v2969 = vsel %vm175, %v2964, 0
  %2971 = vmatprep.subr.mxu0 0.0
  %2972 = vmatpush1.msra.mxu0 %v2966
  %2973 = vmatprep.subr.mxu0 0.0
  %2974 = vmatpush1.msra.mxu0 0.0
  %2975 = vmatprep.subr.mxu0 0.0
  %2976 = vmatpush1.msra.mxu0 0.0
  %2977 = vmatprep.subr.mxu0 0.0
  %2978 = vmatpush1.msra.mxu0 0.0
  %2979 = vmatprep.subr.mxu0 0.0
  %2980 = vmatpush1.msra.mxu0 0.0
  %2981 = vmatprep.subr.mxu0 0.0
  %2982 = vmatpush1.msra.mxu0 0.0
  %2983 = vmatprep.subr.mxu0 0.0
  %2984 = vmatpush1.msra.mxu0 0.0
  %2985 = vmatprep.subr.mxu0 0.0
  %2986 = vmatpush1.msra.mxu0 0.0
  %2987 = vmatprep.subr.mxu0 0.0
  %2988 = vmatpush1.msra.mxu0 0.0
  %2989 = vmatprep.subr.mxu0 0.0
  %2990 = vmatpush1.msra.mxu0 0.0
  %2991 = vmatprep.subr.mxu0 0.0
  %2992 = vmatpush1.msra.mxu0 0.0
  %2993 = vmatprep.subr.mxu0 0.0
  %2994 = vmatpush1.msra.mxu0 0.0
  %2995 = vmatprep.subr.mxu0 0.0
  %2996 = vmatpush1.msra.mxu0 0.0
  %2997 = vmatprep.subr.mxu0 0.0
  %2998 = vmatpush1.msra.mxu0 0.0
  %2999 = vmatprep.subr.mxu0 0.0
  %3000 = vmatpush1.msra.mxu0 0.0
  %3001 = vmatprep.subr.mxu0 0.0
  %3002 = vmatpush1.msra.mxu0 0.0
  %3003 = vmatprep.subr.mxu0 0.0
  %3004 = vmatpush1.msra.mxu0 0.0
  %3005 = vmatprep.subr.mxu0 0.0
  %3006 = vmatpush1.msra.mxu0 0.0
  %3007 = vmatprep.subr.mxu0 0.0
  %3008 = vmatpush1.msra.mxu0 0.0
  %3009 = vmatprep.subr.mxu0 0.0
  %3010 = vmatpush1.msra.mxu0 0.0
  %3011 = vmatprep.subr.mxu0 0.0
  %3012 = vmatpush1.msra.mxu0 0.0
  %3013 = vmatprep.subr.mxu0 0.0
  %3014 = vmatpush1.msra.mxu0 0.0
  %3015 = vmatprep.subr.mxu0 0.0
  %3016 = vmatpush1.msra.mxu0 0.0
  %3017 = vmatprep.subr.mxu0 0.0
  %3018 = vmatpush1.msra.mxu0 0.0
  %3019 = vmatprep.subr.mxu0 0.0
  %3020 = vmatpush1.msra.mxu0 0.0
  %3021 = vmatprep.subr.mxu0 0.0
  %3022 = vmatpush1.msra.mxu0 0.0
  %3023 = vmatprep.subr.mxu0 0.0
  %3024 = vmatpush1.msra.mxu0 0.0
  %3025 = vmatprep.subr.mxu0 0.0
  %3026 = vmatpush1.msra.mxu0 0.0
  %3027 = vmatprep.subr.mxu0 0.0
  %3028 = vmatpush1.msra.mxu0 0.0
  %3029 = vmatprep.subr.mxu0 0.0
  %3030 = vmatpush1.msra.mxu0 0.0
  %3031 = vmatprep.subr.mxu0 0.0
  %3032 = vmatpush1.msra.mxu0 0.0
  %3033 = vmatprep.subr.mxu0 0.0
  %3034 = vmatpush1.msra.mxu0 0.0
  %3035 = vmatprep.mubr.f32.mxu0 0.0
  %3036 = vmatmul.mubr.f32.gmra.mrb[0].mxu0 %v2969
  %v3037 = vpop.f32.mrb[0].mxu0
  %v3038 = vadd.f32 0.0, %v3037
  %v3039 = vpop.f32.mrb[0].mxu0
  %3040 = vdwg.mxu0
  %3042 = vrot.lane.b32.xlu0 %v3038, 8
  %v3043 = vpop.permute.xlu0 %3042
  %3045 = vst.msk [vmem:[#allocation2 + $0x8] sm:$0xff] %vm511, %v3043
  %3046 = vrot.lane.b32.xlu0 %v2021, 112
  %v3047 = vpop.permute.xlu0 %3046
  %3048 = vrot.lane.b32.xlu0 %v2021, 80
  %v3049 = vpop.permute.xlu0 %3048
  %v3050 = vsel %vm175, %v3047, 0
  %v3052 = vsel %vm175, %v3049, 0
  %3054 = vmatprep.subr.mxu0 0.0
  %3055 = vmatpush1.xpose.msra.mxu0 %v3052
  %3056 = vmatprep.subr.mxu0 0.0
  %3057 = vmatpush1.xpose.msra.mxu0 0.0
  %3058 = vmatprep.subr.mxu0 0.0
  %3059 = vmatpush1.xpose.msra.mxu0 0.0
  %3060 = vmatprep.subr.mxu0 0.0
  %3061 = vmatpush1.xpose.msra.mxu0 0.0
  %3062 = vmatprep.subr.mxu0 0.0
  %3063 = vmatpush1.xpose.msra.mxu0 0.0
  %3064 = vmatprep.subr.mxu0 0.0
  %3065 = vmatpush1.xpose.msra.mxu0 0.0
  %3066 = vmatprep.subr.mxu0 0.0
  %3067 = vmatpush1.xpose.msra.mxu0 0.0
  %3068 = vmatprep.subr.mxu0 0.0
  %3069 = vmatpush1.xpose.msra.mxu0 0.0
  %3070 = vmatprep.subr.mxu0 0.0
  %3071 = vmatpush1.xpose.msra.mxu0 0.0
  %3072 = vmatprep.subr.mxu0 0.0
  %3073 = vmatpush1.xpose.msra.mxu0 0.0
  %3074 = vmatprep.subr.mxu0 0.0
  %3075 = vmatpush1.xpose.msra.mxu0 0.0
  %3076 = vmatprep.subr.mxu0 0.0
  %3077 = vmatpush1.xpose.msra.mxu0 0.0
  %3078 = vmatprep.subr.mxu0 0.0
  %3079 = vmatpush1.xpose.msra.mxu0 0.0
  %3080 = vmatprep.subr.mxu0 0.0
  %3081 = vmatpush1.xpose.msra.mxu0 0.0
  %3082 = vmatprep.subr.mxu0 0.0
  %3083 = vmatpush1.xpose.msra.mxu0 0.0
  %3084 = vmatprep.subr.mxu0 0.0
  %3085 = vmatpush1.xpose.msra.mxu0 0.0
  %3086 = vmatprep.subr.mxu0 0.0
  %3087 = vmatpush1.xpose.msra.mxu0 0.0
  %3088 = vmatprep.subr.mxu0 0.0
  %3089 = vmatpush1.xpose.msra.mxu0 0.0
  %3090 = vmatprep.subr.mxu0 0.0
  %3091 = vmatpush1.xpose.msra.mxu0 0.0
  %3092 = vmatprep.subr.mxu0 0.0
  %3093 = vmatpush1.xpose.msra.mxu0 0.0
  %3094 = vmatprep.subr.mxu0 0.0
  %3095 = vmatpush1.xpose.msra.mxu0 0.0
  %3096 = vmatprep.subr.mxu0 0.0
  %3097 = vmatpush1.xpose.msra.mxu0 0.0
  %3098 = vmatprep.subr.mxu0 0.0
  %3099 = vmatpush1.xpose.msra.mxu0 0.0
  %3100 = vmatprep.subr.mxu0 0.0
  %3101 = vmatpush1.xpose.msra.mxu0 0.0
  %3102 = vmatprep.subr.mxu0 0.0
  %3103 = vmatpush1.xpose.msra.mxu0 0.0
  %3104 = vmatprep.subr.mxu0 0.0
  %3105 = vmatpush1.xpose.msra.mxu0 0.0
  %3106 = vmatprep.subr.mxu0 0.0
  %3107 = vmatpush1.xpose.msra.mxu0 0.0
  %3108 = vmatprep.subr.mxu0 0.0
  %3109 = vmatpush1.xpose.msra.mxu0 0.0
  %3110 = vmatprep.subr.mxu0 0.0
  %3111 = vmatpush1.xpose.msra.mxu0 0.0
  %3112 = vmatprep.subr.mxu0 0.0
  %3113 = vmatpush1.xpose.msra.mxu0 0.0
  %3114 = vmatprep.subr.mxu0 0.0
  %3115 = vmatpush1.xpose.msra.mxu0 0.0
  %3116 = vmatprep.subr.mxu0 0.0
  %3117 = vmatpush1.xpose.msra.mxu0 0.0
  %3118 = vmatprep.mubr.f32.mxu0 0.0
  %3119 = vmatmul.mubr.f32.gmra.mrb[0].mxu0 %v3050
  %v3120 = vpop.f32.mrb[0].mxu0
  %v3121 = vadd.f32 0.0, %v3120
  %v3122 = vpop.f32.mrb[0].mxu0
  %3123 = vdwg.mxu0
  %v3124 = vmul.f32 %v3121, 0.35355338
  %v3125 = vadd.f32 %v3124, %v55
  %v3126 = vsel %vm175, %v3125, -inf
  %3127 = vmax.xlane.f32.xlu0 %v3126
  %v3128 = vpop.xlane.xlu0 %3127
  %v3129 = vsub.f32 %v3125, %v3128
  %v3130 = vmul.f32 %v3129, 1.442695
  %v3131 = vpow.pop %v3130
  %v3132 = vsel %vm175, %v3131, 0.0
  %3133 = vadd.xlane.f32.xlu0 %v3132
  %v3134 = vpop.xlane.xlu0 %3133
  %v3135 = vrcp.pop %v3134
  %v3136 = vmul.f32 %v3131, %v3135
  %3137 = vrot.lane.b32.xlu0 %v2021, 48
  %v3138 = vpop.permute.xlu0 %3137
  %v3141 = vsel %vm175, %v3136, 0
  %3143 = vmatprep.subr.mxu0 0.0
  %3144 = vmatpush1.msra.mxu0 %v3138
  %3145 = vmatprep.subr.mxu0 0.0
  %3146 = vmatpush1.msra.mxu0 0.0
  %3147 = vmatprep.subr.mxu0 0.0
  %3148 = vmatpush1.msra.mxu0 0.0
  %3149 = vmatprep.subr.mxu0 0.0
  %3150 = vmatpush1.msra.mxu0 0.0
  %3151 = vmatprep.subr.mxu0 0.0
  %3152 = vmatpush1.msra.mxu0 0.0
  %3153 = vmatprep.subr.mxu0 0.0
  %3154 = vmatpush1.msra.mxu0 0.0
  %3155 = vmatprep.subr.mxu0 0.0
  %3156 = vmatpush1.msra.mxu0 0.0
  %3157 = vmatprep.subr.mxu0 0.0
  %3158 = vmatpush1.msra.mxu0 0.0
  %3159 = vmatprep.subr.mxu0 0.0
  %3160 = vmatpush1.msra.mxu0 0.0
  %3161 = vmatprep.subr.mxu0 0.0
  %3162 = vmatpush1.msra.mxu0 0.0
  %3163 = vmatprep.subr.mxu0 0.0
  %3164 = vmatpush1.msra.mxu0 0.0
  %3165 = vmatprep.subr.mxu0 0.0
  %3166 = vmatpush1.msra.mxu0 0.0
  %3167 = vmatprep.subr.mxu0 0.0
  %3168 = vmatpush1.msra.mxu0 0.0
  %3169 = vmatprep.subr.mxu0 0.0
  %3170 = vmatpush1.msra.mxu0 0.0
  %3171 = vmatprep.subr.mxu0 0.0
  %3172 = vmatpush1.msra.mxu0 0.0
  %3173 = vmatprep.subr.mxu0 0.0
  %3174 = vmatpush1.msra.mxu0 0.0
  %3175 = vmatprep.subr.mxu0 0.0
  %3176 = vmatpush1.msra.mxu0 0.0
  %3177 = vmatprep.subr.mxu0 0.0
  %3178 = vmatpush1.msra.mxu0 0.0
  %3179 = vmatprep.subr.mxu0 0.0
  %3180 = vmatpush1.msra.mxu0 0.0
  %3181 = vmatprep.subr.mxu0 0.0
  %3182 = vmatpush1.msra.mxu0 0.0
  %3183 = vmatprep.subr.mxu0 0.0
  %3184 = vmatpush1.msra.mxu0 0.0
  %3185 = vmatprep.subr.mxu0 0.0
  %3186 = vmatpush1.msra.mxu0 0.0
  %3187 = vmatprep.subr.mxu0 0.0
  %3188 = vmatpush1.msra.mxu0 0.0
  %3189 = vmatprep.subr.mxu0 0.0
  %3190 = vmatpush1.msra.mxu0 0.0
  %3191 = vmatprep.subr.mxu0 0.0
  %3192 = vmatpush1.msra.mxu0 0.0
  %3193 = vmatprep.subr.mxu0 0.0
  %3194 = vmatpush1.msra.mxu0 0.0
  %3195 = vmatprep.subr.mxu0 0.0
  %3196 = vmatpush1.msra.mxu0 0.0
  %3197 = vmatprep.subr.mxu0 0.0
  %3198 = vmatpush1.msra.mxu0 0.0
  %3199 = vmatprep.subr.mxu0 0.0
  %3200 = vmatpush1.msra.mxu0 0.0
  %3201 = vmatprep.subr.mxu0 0.0
  %3202 = vmatpush1.msra.mxu0 0.0
  %3203 = vmatprep.subr.mxu0 0.0
  %3204 = vmatpush1.msra.mxu0 0.0
  %3205 = vmatprep.subr.mxu0 0.0
  %3206 = vmatpush1.msra.mxu0 0.0
  %3207 = vmatprep.mubr.f32.mxu0 0.0
  %3208 = vmatmul.mubr.f32.gmra.mrb[0].mxu0 %v3141
  %v3209 = vpop.f32.mrb[0].mxu0
  %v3210 = vadd.f32 0.0, %v3209
  %v3211 = vpop.f32.mrb[0].mxu0
  %3212 = vdwg.mxu0
  %3214 = vrot.lane.b32.xlu0 %v3210, 16
  %v3215 = vpop.permute.xlu0 %3214
  %3217 = vst.msk [vmem:[#allocation2 + $0x8] sm:$0xff] %vm684, %v3215
  %3218 = vrot.lane.b32.xlu0 %v2021, 104
  %v3219 = vpop.permute.xlu0 %3218
  %3220 = vrot.lane.b32.xlu0 %v2021, 72
  %v3221 = vpop.permute.xlu0 %3220
  %v3222 = vsel %vm175, %v3219, 0
  %v3224 = vsel %vm175, %v3221, 0
  %3226 = vmatprep.subr.mxu0 0.0
  %3227 = vmatpush1.xpose.msra.mxu0 %v3224
  %3228 = vmatprep.subr.mxu0 0.0
  %3229 = vmatpush1.xpose.msra.mxu0 0.0
  %3230 = vmatprep.subr.mxu0 0.0
  %3231 = vmatpush1.xpose.msra.mxu0 0.0
  %3232 = vmatprep.subr.mxu0 0.0
  %3233 = vmatpush1.xpose.msra.mxu0 0.0
  %3234 = vmatprep.subr.mxu0 0.0
  %3235 = vmatpush1.xpose.msra.mxu0 0.0
  %3236 = vmatprep.subr.mxu0 0.0
  %3237 = vmatpush1.xpose.msra.mxu0 0.0
  %3238 = vmatprep.subr.mxu0 0.0
  %3239 = vmatpush1.xpose.msra.mxu0 0.0
  %3240 = vmatprep.subr.mxu0 0.0
  %3241 = vmatpush1.xpose.msra.mxu0 0.0
  %3242 = vmatprep.subr.mxu0 0.0
  %3243 = vmatpush1.xpose.msra.mxu0 0.0
  %3244 = vmatprep.subr.mxu0 0.0
  %3245 = vmatpush1.xpose.msra.mxu0 0.0
  %3246 = vmatprep.subr.mxu0 0.0
  %3247 = vmatpush1.xpose.msra.mxu0 0.0
  %3248 = vmatprep.subr.mxu0 0.0
  %3249 = vmatpush1.xpose.msra.mxu0 0.0
  %3250 = vmatprep.subr.mxu0 0.0
  %3251 = vmatpush1.xpose.msra.mxu0 0.0
  %3252 = vmatprep.subr.mxu0 0.0
  %3253 = vmatpush1.xpose.msra.mxu0 0.0
  %3254 = vmatprep.subr.mxu0 0.0
  %3255 = vmatpush1.xpose.msra.mxu0 0.0
  %3256 = vmatprep.subr.mxu0 0.0
  %3257 = vmatpush1.xpose.msra.mxu0 0.0
  %3258 = vmatprep.subr.mxu0 0.0
  %3259 = vmatpush1.xpose.msra.mxu0 0.0
  %3260 = vmatprep.subr.mxu0 0.0
  %3261 = vmatpush1.xpose.msra.mxu0 0.0
  %3262 = vmatprep.subr.mxu0 0.0
  %3263 = vmatpush1.xpose.msra.mxu0 0.0
  %3264 = vmatprep.subr.mxu0 0.0
  %3265 = vmatpush1.xpose.msra.mxu0 0.0
  %3266 = vmatprep.subr.mxu0 0.0
  %3267 = vmatpush1.xpose.msra.mxu0 0.0
  %3268 = vmatprep.subr.mxu0 0.0
  %3269 = vmatpush1.xpose.msra.mxu0 0.0
  %3270 = vmatprep.subr.mxu0 0.0
  %3271 = vmatpush1.xpose.msra.mxu0 0.0
  %3272 = vmatprep.subr.mxu0 0.0
  %3273 = vmatpush1.xpose.msra.mxu0 0.0
  %3274 = vmatprep.subr.mxu0 0.0
  %3275 = vmatpush1.xpose.msra.mxu0 0.0
  %3276 = vmatprep.subr.mxu0 0.0
  %3277 = vmatpush1.xpose.msra.mxu0 0.0
  %3278 = vmatprep.subr.mxu0 0.0
  %3279 = vmatpush1.xpose.msra.mxu0 0.0
  %3280 = vmatprep.subr.mxu0 0.0
  %3281 = vmatpush1.xpose.msra.mxu0 0.0
  %3282 = vmatprep.subr.mxu0 0.0
  %3283 = vmatpush1.xpose.msra.mxu0 0.0
  %3284 = vmatprep.subr.mxu0 0.0
  %3285 = vmatpush1.xpose.msra.mxu0 0.0
  %3286 = vmatprep.subr.mxu0 0.0
  %3287 = vmatpush1.xpose.msra.mxu0 0.0
  %3288 = vmatprep.subr.mxu0 0.0
  %3289 = vmatpush1.xpose.msra.mxu0 0.0
  %3290 = vmatprep.mubr.f32.mxu0 0.0
  %3291 = vmatmul.mubr.f32.gmra.mrb[0].mxu0 %v3222
  %v3292 = vpop.f32.mrb[0].mxu0
  %v3293 = vadd.f32 0.0, %v3292
  %v3294 = vpop.f32.mrb[0].mxu0
  %3295 = vdwg.mxu0
  %v3296 = vmul.f32 %v3293, 0.35355338
  %v3297 = vadd.f32 %v3296, %v55
  %v3298 = vsel %vm175, %v3297, -inf
  %3299 = vmax.xlane.f32.xlu0 %v3298
  %v3300 = vpop.xlane.xlu0 %3299
  %v3301 = vsub.f32 %v3297, %v3300
  %v3302 = vmul.f32 %v3301, 1.442695
  %v3303 = vpow.pop %v3302
  %v3304 = vsel %vm175, %v3303, 0.0
  %3305 = vadd.xlane.f32.xlu0 %v3304
  %v3306 = vpop.xlane.xlu0 %3305
  %v3307 = vrcp.pop %v3306
  %v3308 = vmul.f32 %v3303, %v3307
  %3309 = vrot.lane.b32.xlu0 %v2021, 40
  %v3310 = vpop.permute.xlu0 %3309
  %v3313 = vsel %vm175, %v3308, 0
  %3315 = vmatprep.subr.mxu0 0.0
  %3316 = vmatpush1.msra.mxu0 %v3310
  %3317 = vmatprep.subr.mxu0 0.0
  %3318 = vmatpush1.msra.mxu0 0.0
  %3319 = vmatprep.subr.mxu0 0.0
  %3320 = vmatpush1.msra.mxu0 0.0
  %3321 = vmatprep.subr.mxu0 0.0
  %3322 = vmatpush1.msra.mxu0 0.0
  %3323 = vmatprep.subr.mxu0 0.0
  %3324 = vmatpush1.msra.mxu0 0.0
  %3325 = vmatprep.subr.mxu0 0.0
  %3326 = vmatpush1.msra.mxu0 0.0
  %3327 = vmatprep.subr.mxu0 0.0
  %3328 = vmatpush1.msra.mxu0 0.0
  %3329 = vmatprep.subr.mxu0 0.0
  %3330 = vmatpush1.msra.mxu0 0.0
  %3331 = vmatprep.subr.mxu0 0.0
  %3332 = vmatpush1.msra.mxu0 0.0
  %3333 = vmatprep.subr.mxu0 0.0
  %3334 = vmatpush1.msra.mxu0 0.0
  %3335 = vmatprep.subr.mxu0 0.0
  %3336 = vmatpush1.msra.mxu0 0.0
  %3337 = vmatprep.subr.mxu0 0.0
  %3338 = vmatpush1.msra.mxu0 0.0
  %3339 = vmatprep.subr.mxu0 0.0
  %3340 = vmatpush1.msra.mxu0 0.0
  %3341 = vmatprep.subr.mxu0 0.0
  %3342 = vmatpush1.msra.mxu0 0.0
  %3343 = vmatprep.subr.mxu0 0.0
  %3344 = vmatpush1.msra.mxu0 0.0
  %3345 = vmatprep.subr.mxu0 0.0
  %3346 = vmatpush1.msra.mxu0 0.0
  %3347 = vmatprep.subr.mxu0 0.0
  %3348 = vmatpush1.msra.mxu0 0.0
  %3349 = vmatprep.subr.mxu0 0.0
  %3350 = vmatpush1.msra.mxu0 0.0
  %3351 = vmatprep.subr.mxu0 0.0
  %3352 = vmatpush1.msra.mxu0 0.0
  %3353 = vmatprep.subr.mxu0 0.0
  %3354 = vmatpush1.msra.mxu0 0.0
  %3355 = vmatprep.subr.mxu0 0.0
  %3356 = vmatpush1.msra.mxu0 0.0
  %3357 = vmatprep.subr.mxu0 0.0
  %3358 = vmatpush1.msra.mxu0 0.0
  %3359 = vmatprep.subr.mxu0 0.0
  %3360 = vmatpush1.msra.mxu0 0.0
  %3361 = vmatprep.subr.mxu0 0.0
  %3362 = vmatpush1.msra.mxu0 0.0
  %3363 = vmatprep.subr.mxu0 0.0
  %3364 = vmatpush1.msra.mxu0 0.0
  %3365 = vmatprep.subr.mxu0 0.0
  %3366 = vmatpush1.msra.mxu0 0.0
  %3367 = vmatprep.subr.mxu0 0.0
  %3368 = vmatpush1.msra.mxu0 0.0
  %3369 = vmatprep.subr.mxu0 0.0
  %3370 = vmatpush1.msra.mxu0 0.0
  %3371 = vmatprep.subr.mxu0 0.0
  %3372 = vmatpush1.msra.mxu0 0.0
  %3373 = vmatprep.subr.mxu0 0.0
  %3374 = vmatpush1.msra.mxu0 0.0
  %3375 = vmatprep.subr.mxu0 0.0
  %3376 = vmatpush1.msra.mxu0 0.0
  %3377 = vmatprep.subr.mxu0 0.0
  %3378 = vmatpush1.msra.mxu0 0.0
  %3379 = vmatprep.mubr.f32.mxu0 0.0
  %3380 = vmatmul.mubr.f32.gmra.mrb[0].mxu0 %v3313
  %v3381 = vpop.f32.mrb[0].mxu0
  %v3382 = vadd.f32 0.0, %v3381
  %v3383 = vpop.f32.mrb[0].mxu0
  %3384 = vdwg.mxu0
  %3386 = vrot.lane.b32.xlu0 %v3382, 24
  %v3387 = vpop.permute.xlu0 %3386
  %3389 = vst.msk [vmem:[#allocation2 + $0x8] sm:$0xff] %vm857, %v3387
  %v3390 = vld [vmem:[#allocation2] sm:$0xff]
  %v3391 = vld [vmem:[#allocation2 + $0x8] sm:$0xff]
  %v3393 = vlaneseq
  %v3394 = vshrl.u32 %v3393, 7
  %v3395 = vsub.s32 0, %v3394
  %v3396 = vrot.slane %v1910, %v3395
  %v3399 = vsel %vm90, %v3390, 0
  %v3402 = vsel %vm90, %v3391, 0
  %3404 = vmatprep.subr.mxu0 0.0
  %3405 = vmatpush1.msra.mxu0 %v1905
  %3406 = vmatprep.subr.mxu0 0.0
  %3407 = vmatpush1.msra.mxu0 %v1906
  %3408 = vmatprep.subr.mxu0 0.0
  %3409 = vmatpush1.msra.mxu0 %v1907
  %3410 = vmatprep.subr.mxu0 0.0
  %3411 = vmatpush1.msra.mxu0 %v1908
  %3412 = vmatprep.subr.mxu0 0.0
  %3413 = vmatpush1.msra.mxu0 0.0
  %3414 = vmatprep.subr.mxu0 0.0
  %3415 = vmatpush1.msra.mxu0 0.0
  %3416 = vmatprep.subr.mxu0 0.0
  %3417 = vmatpush1.msra.mxu0 0.0
  %3418 = vmatprep.subr.mxu0 0.0
  %3419 = vmatpush1.msra.mxu0 0.0
  %3420 = vmatprep.subr.mxu0 0.0
  %3421 = vmatpush1.msra.mxu0 0.0
  %3422 = vmatprep.subr.mxu0 0.0
  %3423 = vmatpush1.msra.mxu0 0.0
  %3424 = vmatprep.subr.mxu0 0.0
  %3425 = vmatpush1.msra.mxu0 0.0
  %3426 = vmatprep.subr.mxu0 0.0
  %3427 = vmatpush1.msra.mxu0 0.0
  %3428 = vmatprep.subr.mxu0 0.0
  %3429 = vmatpush1.msra.mxu0 0.0
  %3430 = vmatprep.subr.mxu0 0.0
  %3431 = vmatpush1.msra.mxu0 0.0
  %3432 = vmatprep.subr.mxu0 0.0
  %3433 = vmatpush1.msra.mxu0 0.0
  %3434 = vmatprep.subr.mxu0 0.0
  %3435 = vmatpush1.msra.mxu0 0.0
  %3436 = vmatprep.subr.mxu0 0.0
  %3437 = vmatpush1.msra.mxu0 0.0
  %3438 = vmatprep.subr.mxu0 0.0
  %3439 = vmatpush1.msra.mxu0 0.0
  %3440 = vmatprep.subr.mxu0 0.0
  %3441 = vmatpush1.msra.mxu0 0.0
  %3442 = vmatprep.subr.mxu0 0.0
  %3443 = vmatpush1.msra.mxu0 0.0
  %3444 = vmatprep.subr.mxu0 0.0
  %3445 = vmatpush1.msra.mxu0 0.0
  %3446 = vmatprep.subr.mxu0 0.0
  %3447 = vmatpush1.msra.mxu0 0.0
  %3448 = vmatprep.subr.mxu0 0.0
  %3449 = vmatpush1.msra.mxu0 0.0
  %3450 = vmatprep.subr.mxu0 0.0
  %3451 = vmatpush1.msra.mxu0 0.0
  %3452 = vmatprep.subr.mxu0 0.0
  %3453 = vmatpush1.msra.mxu0 0.0
  %3454 = vmatprep.subr.mxu0 0.0
  %3455 = vmatpush1.msra.mxu0 0.0
  %3456 = vmatprep.subr.mxu0 0.0
  %3457 = vmatpush1.msra.mxu0 0.0
  %3458 = vmatprep.subr.mxu0 0.0
  %3459 = vmatpush1.msra.mxu0 0.0
  %3460 = vmatprep.subr.mxu0 0.0
  %3461 = vmatpush1.msra.mxu0 0.0
  %3462 = vmatprep.subr.mxu0 0.0
  %3463 = vmatpush1.msra.mxu0 0.0
  %3464 = vmatprep.subr.mxu0 0.0
  %3465 = vmatpush1.msra.mxu0 0.0
  %3466 = vmatprep.subr.mxu0 0.0
  %3467 = vmatpush1.msra.mxu0 0.0
  %3468 = vmatprep.mubr.f32.mxu0 0.0
  %3469 = vmatmul.mubr.f32.gmra.mrb[0].mxu0 %v3399
  %v3470 = vpop.f32.mrb[0].mxu0
  %v3471 = vadd.f32 %v3396, %v3470
  %v3472 = vpop.f32.mrb[0].mxu0
  %3473 = vmatprep.mubr.f32.mxu0 0.0
  %3474 = vmatmul.mubr.f32.gmra.mrb[0].mxu0 %v3402
  %v3475 = vpop.f32.mrb[0].mxu0
  %v3476 = vadd.f32 %v3396, %v3475
  %v3477 = vpop.f32.mrb[0].mxu0
  %3478 = vdwg.mxu0
  %v3479 = vadd.f32 %v1895, %v3471
  %v3480 = vadd.f32 %v1896, %v3476
  %v3481 = vsel %vm90, %v3479, 0.0
  %3482 = vadd.xlane.f32.xlu0 %v3481
  %v3483 = vpop.xlane.xlu0 %3482
  %v3484 = vsel %vm90, %v3480, 0.0
  %3485 = vadd.xlane.f32.xlu0 %v3484
  %v3486 = vpop.xlane.xlu0 %3485
  %v3487 = vmul.f32 %v3483, %v1639
  %v3488 = vmul.f32 %v3486, %v1639
  %v3489 = vsub.f32 %v3479, %v3487
  %v3490 = vsub.f32 %v3480, %v3488
  %v3491 = vmul.f32 %v3489, %v3489
  %v3492 = vmul.f32 %v3490, %v3490
  %v3493 = vsel %vm90, %v3491, 0.0
  %3494 = vadd.xlane.f32.xlu0 %v3493
  %v3495 = vpop.xlane.xlu0 %3494
  %v3496 = vsel %vm90, %v3492, 0.0
  %3497 = vadd.xlane.f32.xlu0 %v3496
  %v3498 = vpop.xlane.xlu0 %3497
  %v3499 = vmul.f32 %v3495, %v1639
  %v3500 = vmul.f32 %v3498, %v1639
  %v3501 = vadd.f32 %v3499, 1e-05
  %v3502 = vadd.f32 %v3500, 1e-05
  %v3503 = vrsqrt.pop %v3501
  %v3504 = vrsqrt.pop %v3502
  %v3505 = vmul.f32 %v3489, %v3503
  %v3506 = vmul.f32 %v3490, %v3504
  %v3508 = vlaneseq
  %v3509 = vshrl.u32 %v3508, 7
  %v3510 = vsub.s32 0, %v3509
  %v3511 = vrot.slane %v1930, %v3510
  %v3513 = vmul.f32 %v3505, %v3511
  %v3514 = vmul.f32 %v3506, %v3511
  %v3516 = vlaneseq
  %v3517 = vshrl.u32 %v3516, 7
  %v3518 = vsub.s32 0, %v3517
  %v3519 = vrot.slane %v1932, %v3518
  %v3521 = vadd.f32 %v3513, %v3519
  %v3522 = vadd.f32 %v3514, %v3519
  %v3524 = vlaneseq
  %v3525 = vshrl.u32 %v3524, 7
  %v3526 = vsub.s32 0, %v3525
  %v3527 = vrot.slane %v1917, %v3526
  %v3530 = vsel %vm90, %v3521, 0
  %v3533 = vsel %vm90, %v3522, 0
  %3535 = vmatprep.subr.mxu0 0.0
  %3536 = vmatpush1.msra.mxu0 %v1912
  %3537 = vmatprep.subr.mxu0 0.0
  %3538 = vmatpush1.msra.mxu0 %v1913
  %3539 = vmatprep.subr.mxu0 0.0
  %3540 = vmatpush1.msra.mxu0 %v1914
  %3541 = vmatprep.subr.mxu0 0.0
  %3542 = vmatpush1.msra.mxu0 %v1915
  %3543 = vmatprep.subr.mxu0 0.0
  %3544 = vmatpush1.msra.mxu0 0.0
  %3545 = vmatprep.subr.mxu0 0.0
  %3546 = vmatpush1.msra.mxu0 0.0
  %3547 = vmatprep.subr.mxu0 0.0
  %3548 = vmatpush1.msra.mxu0 0.0
  %3549 = vmatprep.subr.mxu0 0.0
  %3550 = vmatpush1.msra.mxu0 0.0
  %3551 = vmatprep.subr.mxu0 0.0
  %3552 = vmatpush1.msra.mxu0 0.0
  %3553 = vmatprep.subr.mxu0 0.0
  %3554 = vmatpush1.msra.mxu0 0.0
  %3555 = vmatprep.subr.mxu0 0.0
  %3556 = vmatpush1.msra.mxu0 0.0
  %3557 = vmatprep.subr.mxu0 0.0
  %3558 = vmatpush1.msra.mxu0 0.0
  %3559 = vmatprep.subr.mxu0 0.0
  %3560 = vmatpush1.msra.mxu0 0.0
  %3561 = vmatprep.subr.mxu0 0.0
  %3562 = vmatpush1.msra.mxu0 0.0
  %3563 = vmatprep.subr.mxu0 0.0
  %3564 = vmatpush1.msra.mxu0 0.0
  %3565 = vmatprep.subr.mxu0 0.0
  %3566 = vmatpush1.msra.mxu0 0.0
  %3567 = vmatprep.subr.mxu0 0.0
  %3568 = vmatpush1.msra.mxu0 0.0
  %3569 = vmatprep.subr.mxu0 0.0
  %3570 = vmatpush1.msra.mxu0 0.0
  %3571 = vmatprep.subr.mxu0 0.0
  %3572 = vmatpush1.msra.mxu0 0.0
  %3573 = vmatprep.subr.mxu0 0.0
  %3574 = vmatpush1.msra.mxu0 0.0
  %3575 = vmatprep.subr.mxu0 0.0
  %3576 = vmatpush1.msra.mxu0 0.0
  %3577 = vmatprep.subr.mxu0 0.0
  %3578 = vmatpush1.msra.mxu0 0.0
  %3579 = vmatprep.subr.mxu0 0.0
  %3580 = vmatpush1.msra.mxu0 0.0
  %3581 = vmatprep.subr.mxu0 0.0
  %3582 = vmatpush1.msra.mxu0 0.0
  %3583 = vmatprep.subr.mxu0 0.0
  %3584 = vmatpush1.msra.mxu0 0.0
  %3585 = vmatprep.subr.mxu0 0.0
  %3586 = vmatpush1.msra.mxu0 0.0
  %3587 = vmatprep.subr.mxu0 0.0
  %3588 = vmatpush1.msra.mxu0 0.0
  %3589 = vmatprep.subr.mxu0 0.0
  %3590 = vmatpush1.msra.mxu0 0.0
  %3591 = vmatprep.subr.mxu0 0.0
  %3592 = vmatpush1.msra.mxu0 0.0
  %3593 = vmatprep.subr.mxu0 0.0
  %3594 = vmatpush1.msra.mxu0 0.0
  %3595 = vmatprep.subr.mxu0 0.0
  %3596 = vmatpush1.msra.mxu0 0.0
  %3597 = vmatprep.subr.mxu0 0.0
  %3598 = vmatpush1.msra.mxu0 0.0
  %3599 = vmatprep.mubr.f32.mxu0 0.0
  %3600 = vmatmul.mubr.f32.gmra.mrb[0].mxu0 %v3530
  %v3601 = vpop.f32.mrb[0].mxu0
  %v3602 = vadd.f32 %v3527, %v3601
  %v3603 = vpop.f32.mrb[0].mxu0
  %3604 = vmatprep.mubr.f32.mxu0 0.0
  %3605 = vmatmul.mubr.f32.gmra.mrb[0].mxu0 %v3533
  %v3606 = vpop.f32.mrb[0].mxu0
  %v3607 = vadd.f32 %v3527, %v3606
  %v3608 = vpop.f32.mrb[0].mxu0
  %3609 = vdwg.mxu0
  %v3610 = vmax.f32 %v3602, 0.0
  %v3611 = vmax.f32 %v3607, 0.0
  %v3613 = vlaneseq
  %v3614 = vshrl.u32 %v3613, 7
  %v3615 = vsub.s32 0, %v3614
  %v3616 = vrot.slane %v1928, %v3615
  %v3619 = vsel %vm1771, %v3610, 0
  %v3622 = vsel %vm1771, %v3611, 0
  %3624 = vmatprep.subr.mxu0 0.0
  %3625 = vmatpush1.msra.mxu0 %v1919
  %3626 = vmatprep.subr.mxu0 0.0
  %3627 = vmatpush1.msra.mxu0 %v1920
  %3628 = vmatprep.subr.mxu0 0.0
  %3629 = vmatpush1.msra.mxu0 %v1921
  %3630 = vmatprep.subr.mxu0 0.0
  %3631 = vmatpush1.msra.mxu0 %v1922
  %3632 = vmatprep.subr.mxu0 0.0
  %3633 = vmatpush1.msra.mxu0 %v1923
  %3634 = vmatprep.subr.mxu0 0.0
  %3635 = vmatpush1.msra.mxu0 %v1924
  %3636 = vmatprep.subr.mxu0 0.0
  %3637 = vmatpush1.msra.mxu0 %v1925
  %3638 = vmatprep.subr.mxu0 0.0
  %3639 = vmatpush1.msra.mxu0 %v1926
  %3640 = vmatprep.subr.mxu0 0.0
  %3641 = vmatpush1.msra.mxu0 0.0
  %3642 = vmatprep.subr.mxu0 0.0
  %3643 = vmatpush1.msra.mxu0 0.0
  %3644 = vmatprep.subr.mxu0 0.0
  %3645 = vmatpush1.msra.mxu0 0.0
  %3646 = vmatprep.subr.mxu0 0.0
  %3647 = vmatpush1.msra.mxu0 0.0
  %3648 = vmatprep.subr.mxu0 0.0
  %3649 = vmatpush1.msra.mxu0 0.0
  %3650 = vmatprep.subr.mxu0 0.0
  %3651 = vmatpush1.msra.mxu0 0.0
  %3652 = vmatprep.subr.mxu0 0.0
  %3653 = vmatpush1.msra.mxu0 0.0
  %3654 = vmatprep.subr.mxu0 0.0
  %3655 = vmatpush1.msra.mxu0 0.0
  %3656 = vmatprep.subr.mxu0 0.0
  %3657 = vmatpush1.msra.mxu0 0.0
  %3658 = vmatprep.subr.mxu0 0.0
  %3659 = vmatpush1.msra.mxu0 0.0
  %3660 = vmatprep.subr.mxu0 0.0
  %3661 = vmatpush1.msra.mxu0 0.0
  %3662 = vmatprep.subr.mxu0 0.0
  %3663 = vmatpush1.msra.mxu0 0.0
  %3664 = vmatprep.subr.mxu0 0.0
  %3665 = vmatpush1.msra.mxu0 0.0
  %3666 = vmatprep.subr.mxu0 0.0
  %3667 = vmatpush1.msra.mxu0 0.0
  %3668 = vmatprep.subr.mxu0 0.0
  %3669 = vmatpush1.msra.mxu0 0.0
  %3670 = vmatprep.subr.mxu0 0.0
  %3671 = vmatpush1.msra.mxu0 0.0
  %3672 = vmatprep.subr.mxu0 0.0
  %3673 = vmatpush1.msra.mxu0 0.0
  %3674 = vmatprep.subr.mxu0 0.0
  %3675 = vmatpush1.msra.mxu0 0.0
  %3676 = vmatprep.subr.mxu0 0.0
  %3677 = vmatpush1.msra.mxu0 0.0
  %3678 = vmatprep.subr.mxu0 0.0
  %3679 = vmatpush1.msra.mxu0 0.0
  %3680 = vmatprep.subr.mxu0 0.0
  %3681 = vmatpush1.msra.mxu0 0.0
  %3682 = vmatprep.subr.mxu0 0.0
  %3683 = vmatpush1.msra.mxu0 0.0
  %3684 = vmatprep.subr.mxu0 0.0
  %3685 = vmatpush1.msra.mxu0 0.0
  %3686 = vmatprep.subr.mxu0 0.0
  %3687 = vmatpush1.msra.mxu0 0.0
  %3688 = vmatprep.mubr.f32.mxu0 0.0
  %3689 = vmatmul.mubr.f32.gmra.mrb[0].mxu0 %v3619
  %v3690 = vpop.f32.mrb[0].mxu0
  %v3691 = vadd.f32 %v3616, %v3690
  %v3692 = vpop.f32.mrb[0].mxu0
  %3693 = vmatprep.mubr.f32.mxu0 0.0
  %3694 = vmatmul.mubr.f32.gmra.mrb[0].mxu0 %v3622
  %v3695 = vpop.f32.mrb[0].mxu0
  %v3696 = vadd.f32 %v3616, %v3695
  %v3697 = vpop.f32.mrb[0].mxu0
  %3698 = vdwg.mxu0
  %v3699 = vadd.f32 %v3521, %v3691
  %v3700 = vadd.f32 %v3522, %v3696
  %v3701 = vsel %vm90, %v3699, 0.0
  %3702 = vadd.xlane.f32.xlu0 %v3701
  %v3703 = vpop.xlane.xlu0 %3702
  %v3704 = vsel %vm90, %v3700, 0.0
  %3705 = vadd.xlane.f32.xlu0 %v3704
  %v3706 = vpop.xlane.xlu0 %3705
  %v3707 = vmul.f32 %v3703, %v1639
  %v3708 = vmul.f32 %v3706, %v1639
  %v3709 = vsub.f32 %v3699, %v3707
  %v3710 = vsub.f32 %v3700, %v3708
  %v3711 = vmul.f32 %v3709, %v3709
  %v3712 = vmul.f32 %v3710, %v3710
  %v3713 = vsel %vm90, %v3711, 0.0
  %3714 = vadd.xlane.f32.xlu0 %v3713
  %v3715 = vpop.xlane.xlu0 %3714
  %v3716 = vsel %vm90, %v3712, 0.0
  %3717 = vadd.xlane.f32.xlu0 %v3716
  %v3718 = vpop.xlane.xlu0 %3717
  %v3719 = vmul.f32 %v3715, %v1639
  %v3720 = vmul.f32 %v3718, %v1639
  %v3721 = vadd.f32 %v3719, 1e-05
  %v3722 = vadd.f32 %v3720, 1e-05
  %v3723 = vrsqrt.pop %v3721
  %v3724 = vrsqrt.pop %v3722
  %v3725 = vmul.f32 %v3709, %v3723
  %v3726 = vmul.f32 %v3710, %v3724
  %v3728 = vlaneseq
  %v3729 = vshrl.u32 %v3728, 7
  %v3730 = vsub.s32 0, %v3729
  %v3731 = vrot.slane %v1934, %v3730
  %v3733 = vmul.f32 %v3725, %v3731
  %v3734 = vmul.f32 %v3726, %v3731
  %v3736 = vlaneseq
  %v3737 = vshrl.u32 %v3736, 7
  %v3738 = vsub.s32 0, %v3737
  %v3739 = vrot.slane %v1936, %v3738
  %v3741 = vadd.f32 %v3733, %v3739
  %v3742 = vadd.f32 %v3734, %v3739
  %v3743 = vld [vmem:[%s14] sm:$0xff]
  %v3744 = vld [vmem:[%s14 + $0x8] sm:$0xff]
  %v3745 = vld [vmem:[%s14 + $0x10] sm:$0xff]
  %v3746 = vld [vmem:[%s14 + $0x18] sm:$0xff]
  %v3747 = vld [vmem:[%s15] sm:$0x1]
  %v3749 = vlaneseq
  %v3750 = vshrl.u32 %v3749, 7
  %v3751 = vsub.s32 0, %v3750
  %v3752 = vrot.slane %v3747, %v3751
  %v3755 = vsel %vm90, %v3741, 0
  %v3758 = vsel %vm90, %v3742, 0
  %3760 = vmatprep.subr.mxu0 0.0
  %3761 = vmatpush1.msra.mxu0 %v3743
  %3762 = vmatprep.subr.mxu0 0.0
  %3763 = vmatpush1.msra.mxu0 %v3744
  %3764 = vmatprep.subr.mxu0 0.0
  %3765 = vmatpush1.msra.mxu0 %v3745
  %3766 = vmatprep.subr.mxu0 0.0
  %3767 = vmatpush1.msra.mxu0 %v3746
  %3768 = vmatprep.subr.mxu0 0.0
  %3769 = vmatpush1.msra.mxu0 0.0
  %3770 = vmatprep.subr.mxu0 0.0
  %3771 = vmatpush1.msra.mxu0 0.0
  %3772 = vmatprep.subr.mxu0 0.0
  %3773 = vmatpush1.msra.mxu0 0.0
  %3774 = vmatprep.subr.mxu0 0.0
  %3775 = vmatpush1.msra.mxu0 0.0
  %3776 = vmatprep.subr.mxu0 0.0
  %3777 = vmatpush1.msra.mxu0 0.0
  %3778 = vmatprep.subr.mxu0 0.0
  %3779 = vmatpush1.msra.mxu0 0.0
  %3780 = vmatprep.subr.mxu0 0.0
  %3781 = vmatpush1.msra.mxu0 0.0
  %3782 = vmatprep.subr.mxu0 0.0
  %3783 = vmatpush1.msra.mxu0 0.0
  %3784 = vmatprep.subr.mxu0 0.0
  %3785 = vmatpush1.msra.mxu0 0.0
  %3786 = vmatprep.subr.mxu0 0.0
  %3787 = vmatpush1.msra.mxu0 0.0
  %3788 = vmatprep.subr.mxu0 0.0
  %3789 = vmatpush1.msra.mxu0 0.0
  %3790 = vmatprep.subr.mxu0 0.0
  %3791 = vmatpush1.msra.mxu0 0.0
  %3792 = vmatprep.subr.mxu0 0.0
  %3793 = vmatpush1.msra.mxu0 0.0
  %3794 = vmatprep.subr.mxu0 0.0
  %3795 = vmatpush1.msra.mxu0 0.0
  %3796 = vmatprep.subr.mxu0 0.0
  %3797 = vmatpush1.msra.mxu0 0.0
  %3798 = vmatprep.subr.mxu0 0.0
  %3799 = vmatpush1.msra.mxu0 0.0
  %3800 = vmatprep.subr.mxu0 0.0
  %3801 = vmatpush1.msra.mxu0 0.0
  %3802 = vmatprep.subr.mxu0 0.0
  %3803 = vmatpush1.msra.mxu0 0.0
  %3804 = vmatprep.subr.mxu0 0.0
  %3805 = vmatpush1.msra.mxu0 0.0
  %3806 = vmatprep.subr.mxu0 0.0
  %3807 = vmatpush1.msra.mxu0 0.0
  %3808 = vmatprep.subr.mxu0 0.0
  %3809 = vmatpush1.msra.mxu0 0.0
  %3810 = vmatprep.subr.mxu0 0.0
  %3811 = vmatpush1.msra.mxu0 0.0
  %3812 = vmatprep.subr.mxu0 0.0
  %3813 = vmatpush1.msra.mxu0 0.0
  %3814 = vmatprep.subr.mxu0 0.0
  %3815 = vmatpush1.msra.mxu0 0.0
  %3816 = vmatprep.subr.mxu0 0.0
  %3817 = vmatpush1.msra.mxu0 0.0
  %3818 = vmatprep.subr.mxu0 0.0
  %3819 = vmatpush1.msra.mxu0 0.0
  %3820 = vmatprep.subr.mxu0 0.0
  %3821 = vmatpush1.msra.mxu0 0.0
  %3822 = vmatprep.subr.mxu0 0.0
  %3823 = vmatpush1.msra.mxu0 0.0
  %3824 = vmatprep.mubr.f32.mxu0 0.0
  %3825 = vmatmul.mubr.f32.gmra.mrb[0].mxu0 %v3755
  %v3826 = vpop.f32.mrb[0].mxu0
  %v3827 = vadd.f32 %v3752, %v3826
  %v3828 = vpop.f32.mrb[0].mxu0
  %3829 = vmatprep.mubr.f32.mxu0 0.0
  %3830 = vmatmul.mubr.f32.gmra.mrb[0].mxu0 %v3758
  %v3831 = vpop.f32.mrb[0].mxu0
  %v3832 = vadd.f32 %v3752, %v3831
  %v3833 = vpop.f32.mrb[0].mxu0
  %3834 = vdwg.mxu0
  %3835 = vst [vmem:[%s16] sm:$0xff] %v3827
  %3836 = vst [vmem:[%s16 + $0x8] sm:$0xff] %v3832
  // Predicated region
  $region66: #{transformer_forward.1} parent=0 // pred_check
    _
  $region67: #{transformer_forward.1} parent=0 // pred_check_branch
    %3838 = sbr.rel (0) target = $region69
  $region68: #{transformer_forward.1} parent=0 // pred_region
    _
  $region69: #{transformer_forward.1} parent=0 // pred_fallthru
    _
  // Predicated region
  $region70: #{transformer_forward.1} parent=0 // pred_check
    _
  $region71: #{transformer_forward.1} parent=0 // pred_check_branch
    %3840 = sbr.rel (0) target = $region73
  $region72: #{transformer_forward.1} parent=0 // pred_region
    _
  $region73: #{transformer_forward.1} parent=0 // pred_fallthru
    _

</llo_original>
